<compile_context>
chip_gen: v7x
topology: tpu7x:2x2x1
jax: 0.10.0
libtpu: 0.0.40
codegen_flags: <defaults>
</compile_context>

<pallas_src>
import functools
import math

import jax
import jax.numpy as jnp
from jax import lax
from jax.experimental import pallas as pl
from jax.experimental.pallas import tpu as pltpu  # noqa: F401  (memory spaces / future use)

EV_TO_KJ_PER_MOL = 96.485
BOOST_FACTOR = 1.0 * EV_TO_KJ_PER_MOL
E0, E1 = 2.0, 3.0


# ----------------------------------------------------------------------------
# Pallas kernel: per-model MLP fwd + analytic bwd + fused reduction epilogue
# ----------------------------------------------------------------------------
def _dihedral_bias_kernel(x_ref, w_ref, v_ref, out_ref, *, n_cvs):
    """x_ref: (1, F) f32 = [cos t (n), sin t (n), 0-pad]
       w_ref: (4*M, F, F) bf16, index l*M+m = layer-l weight of model m (layer-1 rows >=2n are 0)
       v_ref: (M, 8, F) f32, per model rows [b1, b2, b3, b4, w5_row, b5@lane0, 0, 0]
       out_ref: (2, 128) f32: row0 = [mean(E)*sigma, sigma, 0...]; row1 = [sigma*mean_m dE_m/dt, 0...]
    """
    n = n_cvs
    M = v_ref.shape[0]

    x = x_ref[...]                                   # (1, F) f32
    c = x[:, 0:n]                                    # cos(t)
    s = x[:, n:2 * n]                                # sin(t)

    def mm(a, b):                                    # a @ b            (MXU, f32 accumulate)
        return jnp.dot(a, b, preferred_element_type=jnp.float32)

    def mm_t(a, b):                                  # a @ b.T — contract last dims, no
        return lax.dot_general(                      # host-side materialized transpose.
            a, b, (((1,), (1,)), ((), ())), preferred_element_type=jnp.float32)

    e_list, gt_list = [], []
    for m in range(M):                               # static unroll (n_models small)
        # bf16 in HBM/VMEM (halved DMA); widen once in-register, reuse for fwd + bwd.
        w1 = w_ref[0 * M + m].astype(jnp.float32)
        w2 = w_ref[1 * M + m].astype(jnp.float32)
        w3 = w_ref[2 * M + m].astype(jnp.float32)
        w4 = w_ref[3 * M + m].astype(jnp.float32)
        vm = v_ref[m]                                # (8, F) f32
        b1, b2, b3, b4 = vm[0:1, :], vm[1:2, :], vm[2:3, :], vm[3:4, :]
        w5r = vm[4:5, :]                             # last layer weight as a row (1, F)
        b5 = vm[5:6, 0:1]                            # (1, 1)

        # ---- forward ----
        h1 = jnp.tanh(mm(x, w1) + b1)                # (1, F)
        h2 = jnp.tanh(mm(h1, w2) + b2)
        h3 = jnp.tanh(mm(h2, w3) + b3)
        h4 = jnp.tanh(mm(h3, w4) + b4)
        e_list.append(jnp.sum(h4 * w5r, axis=-1, keepdims=True) + b5)   # (1, 1)

        # ---- analytic backward dE_m/dt ----
        g = w5r * (1.0 - h4 * h4)                    # dE/dz4
        g = mm_t(g, w4) * (1.0 - h3 * h3)
        g = mm_t(g, w3) * (1.0 - h2 * h2)
        g = mm_t(g, w2) * (1.0 - h1 * h1)
        gx = mm_t(g, w1)                             # (1, F); lanes >= 2n exactly 0 (padded rows)
        gc = gx[:, 0:n]                              # dE/dcos
        gs = gx[:, n:2 * n]                          # dE/dsin
        gt_list.append(c * gs - s * gc)              # dE_m/dt   (1, n)

    # ---- fused epilogue: mean / unbiased variance over models, sigma, outputs ----
    inv_m = 1.0 / M

    e_sum = e_list[0]
    for em in e_list[1:]:
        e_sum = e_sum + em
    e_mean = e_sum * inv_m * BOOST_FACTOR            # (1, 1)

    mean_g = gt_list[0]
    for gm in gt_list[1:]:
        mean_g = mean_g + gm
    mean_g = mean_g * inv_m                          # (1, n)

    d = gt_list[0] - mean_g
    var = d * d
    for gm in gt_list[1:]:
        d = gm - mean_g
        var = var + d * d
    var = var * (1.0 / (M - 1))                      # unbiased, matches torch.var

    mean_forces = mean_g * BOOST_FACTOR              # (1, n)
    model_div = jnp.sqrt(jnp.mean(var, axis=-1, keepdims=True)) * BOOST_FACTOR   # (1, 1)

    # torch.heaviside(floor(iswitch), smooth)
    iswitch = (E1 - model_div) / (E1 - E0)
    fi = jnp.floor(iswitch)
    smooth = 0.5 * (1.0 + jnp.cos(jnp.pi * (1.0 - iswitch)))
    sigma = jnp.where(fi < 0.0, 0.0, jnp.where(fi == 0.0, smooth, 1.0))          # (1, 1)

    # lane-dense packed output: row 0 composed fully in vregs, one full-width store.
    lane = lax.broadcasted_iota(jnp.int32, (1, 128), 1)
    row0 = jnp.where(lane == 0, e_mean * sigma, jnp.where(lane == 1, sigma, 0.0))
    out_ref[0:1, :] = row0
    out_ref[1:2, :] = jnp.zeros((1, 128), jnp.float32)
    out_ref[1:2, 0:n] = mean_forces * sigma


def _run_bias_kernel(x, w_blob, v_blob, n_cvs):
    """x: (1, F) padded [cos t, sin t, 0].  Returns the packed (2, 128) result."""
    kernel = functools.partial(_dihedral_bias_kernel, n_cvs=n_cvs)
    return pl.pallas_call(
        kernel,
        out_shape=jax.ShapeDtypeStruct((2, 128), jnp.float32),
        # no grid: single invocation, whole (tiny) operands resident in VMEM.
    )(x, w_blob, v_blob)


# ----------------------------------------------------------------------------
# Host-side parameter packing (dense per-model stacks, bf16 weight blob)
# ----------------------------------------------------------------------------
def pack_params(ws, bs, weight_dtype=jnp.bfloat16):
    """ws/bs: 5 per-model stacks, shapes (n_models, size_in, size_out) / (n_models, 1, size_out).

    Returns 2 consolidated arrays:
      w: (4*n_models, F, F) weight_dtype — layer-1 (zero-padded to F rows), layers 2..4.
      v: (n_models, 8, F)  f32           — rows [b1, b2, b3, b4, w5_row, b5@lane0, 0, 0].
    Set weight_dtype=jnp.float32 if bit-tighter agreement with an f32 reference is required.
    """
    n_models, two_n, F = ws[0].shape
    assert n_models >= 2, "unbiased variance over models requires n_models >= 2"
    assert all(w.shape == (n_models, F, F) for w in ws[1:4]), "hidden features must all equal F"
    assert ws[4].shape == (n_models, F, 1)
    assert two_n <= F, "2*n_cvs must fit in the first hidden width"
    assert two_n // 2 <= 128, "output packing assumes n_cvs <= 128"
    f32 = jnp.float32

    w1p = jnp.zeros((n_models, F, F), f32).at[:, :two_n, :].set(ws[0].astype(f32))
    w_blob = jnp.concatenate(
        [w1p, ws[1].astype(f32), ws[2].astype(f32), ws[3].astype(f32)],
        axis=0).astype(weight_dtype)                                   # (4*M, F, F)

    v = jnp.zeros((n_models, 8, F), f32)
    for layer in range(4):
        v = v.at[:, layer, :].set(bs[layer][:, 0, :].astype(f32))      # b1..b4
    v = v.at[:, 4, :].set(ws[4][:, :, 0].astype(f32))                  # w5 as a row
    v = v.at[:, 5, 0].set(bs[4][:, 0, 0].astype(f32))                  # b5 scalar at lane 0
    return {"w": w_blob, "v": v}


# ----------------------------------------------------------------------------
# Plain-JAX glue: dihedrals, uncertainty switch (reference only), force scatter
# ----------------------------------------------------------------------------
def _dihedral(p):
    """p: (4, 3) -> dihedral angle (radians)."""
    b0 = p[0] - p[1]
    b1 = p[2] - p[1]
    b2 = p[3] - p[2]
    b1n = b1 / jnp.sqrt(jnp.sum(b1 * b1))
    v = b0 - jnp.dot(b0, b1n) * b1n
    w = b2 - jnp.dot(b2, b1n) * b1n
    x = jnp.dot(v, w)
    y = jnp.dot(jnp.cross(b1n, v), w)
    return jnp.arctan2(y, x)


def calculate_dihedral_and_derivatives(selected_positions):
    """selected_positions: (n_cvs, 4, 3) -> (cvs (n_cvs,), dcvs_dx (n_cvs, 4, 3))."""
    return jax.vmap(jax.value_and_grad(_dihedral))(selected_positions)


def uncertainty_weight(model_div, e0=E0, e1=E1):
    iswitch = (e1 - model_div) / (e1 - e0)
    fi = jnp.floor(iswitch)
    smooth = 0.5 * (1.0 + jnp.cos(jnp.pi * (1.0 - iswitch)))
    return jnp.where(fi < 0.0, 0.0, jnp.where(fi == 0.0, smooth, 1.0))


def dihedral_bias_forward(positions, colvar_idx, packed):
    flat_idx = colvar_idx.reshape(-1)
    selected = positions[flat_idx].reshape(-1, 4, 3)
    cvs, dcvs_dx = calculate_dihedral_and_derivatives(selected)      # (n_cvs,), (n_cvs,4,3)
    n_cvs = cvs.shape[0]                                             # static
    F = packed["w"].shape[-1]                                        # static

    t = cvs.reshape(1, n_cvs).astype(jnp.float32)
    x = jnp.concatenate(
        [jnp.cos(t), jnp.sin(t), jnp.zeros((1, F - 2 * n_cvs), jnp.float32)],
        axis=-1)                                                     # (1, F) padded

    out = _run_bias_kernel(x, packed["w"], packed["v"], n_cvs)       # (2, 128)
    energy = out[0, 0]                                               # mean(E)*sigma  (kJ/mol)
    mf_scaled = out[1, :n_cvs]                                       # sigma * mean_m dE_m/dcv

    contrib = (mf_scaled.reshape(-1, 1, 1) * dcvs_dx).reshape(-1, 3)
    forces = jnp.zeros_like(positions).at[flat_idx].add(contrib)     # already sigma-scaled
    return energy, forces


# ----------------------------------------------------------------------------
# Deterministic parameter init (mimics MultiLinearLayer shapes)
# ----------------------------------------------------------------------------
def init_params(key, n_models, n_cvs, features, last_layer_scale=1.0):
    dims = [2 * n_cvs] + list(features) + [1]
    ws, bs = [], []
    for i in range(len(dims) - 1):
        key, sub = jax.random.split(key)
        bound = 1.0 / math.sqrt(dims[i])
        w = jax.random.uniform(sub, (n_models, dims[i], dims[i + 1]),
                               jnp.float32, -bound, bound)
        b = jnp.zeros((n_models, 1, dims[i + 1]), jnp.float32)
        ws.append(w)
        bs.append(b)
    ws[-1] = ws[-1] * last_layer_scale
    return ws, bs


# Pure-JAX reference of the full forward (module semantics, via autodiff, f32 weights).
def _ref_forward(positions, colvar_idx, ws, bs):
    flat_idx = colvar_idx.reshape(-1)
    selected = positions[flat_idx].reshape(-1, 4, 3)
    cvs, dcvs_dx = calculate_dihedral_and_derivatives(selected)

    def energy_m(t_vec, w1, b1, w2, b2, w3, b3, w4, b4, w5, b5):
        xv = jnp.concatenate([jnp.cos(t_vec), jnp.sin(t_vec)])
        h = jnp.tanh(xv @ w1 + b1[0])
        h = jnp.tanh(h @ w2 + b2[0])
        h = jnp.tanh(h @ w3 + b3[0])
        h = jnp.tanh(h @ w4 + b4[0])
        return (h @ w5)[0] + b5[0, 0]

    e, g = jax.vmap(jax.value_and_grad(energy_m),
                    in_axes=(None, 0, 0, 0, 0, 0, 0, 0, 0, 0, 0))(
        cvs, ws[0], bs[0], ws[1], bs[1], ws[2], bs[2], ws[3], bs[3], ws[4], bs[4])
    e = e * BOOST_FACTOR                                  # (n_models,)
    g = g * BOOST_FACTOR                                  # (n_models, n_cvs)

    model_div = jnp.sqrt(jnp.mean(jnp.var(g, axis=0, ddof=1)))
    sigma = uncertainty_weight(model_div)
    mean_forces = jnp.mean(g, axis=0)

    contrib = (mean_forces.reshape(-1, 1, 1) * dcvs_dx).reshape(-1, 3)
    forces = jnp.zeros_like(positions).at[flat_idx].add(contrib)
    return e.mean() * sigma, forces * sigma


if __name__ == "__main__":
    import numpy as np

    n_models, n_cvs, nparticles = 4, 8, 16
    features = [64, 64, 64, 64]

    key = jax.random.PRNGKey(0)
    k_pos, k_par = jax.random.split(key)
    positions = jax.random.normal(k_pos, (nparticles, 3), jnp.float32)
    colvar_idx = jnp.array(
        [[i, (i + 1) % nparticles, (i + 2) % nparticles, (i + 3) % nparticles]
         for i in range(n_cvs)], dtype=jnp.int32)

    # Small last layer keeps the per-model gradient spread well below e0, so the
    # sigma branch is the non-degenerate (sigma=1) one and the test is meaningful.
    ws, bs = init_params(k_par, n_models, n_cvs, features, last_layer_scale=0.05)
    packed = pack_params(ws, bs)                          # bf16 weight blob

    fwd = jax.jit(dihedral_bias_forward)
    energy, forces = fwd(positions, colvar_idx, packed)
    jax.block_until_ready((energy, forces))

    ref_energy, ref_forces = _ref_forward(positions, colvar_idx, ws, bs)
    # Kernel weights are bf16 (reference is f32): tolerances relaxed accordingly; any
    # structural error (wrong layer/model indexing, transpose, variance) would be O(100%).
    np.testing.assert_allclose(np.asarray(energy), np.asarray(ref_energy),
                               rtol=3e-2, atol=5e-3)
    np.testing.assert_allclose(np.asarray(forces), np.asarray(ref_forces),
                               rtol=3e-2, atol=5e-3)

    assert energy.shape == () and forces.shape == (nparticles, 3)
    print("KERNEL_OK")
</pallas_src>

<mosaic_0001>
module attributes {stable_mosaic.version = 11 : i64} {
  func.func @_dihedral_bias_kernel(%arg0: memref<1x64xf32, #tpu.memory_space<vmem>>, %arg1: memref<16x64x64xbf16, #tpu.memory_space<vmem>>, %arg2: memref<4x8x64xf32, #tpu.memory_space<vmem>>, %arg3: memref<2x128xf32, #tpu.memory_space<vmem>>) attributes {dimension_semantics = [], scalar_prefetch = 0 : i64, scratch_operands = 0 : i64, tpu.core_type = #tpu.core_type<tc>} {
    %c0 = arith.constant 0 : index
    %c0_0 = arith.constant 0 : index
    %0 = vector.load %arg0[%c0, %c0_0] : memref<1x64xf32, #tpu.memory_space<vmem>>, vector<1x64xf32>
    %1 = vector.extract_strided_slice %0 {offsets = [0, 0], sizes = [1, 8], strides = [1, 1]} : vector<1x64xf32> to vector<1x8xf32>
    %2 = vector.extract_strided_slice %0 {offsets = [0, 8], sizes = [1, 8], strides = [1, 1]} : vector<1x64xf32> to vector<1x8xf32>
    %c0_1 = arith.constant 0 : index
    %c0_2 = arith.constant 0 : index
    %c0_3 = arith.constant 0 : index
    %3 = vector.load %arg1[%c0_1, %c0_2, %c0_3] : memref<16x64x64xbf16, #tpu.memory_space<vmem>>, vector<1x64x64xbf16>
    %4 = vector.shape_cast %3 : vector<1x64x64xbf16> to vector<64x64xbf16>
    %5 = arith.extf %4 : vector<64x64xbf16> to vector<64x64xf32>
    %c4 = arith.constant 4 : index
    %c0_4 = arith.constant 0 : index
    %c0_5 = arith.constant 0 : index
    %6 = vector.load %arg1[%c4, %c0_4, %c0_5] : memref<16x64x64xbf16, #tpu.memory_space<vmem>>, vector<1x64x64xbf16>
    %7 = vector.shape_cast %6 : vector<1x64x64xbf16> to vector<64x64xbf16>
    %8 = arith.extf %7 : vector<64x64xbf16> to vector<64x64xf32>
    %c8 = arith.constant 8 : index
    %c0_6 = arith.constant 0 : index
    %c0_7 = arith.constant 0 : index
    %9 = vector.load %arg1[%c8, %c0_6, %c0_7] : memref<16x64x64xbf16, #tpu.memory_space<vmem>>, vector<1x64x64xbf16>
    %10 = vector.shape_cast %9 : vector<1x64x64xbf16> to vector<64x64xbf16>
    %11 = arith.extf %10 : vector<64x64xbf16> to vector<64x64xf32>
    %c12 = arith.constant 12 : index
    %c0_8 = arith.constant 0 : index
    %c0_9 = arith.constant 0 : index
    %12 = vector.load %arg1[%c12, %c0_8, %c0_9] : memref<16x64x64xbf16, #tpu.memory_space<vmem>>, vector<1x64x64xbf16>
    %13 = vector.shape_cast %12 : vector<1x64x64xbf16> to vector<64x64xbf16>
    %14 = arith.extf %13 : vector<64x64xbf16> to vector<64x64xf32>
    %c0_10 = arith.constant 0 : index
    %c0_11 = arith.constant 0 : index
    %c0_12 = arith.constant 0 : index
    %15 = vector.load %arg2[%c0_10, %c0_11, %c0_12] : memref<4x8x64xf32, #tpu.memory_space<vmem>>, vector<1x8x64xf32>
    %16 = vector.shape_cast %15 : vector<1x8x64xf32> to vector<8x64xf32>
    %17 = vector.extract_strided_slice %16 {offsets = [0, 0], sizes = [1, 64], strides = [1, 1]} : vector<8x64xf32> to vector<1x64xf32>
    %18 = vector.extract_strided_slice %16 {offsets = [1, 0], sizes = [1, 64], strides = [1, 1]} : vector<8x64xf32> to vector<1x64xf32>
    %19 = vector.extract_strided_slice %16 {offsets = [2, 0], sizes = [1, 64], strides = [1, 1]} : vector<8x64xf32> to vector<1x64xf32>
    %20 = vector.extract_strided_slice %16 {offsets = [3, 0], sizes = [1, 64], strides = [1, 1]} : vector<8x64xf32> to vector<1x64xf32>
    %21 = vector.extract_strided_slice %16 {offsets = [4, 0], sizes = [1, 64], strides = [1, 1]} : vector<8x64xf32> to vector<1x64xf32>
    %22 = vector.extract_strided_slice %16 {offsets = [5, 0], sizes = [1, 1], strides = [1, 1]} : vector<8x64xf32> to vector<1x1xf32>
    %cst = arith.constant dense<0.000000e+00> : vector<1x64xf32>
    %23 = tpu.matmul %0, %5, %cst {dimension_numbers = #tpu.dot_dimension_numbers<[1], [0], [0], [1], [0, 0, 1, 1], [], []>} : vector<1x64xf32>, vector<64x64xf32>, vector<1x64xf32> -> vector<1x64xf32>
    %24 = arith.addf %23, %17 : vector<1x64xf32>
    %25 = math.tanh %24 : vector<1x64xf32>
    %cst_13 = arith.constant dense<0.000000e+00> : vector<1x64xf32>
    %26 = tpu.matmul %25, %8, %cst_13 {dimension_numbers = #tpu.dot_dimension_numbers<[1], [0], [0], [1], [0, 0, 1, 1], [], []>} : vector<1x64xf32>, vector<64x64xf32>, vector<1x64xf32> -> vector<1x64xf32>
    %27 = arith.addf %26, %18 : vector<1x64xf32>
    %28 = math.tanh %27 : vector<1x64xf32>
    %cst_14 = arith.constant dense<0.000000e+00> : vector<1x64xf32>
    %29 = tpu.matmul %28, %11, %cst_14 {dimension_numbers = #tpu.dot_dimension_numbers<[1], [0], [0], [1], [0, 0, 1, 1], [], []>} : vector<1x64xf32>, vector<64x64xf32>, vector<1x64xf32> -> vector<1x64xf32>
    %30 = arith.addf %29, %19 : vector<1x64xf32>
    %31 = math.tanh %30 : vector<1x64xf32>
    %cst_15 = arith.constant dense<0.000000e+00> : vector<1x64xf32>
    %32 = tpu.matmul %31, %14, %cst_15 {dimension_numbers = #tpu.dot_dimension_numbers<[1], [0], [0], [1], [0, 0, 1, 1], [], []>} : vector<1x64xf32>, vector<64x64xf32>, vector<1x64xf32> -> vector<1x64xf32>
    %33 = arith.addf %32, %20 : vector<1x64xf32>
    %34 = math.tanh %33 : vector<1x64xf32>
    %35 = arith.mulf %34, %21 : vector<1x64xf32>
    %cst_16 = arith.constant dense<0.000000e+00> : vector<1xf32>
    %36 = vector.multi_reduction <add>, %35, %cst_16 [1] : vector<1x64xf32> to vector<1xf32>
    %37 = vector.shape_cast %36 : vector<1xf32> to vector<1x1xf32>
    %38 = arith.addf %37, %22 : vector<1x1xf32>
    %39 = arith.mulf %34, %34 : vector<1x64xf32>
    %cst_17 = arith.constant 1.000000e+00 : f32
    %40 = vector.broadcast %cst_17 : f32 to vector<1x64xf32>
    %41 = arith.subf %40, %39 : vector<1x64xf32>
    %42 = arith.mulf %21, %41 : vector<1x64xf32>
    %cst_18 = arith.constant dense<0.000000e+00> : vector<1x64xf32>
    %43 = tpu.matmul %42, %14, %cst_18 {dimension_numbers = #tpu.dot_dimension_numbers<[1], [1], [0], [0], [0, 0, 1, 0], [], []>} : vector<1x64xf32>, vector<64x64xf32>, vector<1x64xf32> -> vector<1x64xf32>
    %44 = arith.mulf %31, %31 : vector<1x64xf32>
    %cst_19 = arith.constant 1.000000e+00 : f32
    %45 = vector.broadcast %cst_19 : f32 to vector<1x64xf32>
    %46 = arith.subf %45, %44 : vector<1x64xf32>
    %47 = arith.mulf %43, %46 : vector<1x64xf32>
    %cst_20 = arith.constant dense<0.000000e+00> : vector<1x64xf32>
    %48 = tpu.matmul %47, %11, %cst_20 {dimension_numbers = #tpu.dot_dimension_numbers<[1], [1], [0], [0], [0, 0, 1, 0], [], []>} : vector<1x64xf32>, vector<64x64xf32>, vector<1x64xf32> -> vector<1x64xf32>
    %49 = arith.mulf %28, %28 : vector<1x64xf32>
    %cst_21 = arith.constant 1.000000e+00 : f32
    %50 = vector.broadcast %cst_21 : f32 to vector<1x64xf32>
    %51 = arith.subf %50, %49 : vector<1x64xf32>
    %52 = arith.mulf %48, %51 : vector<1x64xf32>
    %cst_22 = arith.constant dense<0.000000e+00> : vector<1x64xf32>
    %53 = tpu.matmul %52, %8, %cst_22 {dimension_numbers = #tpu.dot_dimension_numbers<[1], [1], [0], [0], [0, 0, 1, 0], [], []>} : vector<1x64xf32>, vector<64x64xf32>, vector<1x64xf32> -> vector<1x64xf32>
    %54 = arith.mulf %25, %25 : vector<1x64xf32>
    %cst_23 = arith.constant 1.000000e+00 : f32
    %55 = vector.broadcast %cst_23 : f32 to vector<1x64xf32>
    %56 = arith.subf %55, %54 : vector<1x64xf32>
    %57 = arith.mulf %53, %56 : vector<1x64xf32>
    %cst_24 = arith.constant dense<0.000000e+00> : vector<1x64xf32>
    %58 = tpu.matmul %57, %5, %cst_24 {dimension_numbers = #tpu.dot_dimension_numbers<[1], [1], [0], [0], [0, 0, 1, 0], [], []>} : vector<1x64xf32>, vector<64x64xf32>, vector<1x64xf32> -> vector<1x64xf32>
    %59 = vector.extract_strided_slice %58 {offsets = [0, 0], sizes = [1, 8], strides = [1, 1]} : vector<1x64xf32> to vector<1x8xf32>
    %60 = vector.extract_strided_slice %58 {offsets = [0, 8], sizes = [1, 8], strides = [1, 1]} : vector<1x64xf32> to vector<1x8xf32>
    %61 = arith.mulf %1, %60 : vector<1x8xf32>
    %62 = arith.mulf %2, %59 : vector<1x8xf32>
    %63 = arith.subf %61, %62 : vector<1x8xf32>
    %c1 = arith.constant 1 : index
    %c0_25 = arith.constant 0 : index
    %c0_26 = arith.constant 0 : index
    %64 = vector.load %arg1[%c1, %c0_25, %c0_26] : memref<16x64x64xbf16, #tpu.memory_space<vmem>>, vector<1x64x64xbf16>
    %65 = vector.shape_cast %64 : vector<1x64x64xbf16> to vector<64x64xbf16>
    %66 = arith.extf %65 : vector<64x64xbf16> to vector<64x64xf32>
    %c5 = arith.constant 5 : index
    %c0_27 = arith.constant 0 : index
    %c0_28 = arith.constant 0 : index
    %67 = vector.load %arg1[%c5, %c0_27, %c0_28] : memref<16x64x64xbf16, #tpu.memory_space<vmem>>, vector<1x64x64xbf16>
    %68 = vector.shape_cast %67 : vector<1x64x64xbf16> to vector<64x64xbf16>
    %69 = arith.extf %68 : vector<64x64xbf16> to vector<64x64xf32>
    %c9 = arith.constant 9 : index
    %c0_29 = arith.constant 0 : index
    %c0_30 = arith.constant 0 : index
    %70 = vector.load %arg1[%c9, %c0_29, %c0_30] : memref<16x64x64xbf16, #tpu.memory_space<vmem>>, vector<1x64x64xbf16>
    %71 = vector.shape_cast %70 : vector<1x64x64xbf16> to vector<64x64xbf16>
    %72 = arith.extf %71 : vector<64x64xbf16> to vector<64x64xf32>
    %c13 = arith.constant 13 : index
    %c0_31 = arith.constant 0 : index
    %c0_32 = arith.constant 0 : index
    %73 = vector.load %arg1[%c13, %c0_31, %c0_32] : memref<16x64x64xbf16, #tpu.memory_space<vmem>>, vector<1x64x64xbf16>
    %74 = vector.shape_cast %73 : vector<1x64x64xbf16> to vector<64x64xbf16>
    %75 = arith.extf %74 : vector<64x64xbf16> to vector<64x64xf32>
    %c1_33 = arith.constant 1 : index
    %c0_34 = arith.constant 0 : index
    %c0_35 = arith.constant 0 : index
    %76 = vector.load %arg2[%c1_33, %c0_34, %c0_35] : memref<4x8x64xf32, #tpu.memory_space<vmem>>, vector<1x8x64xf32>
    %77 = vector.shape_cast %76 : vector<1x8x64xf32> to vector<8x64xf32>
    %78 = vector.extract_strided_slice %77 {offsets = [0, 0], sizes = [1, 64], strides = [1, 1]} : vector<8x64xf32> to vector<1x64xf32>
    %79 = vector.extract_strided_slice %77 {offsets = [1, 0], sizes = [1, 64], strides = [1, 1]} : vector<8x64xf32> to vector<1x64xf32>
    %80 = vector.extract_strided_slice %77 {offsets = [2, 0], sizes = [1, 64], strides = [1, 1]} : vector<8x64xf32> to vector<1x64xf32>
    %81 = vector.extract_strided_slice %77 {offsets = [3, 0], sizes = [1, 64], strides = [1, 1]} : vector<8x64xf32> to vector<1x64xf32>
    %82 = vector.extract_strided_slice %77 {offsets = [4, 0], sizes = [1, 64], strides = [1, 1]} : vector<8x64xf32> to vector<1x64xf32>
    %83 = vector.extract_strided_slice %77 {offsets = [5, 0], sizes = [1, 1], strides = [1, 1]} : vector<8x64xf32> to vector<1x1xf32>
    %cst_36 = arith.constant dense<0.000000e+00> : vector<1x64xf32>
    %84 = tpu.matmul %0, %66, %cst_36 {dimension_numbers = #tpu.dot_dimension_numbers<[1], [0], [0], [1], [0, 0, 1, 1], [], []>} : vector<1x64xf32>, vector<64x64xf32>, vector<1x64xf32> -> vector<1x64xf32>
    %85 = arith.addf %84, %78 : vector<1x64xf32>
    %86 = math.tanh %85 : vector<1x64xf32>
    %cst_37 = arith.constant dense<0.000000e+00> : vector<1x64xf32>
    %87 = tpu.matmul %86, %69, %cst_37 {dimension_numbers = #tpu.dot_dimension_numbers<[1], [0], [0], [1], [0, 0, 1, 1], [], []>} : vector<1x64xf32>, vector<64x64xf32>, vector<1x64xf32> -> vector<1x64xf32>
    %88 = arith.addf %87, %79 : vector<1x64xf32>
    %89 = math.tanh %88 : vector<1x64xf32>
    %cst_38 = arith.constant dense<0.000000e+00> : vector<1x64xf32>
    %90 = tpu.matmul %89, %72, %cst_38 {dimension_numbers = #tpu.dot_dimension_numbers<[1], [0], [0], [1], [0, 0, 1, 1], [], []>} : vector<1x64xf32>, vector<64x64xf32>, vector<1x64xf32> -> vector<1x64xf32>
    %91 = arith.addf %90, %80 : vector<1x64xf32>
    %92 = math.tanh %91 : vector<1x64xf32>
    %cst_39 = arith.constant dense<0.000000e+00> : vector<1x64xf32>
    %93 = tpu.matmul %92, %75, %cst_39 {dimension_numbers = #tpu.dot_dimension_numbers<[1], [0], [0], [1], [0, 0, 1, 1], [], []>} : vector<1x64xf32>, vector<64x64xf32>, vector<1x64xf32> -> vector<1x64xf32>
    %94 = arith.addf %93, %81 : vector<1x64xf32>
    %95 = math.tanh %94 : vector<1x64xf32>
    %96 = arith.mulf %95, %82 : vector<1x64xf32>
    %cst_40 = arith.constant dense<0.000000e+00> : vector<1xf32>
    %97 = vector.multi_reduction <add>, %96, %cst_40 [1] : vector<1x64xf32> to vector<1xf32>
    %98 = vector.shape_cast %97 : vector<1xf32> to vector<1x1xf32>
    %99 = arith.addf %98, %83 : vector<1x1xf32>
    %100 = arith.mulf %95, %95 : vector<1x64xf32>
    %cst_41 = arith.constant 1.000000e+00 : f32
    %101 = vector.broadcast %cst_41 : f32 to vector<1x64xf32>
    %102 = arith.subf %101, %100 : vector<1x64xf32>
    %103 = arith.mulf %82, %102 : vector<1x64xf32>
    %cst_42 = arith.constant dense<0.000000e+00> : vector<1x64xf32>
    %104 = tpu.matmul %103, %75, %cst_42 {dimension_numbers = #tpu.dot_dimension_numbers<[1], [1], [0], [0], [0, 0, 1, 0], [], []>} : vector<1x64xf32>, vector<64x64xf32>, vector<1x64xf32> -> vector<1x64xf32>
    %105 = arith.mulf %92, %92 : vector<1x64xf32>
    %cst_43 = arith.constant 1.000000e+00 : f32
    %106 = vector.broadcast %cst_43 : f32 to vector<1x64xf32>
    %107 = arith.subf %106, %105 : vector<1x64xf32>
    %108 = arith.mulf %104, %107 : vector<1x64xf32>
    %cst_44 = arith.constant dense<0.000000e+00> : vector<1x64xf32>
    %109 = tpu.matmul %108, %72, %cst_44 {dimension_numbers = #tpu.dot_dimension_numbers<[1], [1], [0], [0], [0, 0, 1, 0], [], []>} : vector<1x64xf32>, vector<64x64xf32>, vector<1x64xf32> -> vector<1x64xf32>
    %110 = arith.mulf %89, %89 : vector<1x64xf32>
    %cst_45 = arith.constant 1.000000e+00 : f32
    %111 = vector.broadcast %cst_45 : f32 to vector<1x64xf32>
    %112 = arith.subf %111, %110 : vector<1x64xf32>
    %113 = arith.mulf %109, %112 : vector<1x64xf32>
    %cst_46 = arith.constant dense<0.000000e+00> : vector<1x64xf32>
    %114 = tpu.matmul %113, %69, %cst_46 {dimension_numbers = #tpu.dot_dimension_numbers<[1], [1], [0], [0], [0, 0, 1, 0], [], []>} : vector<1x64xf32>, vector<64x64xf32>, vector<1x64xf32> -> vector<1x64xf32>
    %115 = arith.mulf %86, %86 : vector<1x64xf32>
    %cst_47 = arith.constant 1.000000e+00 : f32
    %116 = vector.broadcast %cst_47 : f32 to vector<1x64xf32>
    %117 = arith.subf %116, %115 : vector<1x64xf32>
    %118 = arith.mulf %114, %117 : vector<1x64xf32>
    %cst_48 = arith.constant dense<0.000000e+00> : vector<1x64xf32>
    %119 = tpu.matmul %118, %66, %cst_48 {dimension_numbers = #tpu.dot_dimension_numbers<[1], [1], [0], [0], [0, 0, 1, 0], [], []>} : vector<1x64xf32>, vector<64x64xf32>, vector<1x64xf32> -> vector<1x64xf32>
    %120 = vector.extract_strided_slice %119 {offsets = [0, 0], sizes = [1, 8], strides = [1, 1]} : vector<1x64xf32> to vector<1x8xf32>
    %121 = vector.extract_strided_slice %119 {offsets = [0, 8], sizes = [1, 8], strides = [1, 1]} : vector<1x64xf32> to vector<1x8xf32>
    %122 = arith.mulf %1, %121 : vector<1x8xf32>
    %123 = arith.mulf %2, %120 : vector<1x8xf32>
    %124 = arith.subf %122, %123 : vector<1x8xf32>
    %c2 = arith.constant 2 : index
    %c0_49 = arith.constant 0 : index
    %c0_50 = arith.constant 0 : index
    %125 = vector.load %arg1[%c2, %c0_49, %c0_50] : memref<16x64x64xbf16, #tpu.memory_space<vmem>>, vector<1x64x64xbf16>
    %126 = vector.shape_cast %125 : vector<1x64x64xbf16> to vector<64x64xbf16>
    %127 = arith.extf %126 : vector<64x64xbf16> to vector<64x64xf32>
    %c6 = arith.constant 6 : index
    %c0_51 = arith.constant 0 : index
    %c0_52 = arith.constant 0 : index
    %128 = vector.load %arg1[%c6, %c0_51, %c0_52] : memref<16x64x64xbf16, #tpu.memory_space<vmem>>, vector<1x64x64xbf16>
    %129 = vector.shape_cast %128 : vector<1x64x64xbf16> to vector<64x64xbf16>
    %130 = arith.extf %129 : vector<64x64xbf16> to vector<64x64xf32>
    %c10 = arith.constant 10 : index
    %c0_53 = arith.constant 0 : index
    %c0_54 = arith.constant 0 : index
    %131 = vector.load %arg1[%c10, %c0_53, %c0_54] : memref<16x64x64xbf16, #tpu.memory_space<vmem>>, vector<1x64x64xbf16>
    %132 = vector.shape_cast %131 : vector<1x64x64xbf16> to vector<64x64xbf16>
    %133 = arith.extf %132 : vector<64x64xbf16> to vector<64x64xf32>
    %c14 = arith.constant 14 : index
    %c0_55 = arith.constant 0 : index
    %c0_56 = arith.constant 0 : index
    %134 = vector.load %arg1[%c14, %c0_55, %c0_56] : memref<16x64x64xbf16, #tpu.memory_space<vmem>>, vector<1x64x64xbf16>
    %135 = vector.shape_cast %134 : vector<1x64x64xbf16> to vector<64x64xbf16>
    %136 = arith.extf %135 : vector<64x64xbf16> to vector<64x64xf32>
    %c2_57 = arith.constant 2 : index
    %c0_58 = arith.constant 0 : index
    %c0_59 = arith.constant 0 : index
    %137 = vector.load %arg2[%c2_57, %c0_58, %c0_59] : memref<4x8x64xf32, #tpu.memory_space<vmem>>, vector<1x8x64xf32>
    %138 = vector.shape_cast %137 : vector<1x8x64xf32> to vector<8x64xf32>
    %139 = vector.extract_strided_slice %138 {offsets = [0, 0], sizes = [1, 64], strides = [1, 1]} : vector<8x64xf32> to vector<1x64xf32>
    %140 = vector.extract_strided_slice %138 {offsets = [1, 0], sizes = [1, 64], strides = [1, 1]} : vector<8x64xf32> to vector<1x64xf32>
    %141 = vector.extract_strided_slice %138 {offsets = [2, 0], sizes = [1, 64], strides = [1, 1]} : vector<8x64xf32> to vector<1x64xf32>
    %142 = vector.extract_strided_slice %138 {offsets = [3, 0], sizes = [1, 64], strides = [1, 1]} : vector<8x64xf32> to vector<1x64xf32>
    %143 = vector.extract_strided_slice %138 {offsets = [4, 0], sizes = [1, 64], strides = [1, 1]} : vector<8x64xf32> to vector<1x64xf32>
    %144 = vector.extract_strided_slice %138 {offsets = [5, 0], sizes = [1, 1], strides = [1, 1]} : vector<8x64xf32> to vector<1x1xf32>
    %cst_60 = arith.constant dense<0.000000e+00> : vector<1x64xf32>
    %145 = tpu.matmul %0, %127, %cst_60 {dimension_numbers = #tpu.dot_dimension_numbers<[1], [0], [0], [1], [0, 0, 1, 1], [], []>} : vector<1x64xf32>, vector<64x64xf32>, vector<1x64xf32> -> vector<1x64xf32>
    %146 = arith.addf %145, %139 : vector<1x64xf32>
    %147 = math.tanh %146 : vector<1x64xf32>
    %cst_61 = arith.constant dense<0.000000e+00> : vector<1x64xf32>
    %148 = tpu.matmul %147, %130, %cst_61 {dimension_numbers = #tpu.dot_dimension_numbers<[1], [0], [0], [1], [0, 0, 1, 1], [], []>} : vector<1x64xf32>, vector<64x64xf32>, vector<1x64xf32> -> vector<1x64xf32>
    %149 = arith.addf %148, %140 : vector<1x64xf32>
    %150 = math.tanh %149 : vector<1x64xf32>
    %cst_62 = arith.constant dense<0.000000e+00> : vector<1x64xf32>
    %151 = tpu.matmul %150, %133, %cst_62 {dimension_numbers = #tpu.dot_dimension_numbers<[1], [0], [0], [1], [0, 0, 1, 1], [], []>} : vector<1x64xf32>, vector<64x64xf32>, vector<1x64xf32> -> vector<1x64xf32>
    %152 = arith.addf %151, %141 : vector<1x64xf32>
    %153 = math.tanh %152 : vector<1x64xf32>
    %cst_63 = arith.constant dense<0.000000e+00> : vector<1x64xf32>
    %154 = tpu.matmul %153, %136, %cst_63 {dimension_numbers = #tpu.dot_dimension_numbers<[1], [0], [0], [1], [0, 0, 1, 1], [], []>} : vector<1x64xf32>, vector<64x64xf32>, vector<1x64xf32> -> vector<1x64xf32>
    %155 = arith.addf %154, %142 : vector<1x64xf32>
    %156 = math.tanh %155 : vector<1x64xf32>
    %157 = arith.mulf %156, %143 : vector<1x64xf32>
    %cst_64 = arith.constant dense<0.000000e+00> : vector<1xf32>
    %158 = vector.multi_reduction <add>, %157, %cst_64 [1] : vector<1x64xf32> to vector<1xf32>
    %159 = vector.shape_cast %158 : vector<1xf32> to vector<1x1xf32>
    %160 = arith.addf %159, %144 : vector<1x1xf32>
    %161 = arith.mulf %156, %156 : vector<1x64xf32>
    %cst_65 = arith.constant 1.000000e+00 : f32
    %162 = vector.broadcast %cst_65 : f32 to vector<1x64xf32>
    %163 = arith.subf %162, %161 : vector<1x64xf32>
    %164 = arith.mulf %143, %163 : vector<1x64xf32>
    %cst_66 = arith.constant dense<0.000000e+00> : vector<1x64xf32>
    %165 = tpu.matmul %164, %136, %cst_66 {dimension_numbers = #tpu.dot_dimension_numbers<[1], [1], [0], [0], [0, 0, 1, 0], [], []>} : vector<1x64xf32>, vector<64x64xf32>, vector<1x64xf32> -> vector<1x64xf32>
    %166 = arith.mulf %153, %153 : vector<1x64xf32>
    %cst_67 = arith.constant 1.000000e+00 : f32
    %167 = vector.broadcast %cst_67 : f32 to vector<1x64xf32>
    %168 = arith.subf %167, %166 : vector<1x64xf32>
    %169 = arith.mulf %165, %168 : vector<1x64xf32>
    %cst_68 = arith.constant dense<0.000000e+00> : vector<1x64xf32>
    %170 = tpu.matmul %169, %133, %cst_68 {dimension_numbers = #tpu.dot_dimension_numbers<[1], [1], [0], [0], [0, 0, 1, 0], [], []>} : vector<1x64xf32>, vector<64x64xf32>, vector<1x64xf32> -> vector<1x64xf32>
    %171 = arith.mulf %150, %150 : vector<1x64xf32>
    %cst_69 = arith.constant 1.000000e+00 : f32
    %172 = vector.broadcast %cst_69 : f32 to vector<1x64xf32>
    %173 = arith.subf %172, %171 : vector<1x64xf32>
    %174 = arith.mulf %170, %173 : vector<1x64xf32>
    %cst_70 = arith.constant dense<0.000000e+00> : vector<1x64xf32>
    %175 = tpu.matmul %174, %130, %cst_70 {dimension_numbers = #tpu.dot_dimension_numbers<[1], [1], [0], [0], [0, 0, 1, 0], [], []>} : vector<1x64xf32>, vector<64x64xf32>, vector<1x64xf32> -> vector<1x64xf32>
    %176 = arith.mulf %147, %147 : vector<1x64xf32>
    %cst_71 = arith.constant 1.000000e+00 : f32
    %177 = vector.broadcast %cst_71 : f32 to vector<1x64xf32>
    %178 = arith.subf %177, %176 : vector<1x64xf32>
    %179 = arith.mulf %175, %178 : vector<1x64xf32>
    %cst_72 = arith.constant dense<0.000000e+00> : vector<1x64xf32>
    %180 = tpu.matmul %179, %127, %cst_72 {dimension_numbers = #tpu.dot_dimension_numbers<[1], [1], [0], [0], [0, 0, 1, 0], [], []>} : vector<1x64xf32>, vector<64x64xf32>, vector<1x64xf32> -> vector<1x64xf32>
    %181 = vector.extract_strided_slice %180 {offsets = [0, 0], sizes = [1, 8], strides = [1, 1]} : vector<1x64xf32> to vector<1x8xf32>
    %182 = vector.extract_strided_slice %180 {offsets = [0, 8], sizes = [1, 8], strides = [1, 1]} : vector<1x64xf32> to vector<1x8xf32>
    %183 = arith.mulf %1, %182 : vector<1x8xf32>
    %184 = arith.mulf %2, %181 : vector<1x8xf32>
    %185 = arith.subf %183, %184 : vector<1x8xf32>
    %c3 = arith.constant 3 : index
    %c0_73 = arith.constant 0 : index
    %c0_74 = arith.constant 0 : index
    %186 = vector.load %arg1[%c3, %c0_73, %c0_74] : memref<16x64x64xbf16, #tpu.memory_space<vmem>>, vector<1x64x64xbf16>
    %187 = vector.shape_cast %186 : vector<1x64x64xbf16> to vector<64x64xbf16>
    %188 = arith.extf %187 : vector<64x64xbf16> to vector<64x64xf32>
    %c7 = arith.constant 7 : index
    %c0_75 = arith.constant 0 : index
    %c0_76 = arith.constant 0 : index
    %189 = vector.load %arg1[%c7, %c0_75, %c0_76] : memref<16x64x64xbf16, #tpu.memory_space<vmem>>, vector<1x64x64xbf16>
    %190 = vector.shape_cast %189 : vector<1x64x64xbf16> to vector<64x64xbf16>
    %191 = arith.extf %190 : vector<64x64xbf16> to vector<64x64xf32>
    %c11 = arith.constant 11 : index
    %c0_77 = arith.constant 0 : index
    %c0_78 = arith.constant 0 : index
    %192 = vector.load %arg1[%c11, %c0_77, %c0_78] : memref<16x64x64xbf16, #tpu.memory_space<vmem>>, vector<1x64x64xbf16>
    %193 = vector.shape_cast %192 : vector<1x64x64xbf16> to vector<64x64xbf16>
    %194 = arith.extf %193 : vector<64x64xbf16> to vector<64x64xf32>
    %c15 = arith.constant 15 : index
    %c0_79 = arith.constant 0 : index
    %c0_80 = arith.constant 0 : index
    %195 = vector.load %arg1[%c15, %c0_79, %c0_80] : memref<16x64x64xbf16, #tpu.memory_space<vmem>>, vector<1x64x64xbf16>
    %196 = vector.shape_cast %195 : vector<1x64x64xbf16> to vector<64x64xbf16>
    %197 = arith.extf %196 : vector<64x64xbf16> to vector<64x64xf32>
    %c3_81 = arith.constant 3 : index
    %c0_82 = arith.constant 0 : index
    %c0_83 = arith.constant 0 : index
    %198 = vector.load %arg2[%c3_81, %c0_82, %c0_83] : memref<4x8x64xf32, #tpu.memory_space<vmem>>, vector<1x8x64xf32>
    %199 = vector.shape_cast %198 : vector<1x8x64xf32> to vector<8x64xf32>
    %200 = vector.extract_strided_slice %199 {offsets = [0, 0], sizes = [1, 64], strides = [1, 1]} : vector<8x64xf32> to vector<1x64xf32>
    %201 = vector.extract_strided_slice %199 {offsets = [1, 0], sizes = [1, 64], strides = [1, 1]} : vector<8x64xf32> to vector<1x64xf32>
    %202 = vector.extract_strided_slice %199 {offsets = [2, 0], sizes = [1, 64], strides = [1, 1]} : vector<8x64xf32> to vector<1x64xf32>
    %203 = vector.extract_strided_slice %199 {offsets = [3, 0], sizes = [1, 64], strides = [1, 1]} : vector<8x64xf32> to vector<1x64xf32>
    %204 = vector.extract_strided_slice %199 {offsets = [4, 0], sizes = [1, 64], strides = [1, 1]} : vector<8x64xf32> to vector<1x64xf32>
    %205 = vector.extract_strided_slice %199 {offsets = [5, 0], sizes = [1, 1], strides = [1, 1]} : vector<8x64xf32> to vector<1x1xf32>
    %cst_84 = arith.constant dense<0.000000e+00> : vector<1x64xf32>
    %206 = tpu.matmul %0, %188, %cst_84 {dimension_numbers = #tpu.dot_dimension_numbers<[1], [0], [0], [1], [0, 0, 1, 1], [], []>} : vector<1x64xf32>, vector<64x64xf32>, vector<1x64xf32> -> vector<1x64xf32>
    %207 = arith.addf %206, %200 : vector<1x64xf32>
    %208 = math.tanh %207 : vector<1x64xf32>
    %cst_85 = arith.constant dense<0.000000e+00> : vector<1x64xf32>
    %209 = tpu.matmul %208, %191, %cst_85 {dimension_numbers = #tpu.dot_dimension_numbers<[1], [0], [0], [1], [0, 0, 1, 1], [], []>} : vector<1x64xf32>, vector<64x64xf32>, vector<1x64xf32> -> vector<1x64xf32>
    %210 = arith.addf %209, %201 : vector<1x64xf32>
    %211 = math.tanh %210 : vector<1x64xf32>
    %cst_86 = arith.constant dense<0.000000e+00> : vector<1x64xf32>
    %212 = tpu.matmul %211, %194, %cst_86 {dimension_numbers = #tpu.dot_dimension_numbers<[1], [0], [0], [1], [0, 0, 1, 1], [], []>} : vector<1x64xf32>, vector<64x64xf32>, vector<1x64xf32> -> vector<1x64xf32>
    %213 = arith.addf %212, %202 : vector<1x64xf32>
    %214 = math.tanh %213 : vector<1x64xf32>
    %cst_87 = arith.constant dense<0.000000e+00> : vector<1x64xf32>
    %215 = tpu.matmul %214, %197, %cst_87 {dimension_numbers = #tpu.dot_dimension_numbers<[1], [0], [0], [1], [0, 0, 1, 1], [], []>} : vector<1x64xf32>, vector<64x64xf32>, vector<1x64xf32> -> vector<1x64xf32>
    %216 = arith.addf %215, %203 : vector<1x64xf32>
    %217 = math.tanh %216 : vector<1x64xf32>
    %218 = arith.mulf %217, %204 : vector<1x64xf32>
    %cst_88 = arith.constant dense<0.000000e+00> : vector<1xf32>
    %219 = vector.multi_reduction <add>, %218, %cst_88 [1] : vector<1x64xf32> to vector<1xf32>
    %220 = vector.shape_cast %219 : vector<1xf32> to vector<1x1xf32>
    %221 = arith.addf %220, %205 : vector<1x1xf32>
    %222 = arith.mulf %217, %217 : vector<1x64xf32>
    %cst_89 = arith.constant 1.000000e+00 : f32
    %223 = vector.broadcast %cst_89 : f32 to vector<1x64xf32>
    %224 = arith.subf %223, %222 : vector<1x64xf32>
    %225 = arith.mulf %204, %224 : vector<1x64xf32>
    %cst_90 = arith.constant dense<0.000000e+00> : vector<1x64xf32>
    %226 = tpu.matmul %225, %197, %cst_90 {dimension_numbers = #tpu.dot_dimension_numbers<[1], [1], [0], [0], [0, 0, 1, 0], [], []>} : vector<1x64xf32>, vector<64x64xf32>, vector<1x64xf32> -> vector<1x64xf32>
    %227 = arith.mulf %214, %214 : vector<1x64xf32>
    %cst_91 = arith.constant 1.000000e+00 : f32
    %228 = vector.broadcast %cst_91 : f32 to vector<1x64xf32>
    %229 = arith.subf %228, %227 : vector<1x64xf32>
    %230 = arith.mulf %226, %229 : vector<1x64xf32>
    %cst_92 = arith.constant dense<0.000000e+00> : vector<1x64xf32>
    %231 = tpu.matmul %230, %194, %cst_92 {dimension_numbers = #tpu.dot_dimension_numbers<[1], [1], [0], [0], [0, 0, 1, 0], [], []>} : vector<1x64xf32>, vector<64x64xf32>, vector<1x64xf32> -> vector<1x64xf32>
    %232 = arith.mulf %211, %211 : vector<1x64xf32>
    %cst_93 = arith.constant 1.000000e+00 : f32
    %233 = vector.broadcast %cst_93 : f32 to vector<1x64xf32>
    %234 = arith.subf %233, %232 : vector<1x64xf32>
    %235 = arith.mulf %231, %234 : vector<1x64xf32>
    %cst_94 = arith.constant dense<0.000000e+00> : vector<1x64xf32>
    %236 = tpu.matmul %235, %191, %cst_94 {dimension_numbers = #tpu.dot_dimension_numbers<[1], [1], [0], [0], [0, 0, 1, 0], [], []>} : vector<1x64xf32>, vector<64x64xf32>, vector<1x64xf32> -> vector<1x64xf32>
    %237 = arith.mulf %208, %208 : vector<1x64xf32>
    %cst_95 = arith.constant 1.000000e+00 : f32
    %238 = vector.broadcast %cst_95 : f32 to vector<1x64xf32>
    %239 = arith.subf %238, %237 : vector<1x64xf32>
    %240 = arith.mulf %236, %239 : vector<1x64xf32>
    %cst_96 = arith.constant dense<0.000000e+00> : vector<1x64xf32>
    %241 = tpu.matmul %240, %188, %cst_96 {dimension_numbers = #tpu.dot_dimension_numbers<[1], [1], [0], [0], [0, 0, 1, 0], [], []>} : vector<1x64xf32>, vector<64x64xf32>, vector<1x64xf32> -> vector<1x64xf32>
    %242 = vector.extract_strided_slice %241 {offsets = [0, 0], sizes = [1, 8], strides = [1, 1]} : vector<1x64xf32> to vector<1x8xf32>
    %243 = vector.extract_strided_slice %241 {offsets = [0, 8], sizes = [1, 8], strides = [1, 1]} : vector<1x64xf32> to vector<1x8xf32>
    %244 = arith.mulf %1, %243 : vector<1x8xf32>
    %245 = arith.mulf %2, %242 : vector<1x8xf32>
    %246 = arith.subf %244, %245 : vector<1x8xf32>
    %247 = arith.addf %38, %99 : vector<1x1xf32>
    %248 = arith.addf %247, %160 : vector<1x1xf32>
    %249 = arith.addf %248, %221 : vector<1x1xf32>
    %cst_97 = arith.constant 2.500000e-01 : f32
    %250 = vector.broadcast %cst_97 : f32 to vector<1x1xf32>
    %251 = arith.mulf %249, %250 : vector<1x1xf32>
    %cst_98 = arith.constant 9.648500e+01 : f32
    %252 = vector.broadcast %cst_98 : f32 to vector<1x1xf32>
    %253 = arith.mulf %251, %252 : vector<1x1xf32>
    %254 = arith.addf %63, %124 : vector<1x8xf32>
    %255 = arith.addf %254, %185 : vector<1x8xf32>
    %256 = arith.addf %255, %246 : vector<1x8xf32>
    %cst_99 = arith.constant 2.500000e-01 : f32
    %257 = vector.broadcast %cst_99 : f32 to vector<1x8xf32>
    %258 = arith.mulf %256, %257 : vector<1x8xf32>
    %259 = arith.subf %63, %258 : vector<1x8xf32>
    %260 = arith.mulf %259, %259 : vector<1x8xf32>
    %261 = arith.subf %124, %258 : vector<1x8xf32>
    %262 = arith.mulf %261, %261 : vector<1x8xf32>
    %263 = arith.addf %260, %262 : vector<1x8xf32>
    %264 = arith.subf %185, %258 : vector<1x8xf32>
    %265 = arith.mulf %264, %264 : vector<1x8xf32>
    %266 = arith.addf %263, %265 : vector<1x8xf32>
    %267 = arith.subf %246, %258 : vector<1x8xf32>
    %268 = arith.mulf %267, %267 : vector<1x8xf32>
    %269 = arith.addf %266, %268 : vector<1x8xf32>
    %cst_100 = arith.constant 0.333333343 : f32
    %270 = vector.broadcast %cst_100 : f32 to vector<1x8xf32>
    %271 = arith.mulf %269, %270 : vector<1x8xf32>
    %cst_101 = arith.constant 9.648500e+01 : f32
    %272 = vector.broadcast %cst_101 : f32 to vector<1x8xf32>
    %273 = arith.mulf %258, %272 : vector<1x8xf32>
    %cst_102 = arith.constant dense<0.000000e+00> : vector<1xf32>
    %274 = vector.multi_reduction <add>, %271, %cst_102 [1] : vector<1x8xf32> to vector<1xf32>
    %275 = vector.shape_cast %274 : vector<1xf32> to vector<1x1xf32>
    %cst_103 = arith.constant 8.000000e+00 : f32
    %276 = vector.broadcast %cst_103 : f32 to vector<1x1xf32>
    %277 = arith.divf %275, %276 : vector<1x1xf32>
    %278 = math.sqrt %277 : vector<1x1xf32>
    %cst_104 = arith.constant 9.648500e+01 : f32
    %279 = vector.broadcast %cst_104 : f32 to vector<1x1xf32>
    %280 = arith.mulf %278, %279 : vector<1x1xf32>
    %cst_105 = arith.constant 3.000000e+00 : f32
    %281 = vector.broadcast %cst_105 : f32 to vector<1x1xf32>
    %282 = arith.subf %281, %280 : vector<1x1xf32>
    %cst_106 = arith.constant 1.000000e+00 : f32
    %283 = vector.broadcast %cst_106 : f32 to vector<1x1xf32>
    %284 = arith.divf %282, %283 : vector<1x1xf32>
    %285 = math.floor %284 : vector<1x1xf32>
    %cst_107 = arith.constant 1.000000e+00 : f32
    %286 = vector.broadcast %cst_107 : f32 to vector<1x1xf32>
    %287 = arith.subf %286, %284 : vector<1x1xf32>
    %cst_108 = arith.constant 3.14159274 : f32
    %288 = vector.broadcast %cst_108 : f32 to vector<1x1xf32>
    %289 = arith.mulf %288, %287 : vector<1x1xf32>
    %290 = math.cos %289 : vector<1x1xf32>
    %cst_109 = arith.constant 1.000000e+00 : f32
    %291 = vector.broadcast %cst_109 : f32 to vector<1x1xf32>
    %292 = arith.addf %291, %290 : vector<1x1xf32>
    %cst_110 = arith.constant 5.000000e-01 : f32
    %293 = vector.broadcast %cst_110 : f32 to vector<1x1xf32>
    %294 = arith.mulf %293, %292 : vector<1x1xf32>
    %cst_111 = arith.constant 0.000000e+00 : f32
    %295 = vector.broadcast %cst_111 : f32 to vector<1x1xf32>
    %296 = arith.cmpf olt, %285, %295 : vector<1x1xf32>
    %cst_112 = arith.constant 0.000000e+00 : f32
    %297 = vector.broadcast %cst_112 : f32 to vector<1x1xf32>
    %298 = arith.cmpf oeq, %285, %297 : vector<1x1xf32>
    %cst_113 = arith.constant 1.000000e+00 : f32
    %299 = vector.broadcast %cst_113 : f32 to vector<1x1xf32>
    %300 = arith.select %298, %294, %299 : vector<1x1xi1>, vector<1x1xf32>
    %cst_114 = arith.constant 0.000000e+00 : f32
    %301 = vector.broadcast %cst_114 : f32 to vector<1x1xf32>
    %302 = arith.select %296, %301, %300 : vector<1x1xi1>, vector<1x1xf32>
    %303 = tpu.iota {dimensions = array<i32: 1>} : vector<1x128xi32>
    %c0_i32 = arith.constant 0 : i32
    %304 = vector.broadcast %c0_i32 : i32 to vector<1x128xi32>
    %305 = arith.cmpi eq, %303, %304 : vector<1x128xi32>
    %306 = arith.mulf %253, %302 : vector<1x1xf32>
    %c1_i32 = arith.constant 1 : i32
    %307 = vector.broadcast %c1_i32 : i32 to vector<1x128xi32>
    %308 = arith.cmpi eq, %303, %307 : vector<1x128xi32>
    %cst_115 = arith.constant 0.000000e+00 : f32
    %309 = vector.shape_cast %302 : vector<1x1xf32> to vector<1x1xf32>
    %310 = vector.broadcast %309 : vector<1x1xf32> to vector<1x128xf32>
    %311 = vector.broadcast %cst_115 : f32 to vector<1x128xf32>
    %312 = arith.select %308, %310, %311 : vector<1x128xi1>, vector<1x128xf32>
    %313 = vector.shape_cast %306 : vector<1x1xf32> to vector<1x1xf32>
    %314 = vector.broadcast %313 : vector<1x1xf32> to vector<1x128xf32>
    %315 = arith.select %305, %314, %312 : vector<1x128xi1>, vector<1x128xf32>
    %c0_116 = arith.constant 0 : index
    %c0_117 = arith.constant 0 : index
    %316 = vector.load %arg3[%c0_116, %c0_117] : memref<2x128xf32, #tpu.memory_space<vmem>>, vector<1x128xf32>
    tpu.vector_store %arg3[%c0_116, %c0_117], %315 {strides = array<i32>} : memref<2x128xf32, #tpu.memory_space<vmem>>, vector<1x128xf32>,
    %cst_118 = arith.constant 0.000000e+00 : f32
    %317 = vector.broadcast %cst_118 : f32 to vector<1x128xf32>
    %c1_119 = arith.constant 1 : index
    %c0_120 = arith.constant 0 : index
    %318 = vector.load %arg3[%c1_119, %c0_120] : memref<2x128xf32, #tpu.memory_space<vmem>>, vector<1x128xf32>
    tpu.vector_store %arg3[%c1_119, %c0_120], %317 {strides = array<i32>} : memref<2x128xf32, #tpu.memory_space<vmem>>, vector<1x128xf32>,
    %319 = vector.broadcast %302 : vector<1x1xf32> to vector<1x8xf32>
    %320 = arith.mulf %273, %319 : vector<1x8xf32>
    %c1_121 = arith.constant 1 : index
    %c0_122 = arith.constant 0 : index
    %321 = vector.load %arg3[%c1_121, %c0_122] : memref<2x128xf32, #tpu.memory_space<vmem>>, vector<1x8xf32>
    tpu.vector_store %arg3[%c1_121, %c0_122], %320 {strides = array<i32>} : memref<2x128xf32, #tpu.memory_space<vmem>>, vector<1x8xf32>,
    return
  }
}

</mosaic_0001>

<llo_original>
// kernel: dihedral_bias_forward.1
$region0: #{dihedral_bias_forward.1}
  #allocation0 [shape = 'u32[]', space=smem, size = 0x4, offset = 0x4, fixed_abs, tag = 'smem constant byte address 0x4 - core index']
  #allocation1 [shape = 'u32[144,128]{1,0:T(1,128)}', space=vmem, size = 0x12000, scoped, tag = 'internal scratch']
  %s0 = inlined_call_operand.vmem [shape: f32[1,64], index: 0, kind: input, shape index: {}]
  %s1 = inlined_call_operand.vmem [shape: bf16[16,64,64], index: 1, kind: input, shape index: {}]
  %s2 = inlined_call_operand.vmem [shape: f32[4,8,64], index: 2, kind: input, shape index: {}]
  %s3 = inlined_call_operand.vmem [shape: f32[2,128], index: 3, kind: output, shape index: {}]
  %s4 = sld [smem:[#allocation0]]
  $region22: #{dihedral_bias_forward.1} parent=0
    _
  %s6 = ssub.s32 1, %s4
  %s7 = scalar_select 0, %s6, %s4
  // Predicated region
  $region2: #{dihedral_bias_forward.1} parent=0 // pred_check
    _
  $region3: #{dihedral_bias_forward.1} parent=0 // pred_check_branch
    %9 = sbr.rel (0) target = $region5
  $region4: #{dihedral_bias_forward.1} parent=0 // pred_region
    _
  $region5: #{dihedral_bias_forward.1} parent=0 // pred_fallthru
    _
  // Predicated region
  $region6: #{dihedral_bias_forward.1} parent=0 // pred_check
    _
  $region7: #{dihedral_bias_forward.1} parent=0 // pred_check_branch
    %11 = sbr.rel (0) target = $region9
  $region8: #{dihedral_bias_forward.1} parent=0 // pred_region
    _
  $region9: #{dihedral_bias_forward.1} parent=0 // pred_fallthru
    _
  // Predicated region
  $region10: #{dihedral_bias_forward.1} parent=0 // pred_check
    _
  $region11: #{dihedral_bias_forward.1} parent=0 // pred_check_branch
    %13 = sbr.rel (0) target = $region13
  $region12: #{dihedral_bias_forward.1} parent=0 // pred_region
    _
  $region13: #{dihedral_bias_forward.1} parent=0 // pred_fallthru
    _
  %v14 = vld [vmem:[%s0] sm:$0x1]
  %v15 = vld [vmem:[%s1] sm:$0xf]
  %v16 = vld [vmem:[%s1 + $0x4] sm:$0xf]
  %v17 = vld [vmem:[%s1 + $0x8] sm:$0xf]
  %v18 = vld [vmem:[%s1 + $0xc] sm:$0xf]
  %v19 = vld [vmem:[%s1 + $0x10] sm:$0xf]
  %v20 = vld [vmem:[%s1 + $0x14] sm:$0xf]
  %v21 = vld [vmem:[%s1 + $0x18] sm:$0xf]
  %v22 = vld [vmem:[%s1 + $0x1c] sm:$0xf]
  %v23 = vunpack.c.l.bf16 %v15
  %v24 = vunpack.c.l.bf16 %v16
  %v25 = vunpack.c.l.bf16 %v17
  %v26 = vunpack.c.l.bf16 %v18
  %v27 = vunpack.c.l.bf16 %v19
  %v28 = vunpack.c.l.bf16 %v20
  %v29 = vunpack.c.l.bf16 %v21
  %v30 = vunpack.c.l.bf16 %v22
  %s31 = scalar_lea.vmem %s1, 128
  %v32 = vld [vmem:[%s31] sm:$0xf]
  %v33 = vld [vmem:[%s31 + $0x4] sm:$0xf]
  %v34 = vld [vmem:[%s31 + $0x8] sm:$0xf]
  %v35 = vld [vmem:[%s31 + $0xc] sm:$0xf]
  %v36 = vld [vmem:[%s31 + $0x10] sm:$0xf]
  %v37 = vld [vmem:[%s31 + $0x14] sm:$0xf]
  %v38 = vld [vmem:[%s31 + $0x18] sm:$0xf]
  %v39 = vld [vmem:[%s31 + $0x1c] sm:$0xf]
  %v40 = vunpack.c.l.bf16 %v32
  %v41 = vunpack.c.l.bf16 %v33
  %v42 = vunpack.c.l.bf16 %v34
  %v43 = vunpack.c.l.bf16 %v35
  %v44 = vunpack.c.l.bf16 %v36
  %v45 = vunpack.c.l.bf16 %v37
  %v46 = vunpack.c.l.bf16 %v38
  %v47 = vunpack.c.l.bf16 %v39
  %s48 = scalar_lea.vmem %s1, 256
  %v49 = vld [vmem:[%s48] sm:$0xf]
  %v50 = vld [vmem:[%s48 + $0x4] sm:$0xf]
  %v51 = vld [vmem:[%s48 + $0x8] sm:$0xf]
  %v52 = vld [vmem:[%s48 + $0xc] sm:$0xf]
  %v53 = vld [vmem:[%s48 + $0x10] sm:$0xf]
  %v54 = vld [vmem:[%s48 + $0x14] sm:$0xf]
  %v55 = vld [vmem:[%s48 + $0x18] sm:$0xf]
  %v56 = vld [vmem:[%s48 + $0x1c] sm:$0xf]
  %v57 = vunpack.c.l.bf16 %v49
  %v58 = vunpack.c.l.bf16 %v50
  %v59 = vunpack.c.l.bf16 %v51
  %v60 = vunpack.c.l.bf16 %v52
  %v61 = vunpack.c.l.bf16 %v53
  %v62 = vunpack.c.l.bf16 %v54
  %v63 = vunpack.c.l.bf16 %v55
  %v64 = vunpack.c.l.bf16 %v56
  %s65 = scalar_lea.vmem %s1, 384
  %v66 = vld [vmem:[%s65] sm:$0xf]
  %v67 = vld [vmem:[%s65 + $0x4] sm:$0xf]
  %v68 = vld [vmem:[%s65 + $0x8] sm:$0xf]
  %v69 = vld [vmem:[%s65 + $0xc] sm:$0xf]
  %v70 = vld [vmem:[%s65 + $0x10] sm:$0xf]
  %v71 = vld [vmem:[%s65 + $0x14] sm:$0xf]
  %v72 = vld [vmem:[%s65 + $0x18] sm:$0xf]
  %v73 = vld [vmem:[%s65 + $0x1c] sm:$0xf]
  %v74 = vunpack.c.l.bf16 %v66
  %v75 = vunpack.c.l.bf16 %v67
  %v76 = vunpack.c.l.bf16 %v68
  %v77 = vunpack.c.l.bf16 %v69
  %v78 = vunpack.c.l.bf16 %v70
  %v79 = vunpack.c.l.bf16 %v71
  %v80 = vunpack.c.l.bf16 %v72
  %v81 = vunpack.c.l.bf16 %v73
  %v82 = vld [vmem:[%s2] sm:$0xff]
  %vm83 = vcmask 523264
  %v85 = vsel %vm83, %v14, 0
  %87 = vmatprep.subr.mxu0 0.0
  %88 = vmatpush1.msra.mxu0 %v23
  %89 = vmatprep.subr.mxu0 0.0
  %90 = vmatpush1.msra.mxu0 %v24
  %91 = vmatprep.subr.mxu0 0.0
  %92 = vmatpush1.msra.mxu0 %v25
  %93 = vmatprep.subr.mxu0 0.0
  %94 = vmatpush1.msra.mxu0 %v26
  %95 = vmatprep.subr.mxu0 0.0
  %96 = vmatpush1.msra.mxu0 %v27
  %97 = vmatprep.subr.mxu0 0.0
  %98 = vmatpush1.msra.mxu0 %v28
  %99 = vmatprep.subr.mxu0 0.0
  %100 = vmatpush1.msra.mxu0 %v29
  %101 = vmatprep.subr.mxu0 0.0
  %102 = vmatpush1.msra.mxu0 %v30
  %103 = vmatprep.subr.mxu0 0.0
  %104 = vmatpush1.msra.mxu0 0.0
  %105 = vmatprep.subr.mxu0 0.0
  %106 = vmatpush1.msra.mxu0 0.0
  %107 = vmatprep.subr.mxu0 0.0
  %108 = vmatpush1.msra.mxu0 0.0
  %109 = vmatprep.subr.mxu0 0.0
  %110 = vmatpush1.msra.mxu0 0.0
  %111 = vmatprep.subr.mxu0 0.0
  %112 = vmatpush1.msra.mxu0 0.0
  %113 = vmatprep.subr.mxu0 0.0
  %114 = vmatpush1.msra.mxu0 0.0
  %115 = vmatprep.subr.mxu0 0.0
  %116 = vmatpush1.msra.mxu0 0.0
  %117 = vmatprep.subr.mxu0 0.0
  %118 = vmatpush1.msra.mxu0 0.0
  %119 = vmatprep.subr.mxu0 0.0
  %120 = vmatpush1.msra.mxu0 0.0
  %121 = vmatprep.subr.mxu0 0.0
  %122 = vmatpush1.msra.mxu0 0.0
  %123 = vmatprep.subr.mxu0 0.0
  %124 = vmatpush1.msra.mxu0 0.0
  %125 = vmatprep.subr.mxu0 0.0
  %126 = vmatpush1.msra.mxu0 0.0
  %127 = vmatprep.subr.mxu0 0.0
  %128 = vmatpush1.msra.mxu0 0.0
  %129 = vmatprep.subr.mxu0 0.0
  %130 = vmatpush1.msra.mxu0 0.0
  %131 = vmatprep.subr.mxu0 0.0
  %132 = vmatpush1.msra.mxu0 0.0
  %133 = vmatprep.subr.mxu0 0.0
  %134 = vmatpush1.msra.mxu0 0.0
  %135 = vmatprep.subr.mxu0 0.0
  %136 = vmatpush1.msra.mxu0 0.0
  %137 = vmatprep.subr.mxu0 0.0
  %138 = vmatpush1.msra.mxu0 0.0
  %139 = vmatprep.subr.mxu0 0.0
  %140 = vmatpush1.msra.mxu0 0.0
  %141 = vmatprep.subr.mxu0 0.0
  %142 = vmatpush1.msra.mxu0 0.0
  %143 = vmatprep.subr.mxu0 0.0
  %144 = vmatpush1.msra.mxu0 0.0
  %145 = vmatprep.subr.mxu0 0.0
  %146 = vmatpush1.msra.mxu0 0.0
  %147 = vmatprep.subr.mxu0 0.0
  %148 = vmatpush1.msra.mxu0 0.0
  %149 = vmatprep.subr.mxu0 0.0
  %150 = vmatpush1.msra.mxu0 0.0
  %151 = vmatprep.mubr.f32.mxu0 0.0
  %152 = vmatmul.mubr.f32.gmra.mrb[0].mxu0 %v85
  %v153 = vpop.f32.mrb[0].mxu0
  %v154 = vadd.f32 %v82, %v153
  %v155 = vpop.f32.mrb[0].mxu0
  %156 = vdwg.mxu0
  %v157 = vtanh.pop %v154
  %v159 = vrot.slane %v82, 1
  %v162 = vsel %vm83, %v157, 0
  %164 = vmatprep.subr.mxu0 0.0
  %165 = vmatpush1.msra.mxu0 %v40
  %166 = vmatprep.subr.mxu0 0.0
  %167 = vmatpush1.msra.mxu0 %v41
  %168 = vmatprep.subr.mxu0 0.0
  %169 = vmatpush1.msra.mxu0 %v42
  %170 = vmatprep.subr.mxu0 0.0
  %171 = vmatpush1.msra.mxu0 %v43
  %172 = vmatprep.subr.mxu0 0.0
  %173 = vmatpush1.msra.mxu0 %v44
  %174 = vmatprep.subr.mxu0 0.0
  %175 = vmatpush1.msra.mxu0 %v45
  %176 = vmatprep.subr.mxu0 0.0
  %177 = vmatpush1.msra.mxu0 %v46
  %178 = vmatprep.subr.mxu0 0.0
  %179 = vmatpush1.msra.mxu0 %v47
  %180 = vmatprep.subr.mxu0 0.0
  %181 = vmatpush1.msra.mxu0 0.0
  %182 = vmatprep.subr.mxu0 0.0
  %183 = vmatpush1.msra.mxu0 0.0
  %184 = vmatprep.subr.mxu0 0.0
  %185 = vmatpush1.msra.mxu0 0.0
  %186 = vmatprep.subr.mxu0 0.0
  %187 = vmatpush1.msra.mxu0 0.0
  %188 = vmatprep.subr.mxu0 0.0
  %189 = vmatpush1.msra.mxu0 0.0
  %190 = vmatprep.subr.mxu0 0.0
  %191 = vmatpush1.msra.mxu0 0.0
  %192 = vmatprep.subr.mxu0 0.0
  %193 = vmatpush1.msra.mxu0 0.0
  %194 = vmatprep.subr.mxu0 0.0
  %195 = vmatpush1.msra.mxu0 0.0
  %196 = vmatprep.subr.mxu0 0.0
  %197 = vmatpush1.msra.mxu0 0.0
  %198 = vmatprep.subr.mxu0 0.0
  %199 = vmatpush1.msra.mxu0 0.0
  %200 = vmatprep.subr.mxu0 0.0
  %201 = vmatpush1.msra.mxu0 0.0
  %202 = vmatprep.subr.mxu0 0.0
  %203 = vmatpush1.msra.mxu0 0.0
  %204 = vmatprep.subr.mxu0 0.0
  %205 = vmatpush1.msra.mxu0 0.0
  %206 = vmatprep.subr.mxu0 0.0
  %207 = vmatpush1.msra.mxu0 0.0
  %208 = vmatprep.subr.mxu0 0.0
  %209 = vmatpush1.msra.mxu0 0.0
  %210 = vmatprep.subr.mxu0 0.0
  %211 = vmatpush1.msra.mxu0 0.0
  %212 = vmatprep.subr.mxu0 0.0
  %213 = vmatpush1.msra.mxu0 0.0
  %214 = vmatprep.subr.mxu0 0.0
  %215 = vmatpush1.msra.mxu0 0.0
  %216 = vmatprep.subr.mxu0 0.0
  %217 = vmatpush1.msra.mxu0 0.0
  %218 = vmatprep.subr.mxu0 0.0
  %219 = vmatpush1.msra.mxu0 0.0
  %220 = vmatprep.subr.mxu0 0.0
  %221 = vmatpush1.msra.mxu0 0.0
  %222 = vmatprep.subr.mxu0 0.0
  %223 = vmatpush1.msra.mxu0 0.0
  %224 = vmatprep.subr.mxu0 0.0
  %225 = vmatpush1.msra.mxu0 0.0
  %226 = vmatprep.subr.mxu0 0.0
  %227 = vmatpush1.msra.mxu0 0.0
  %228 = vmatprep.mubr.f32.mxu0 0.0
  %229 = vmatmul.mubr.f32.gmra.mrb[0].mxu0 %v162
  %v230 = vpop.f32.mrb[0].mxu0
  %v231 = vadd.f32 %v159, %v230
  %v232 = vpop.f32.mrb[0].mxu0
  %233 = vdwg.mxu0
  %v234 = vtanh.pop %v231
  %v235 = vrot.slane %v82, 2
  %v238 = vsel %vm83, %v234, 0
  %240 = vmatprep.subr.mxu0 0.0
  %241 = vmatpush1.msra.mxu0 %v57
  %242 = vmatprep.subr.mxu0 0.0
  %243 = vmatpush1.msra.mxu0 %v58
  %244 = vmatprep.subr.mxu0 0.0
  %245 = vmatpush1.msra.mxu0 %v59
  %246 = vmatprep.subr.mxu0 0.0
  %247 = vmatpush1.msra.mxu0 %v60
  %248 = vmatprep.subr.mxu0 0.0
  %249 = vmatpush1.msra.mxu0 %v61
  %250 = vmatprep.subr.mxu0 0.0
  %251 = vmatpush1.msra.mxu0 %v62
  %252 = vmatprep.subr.mxu0 0.0
  %253 = vmatpush1.msra.mxu0 %v63
  %254 = vmatprep.subr.mxu0 0.0
  %255 = vmatpush1.msra.mxu0 %v64
  %256 = vmatprep.subr.mxu0 0.0
  %257 = vmatpush1.msra.mxu0 0.0
  %258 = vmatprep.subr.mxu0 0.0
  %259 = vmatpush1.msra.mxu0 0.0
  %260 = vmatprep.subr.mxu0 0.0
  %261 = vmatpush1.msra.mxu0 0.0
  %262 = vmatprep.subr.mxu0 0.0
  %263 = vmatpush1.msra.mxu0 0.0
  %264 = vmatprep.subr.mxu0 0.0
  %265 = vmatpush1.msra.mxu0 0.0
  %266 = vmatprep.subr.mxu0 0.0
  %267 = vmatpush1.msra.mxu0 0.0
  %268 = vmatprep.subr.mxu0 0.0
  %269 = vmatpush1.msra.mxu0 0.0
  %270 = vmatprep.subr.mxu0 0.0
  %271 = vmatpush1.msra.mxu0 0.0
  %272 = vmatprep.subr.mxu0 0.0
  %273 = vmatpush1.msra.mxu0 0.0
  %274 = vmatprep.subr.mxu0 0.0
  %275 = vmatpush1.msra.mxu0 0.0
  %276 = vmatprep.subr.mxu0 0.0
  %277 = vmatpush1.msra.mxu0 0.0
  %278 = vmatprep.subr.mxu0 0.0
  %279 = vmatpush1.msra.mxu0 0.0
  %280 = vmatprep.subr.mxu0 0.0
  %281 = vmatpush1.msra.mxu0 0.0
  %282 = vmatprep.subr.mxu0 0.0
  %283 = vmatpush1.msra.mxu0 0.0
  %284 = vmatprep.subr.mxu0 0.0
  %285 = vmatpush1.msra.mxu0 0.0
  %286 = vmatprep.subr.mxu0 0.0
  %287 = vmatpush1.msra.mxu0 0.0
  %288 = vmatprep.subr.mxu0 0.0
  %289 = vmatpush1.msra.mxu0 0.0
  %290 = vmatprep.subr.mxu0 0.0
  %291 = vmatpush1.msra.mxu0 0.0
  %292 = vmatprep.subr.mxu0 0.0
  %293 = vmatpush1.msra.mxu0 0.0
  %294 = vmatprep.subr.mxu0 0.0
  %295 = vmatpush1.msra.mxu0 0.0
  %296 = vmatprep.subr.mxu0 0.0
  %297 = vmatpush1.msra.mxu0 0.0
  %298 = vmatprep.subr.mxu0 0.0
  %299 = vmatpush1.msra.mxu0 0.0
  %300 = vmatprep.subr.mxu0 0.0
  %301 = vmatpush1.msra.mxu0 0.0
  %302 = vmatprep.subr.mxu0 0.0
  %303 = vmatpush1.msra.mxu0 0.0
  %304 = vmatprep.mubr.f32.mxu0 0.0
  %305 = vmatmul.mubr.f32.gmra.mrb[0].mxu0 %v238
  %v306 = vpop.f32.mrb[0].mxu0
  %v307 = vadd.f32 %v235, %v306
  %v308 = vpop.f32.mrb[0].mxu0
  %309 = vdwg.mxu0
  %v310 = vtanh.pop %v307
  %v311 = vrot.slane %v82, 3
  %v314 = vsel %vm83, %v310, 0
  %316 = vmatprep.subr.mxu0 0.0
  %317 = vmatpush1.msra.mxu0 %v74
  %318 = vmatprep.subr.mxu0 0.0
  %319 = vmatpush1.msra.mxu0 %v75
  %320 = vmatprep.subr.mxu0 0.0
  %321 = vmatpush1.msra.mxu0 %v76
  %322 = vmatprep.subr.mxu0 0.0
  %323 = vmatpush1.msra.mxu0 %v77
  %324 = vmatprep.subr.mxu0 0.0
  %325 = vmatpush1.msra.mxu0 %v78
  %326 = vmatprep.subr.mxu0 0.0
  %327 = vmatpush1.msra.mxu0 %v79
  %328 = vmatprep.subr.mxu0 0.0
  %329 = vmatpush1.msra.mxu0 %v80
  %330 = vmatprep.subr.mxu0 0.0
  %331 = vmatpush1.msra.mxu0 %v81
  %332 = vmatprep.subr.mxu0 0.0
  %333 = vmatpush1.msra.mxu0 0.0
  %334 = vmatprep.subr.mxu0 0.0
  %335 = vmatpush1.msra.mxu0 0.0
  %336 = vmatprep.subr.mxu0 0.0
  %337 = vmatpush1.msra.mxu0 0.0
  %338 = vmatprep.subr.mxu0 0.0
  %339 = vmatpush1.msra.mxu0 0.0
  %340 = vmatprep.subr.mxu0 0.0
  %341 = vmatpush1.msra.mxu0 0.0
  %342 = vmatprep.subr.mxu0 0.0
  %343 = vmatpush1.msra.mxu0 0.0
  %344 = vmatprep.subr.mxu0 0.0
  %345 = vmatpush1.msra.mxu0 0.0
  %346 = vmatprep.subr.mxu0 0.0
  %347 = vmatpush1.msra.mxu0 0.0
  %348 = vmatprep.subr.mxu0 0.0
  %349 = vmatpush1.msra.mxu0 0.0
  %350 = vmatprep.subr.mxu0 0.0
  %351 = vmatpush1.msra.mxu0 0.0
  %352 = vmatprep.subr.mxu0 0.0
  %353 = vmatpush1.msra.mxu0 0.0
  %354 = vmatprep.subr.mxu0 0.0
  %355 = vmatpush1.msra.mxu0 0.0
  %356 = vmatprep.subr.mxu0 0.0
  %357 = vmatpush1.msra.mxu0 0.0
  %358 = vmatprep.subr.mxu0 0.0
  %359 = vmatpush1.msra.mxu0 0.0
  %360 = vmatprep.subr.mxu0 0.0
  %361 = vmatpush1.msra.mxu0 0.0
  %362 = vmatprep.subr.mxu0 0.0
  %363 = vmatpush1.msra.mxu0 0.0
  %364 = vmatprep.subr.mxu0 0.0
  %365 = vmatpush1.msra.mxu0 0.0
  %366 = vmatprep.subr.mxu0 0.0
  %367 = vmatpush1.msra.mxu0 0.0
  %368 = vmatprep.subr.mxu0 0.0
  %369 = vmatpush1.msra.mxu0 0.0
  %370 = vmatprep.subr.mxu0 0.0
  %371 = vmatpush1.msra.mxu0 0.0
  %372 = vmatprep.subr.mxu0 0.0
  %373 = vmatpush1.msra.mxu0 0.0
  %374 = vmatprep.subr.mxu0 0.0
  %375 = vmatpush1.msra.mxu0 0.0
  %376 = vmatprep.subr.mxu0 0.0
  %377 = vmatpush1.msra.mxu0 0.0
  %378 = vmatprep.subr.mxu0 0.0
  %379 = vmatpush1.msra.mxu0 0.0
  %380 = vmatprep.mubr.f32.mxu0 0.0
  %381 = vmatmul.mubr.f32.gmra.mrb[0].mxu0 %v314
  %v382 = vpop.f32.mrb[0].mxu0
  %v383 = vadd.f32 %v311, %v382
  %v384 = vpop.f32.mrb[0].mxu0
  %385 = vdwg.mxu0
  %v386 = vtanh.pop %v383
  %v387 = vrot.slane %v82, 4
  %v389 = vmul.f32 %v386, %v387
  %vm390 = vcmask 516096
  %v391 = vsel %vm390, %v389, 0.0
  %392 = vadd.xlane.f32.xlu0 %v391
  %v393 = vpop.xlane.xlu0 %392
  %v394 = vrot.slane %v82, 5
  %v396 = vadd.f32 %v393, %v394
  %v397 = vmul.f32 %v386, %v386
  %v398 = vsub.f32 1.0, %v397
  %v400 = vrot.slane %v398, 4
  %v402 = vmul.f32 %v82, %v400
  %v404 = vrot.slane %v402, 4
  %v405 = vsel %vm83, %v404, 0
  %v408 = vsel %vm83, %v74, 0
  %v411 = vsel %vm83, %v75, 0
  %v414 = vsel %vm83, %v76, 0
  %v417 = vsel %vm83, %v77, 0
  %v420 = vsel %vm83, %v78, 0
  %v423 = vsel %vm83, %v79, 0
  %v426 = vsel %vm83, %v80, 0
  %v429 = vsel %vm83, %v81, 0
  %431 = vmatprep.subr.mxu0 0.0
  %432 = vmatpush1.xpose.msra.mxu0 %v408
  %433 = vmatprep.subr.mxu0 0.0
  %434 = vmatpush1.xpose.msra.mxu0 %v411
  %435 = vmatprep.subr.mxu0 0.0
  %436 = vmatpush1.xpose.msra.mxu0 %v414
  %437 = vmatprep.subr.mxu0 0.0
  %438 = vmatpush1.xpose.msra.mxu0 %v417
  %439 = vmatprep.subr.mxu0 0.0
  %440 = vmatpush1.xpose.msra.mxu0 %v420
  %441 = vmatprep.subr.mxu0 0.0
  %442 = vmatpush1.xpose.msra.mxu0 %v423
  %443 = vmatprep.subr.mxu0 0.0
  %444 = vmatpush1.xpose.msra.mxu0 %v426
  %445 = vmatprep.subr.mxu0 0.0
  %446 = vmatpush1.xpose.msra.mxu0 %v429
  %447 = vmatprep.subr.mxu0 0.0
  %448 = vmatpush1.xpose.msra.mxu0 0.0
  %449 = vmatprep.subr.mxu0 0.0
  %450 = vmatpush1.xpose.msra.mxu0 0.0
  %451 = vmatprep.subr.mxu0 0.0
  %452 = vmatpush1.xpose.msra.mxu0 0.0
  %453 = vmatprep.subr.mxu0 0.0
  %454 = vmatpush1.xpose.msra.mxu0 0.0
  %455 = vmatprep.subr.mxu0 0.0
  %456 = vmatpush1.xpose.msra.mxu0 0.0
  %457 = vmatprep.subr.mxu0 0.0
  %458 = vmatpush1.xpose.msra.mxu0 0.0
  %459 = vmatprep.subr.mxu0 0.0
  %460 = vmatpush1.xpose.msra.mxu0 0.0
  %461 = vmatprep.subr.mxu0 0.0
  %462 = vmatpush1.xpose.msra.mxu0 0.0
  %463 = vmatprep.subr.mxu0 0.0
  %464 = vmatpush1.xpose.msra.mxu0 0.0
  %465 = vmatprep.subr.mxu0 0.0
  %466 = vmatpush1.xpose.msra.mxu0 0.0
  %467 = vmatprep.subr.mxu0 0.0
  %468 = vmatpush1.xpose.msra.mxu0 0.0
  %469 = vmatprep.subr.mxu0 0.0
  %470 = vmatpush1.xpose.msra.mxu0 0.0
  %471 = vmatprep.subr.mxu0 0.0
  %472 = vmatpush1.xpose.msra.mxu0 0.0
  %473 = vmatprep.subr.mxu0 0.0
  %474 = vmatpush1.xpose.msra.mxu0 0.0
  %475 = vmatprep.subr.mxu0 0.0
  %476 = vmatpush1.xpose.msra.mxu0 0.0
  %477 = vmatprep.subr.mxu0 0.0
  %478 = vmatpush1.xpose.msra.mxu0 0.0
  %479 = vmatprep.subr.mxu0 0.0
  %480 = vmatpush1.xpose.msra.mxu0 0.0
  %481 = vmatprep.subr.mxu0 0.0
  %482 = vmatpush1.xpose.msra.mxu0 0.0
  %483 = vmatprep.subr.mxu0 0.0
  %484 = vmatpush1.xpose.msra.mxu0 0.0
  %485 = vmatprep.subr.mxu0 0.0
  %486 = vmatpush1.xpose.msra.mxu0 0.0
  %487 = vmatprep.subr.mxu0 0.0
  %488 = vmatpush1.xpose.msra.mxu0 0.0
  %489 = vmatprep.subr.mxu0 0.0
  %490 = vmatpush1.xpose.msra.mxu0 0.0
  %491 = vmatprep.subr.mxu0 0.0
  %492 = vmatpush1.xpose.msra.mxu0 0.0
  %493 = vmatprep.subr.mxu0 0.0
  %494 = vmatpush1.xpose.msra.mxu0 0.0
  %495 = vmatprep.mubr.f32.mxu0 0.0
  %496 = vmatmul.mubr.f32.gmra.mrb[0].mxu0 %v405
  %v497 = vpop.f32.mrb[0].mxu0
  %v498 = vadd.f32 0.0, %v497
  %v499 = vpop.f32.mrb[0].mxu0
  %500 = vdwg.mxu0
  %v501 = vmul.f32 %v310, %v310
  %v502 = vsub.f32 1.0, %v501
  %v503 = vmul.f32 %v498, %v502
  %v505 = vsel %vm83, %v503, 0
  %v508 = vsel %vm83, %v57, 0
  %v511 = vsel %vm83, %v58, 0
  %v514 = vsel %vm83, %v59, 0
  %v517 = vsel %vm83, %v60, 0
  %v520 = vsel %vm83, %v61, 0
  %v523 = vsel %vm83, %v62, 0
  %v526 = vsel %vm83, %v63, 0
  %v529 = vsel %vm83, %v64, 0
  %531 = vmatprep.subr.mxu0 0.0
  %532 = vmatpush1.xpose.msra.mxu0 %v508
  %533 = vmatprep.subr.mxu0 0.0
  %534 = vmatpush1.xpose.msra.mxu0 %v511
  %535 = vmatprep.subr.mxu0 0.0
  %536 = vmatpush1.xpose.msra.mxu0 %v514
  %537 = vmatprep.subr.mxu0 0.0
  %538 = vmatpush1.xpose.msra.mxu0 %v517
  %539 = vmatprep.subr.mxu0 0.0
  %540 = vmatpush1.xpose.msra.mxu0 %v520
  %541 = vmatprep.subr.mxu0 0.0
  %542 = vmatpush1.xpose.msra.mxu0 %v523
  %543 = vmatprep.subr.mxu0 0.0
  %544 = vmatpush1.xpose.msra.mxu0 %v526
  %545 = vmatprep.subr.mxu0 0.0
  %546 = vmatpush1.xpose.msra.mxu0 %v529
  %547 = vmatprep.subr.mxu0 0.0
  %548 = vmatpush1.xpose.msra.mxu0 0.0
  %549 = vmatprep.subr.mxu0 0.0
  %550 = vmatpush1.xpose.msra.mxu0 0.0
  %551 = vmatprep.subr.mxu0 0.0
  %552 = vmatpush1.xpose.msra.mxu0 0.0
  %553 = vmatprep.subr.mxu0 0.0
  %554 = vmatpush1.xpose.msra.mxu0 0.0
  %555 = vmatprep.subr.mxu0 0.0
  %556 = vmatpush1.xpose.msra.mxu0 0.0
  %557 = vmatprep.subr.mxu0 0.0
  %558 = vmatpush1.xpose.msra.mxu0 0.0
  %559 = vmatprep.subr.mxu0 0.0
  %560 = vmatpush1.xpose.msra.mxu0 0.0
  %561 = vmatprep.subr.mxu0 0.0
  %562 = vmatpush1.xpose.msra.mxu0 0.0
  %563 = vmatprep.subr.mxu0 0.0
  %564 = vmatpush1.xpose.msra.mxu0 0.0
  %565 = vmatprep.subr.mxu0 0.0
  %566 = vmatpush1.xpose.msra.mxu0 0.0
  %567 = vmatprep.subr.mxu0 0.0
  %568 = vmatpush1.xpose.msra.mxu0 0.0
  %569 = vmatprep.subr.mxu0 0.0
  %570 = vmatpush1.xpose.msra.mxu0 0.0
  %571 = vmatprep.subr.mxu0 0.0
  %572 = vmatpush1.xpose.msra.mxu0 0.0
  %573 = vmatprep.subr.mxu0 0.0
  %574 = vmatpush1.xpose.msra.mxu0 0.0
  %575 = vmatprep.subr.mxu0 0.0
  %576 = vmatpush1.xpose.msra.mxu0 0.0
  %577 = vmatprep.subr.mxu0 0.0
  %578 = vmatpush1.xpose.msra.mxu0 0.0
  %579 = vmatprep.subr.mxu0 0.0
  %580 = vmatpush1.xpose.msra.mxu0 0.0
  %581 = vmatprep.subr.mxu0 0.0
  %582 = vmatpush1.xpose.msra.mxu0 0.0
  %583 = vmatprep.subr.mxu0 0.0
  %584 = vmatpush1.xpose.msra.mxu0 0.0
  %585 = vmatprep.subr.mxu0 0.0
  %586 = vmatpush1.xpose.msra.mxu0 0.0
  %587 = vmatprep.subr.mxu0 0.0
  %588 = vmatpush1.xpose.msra.mxu0 0.0
  %589 = vmatprep.subr.mxu0 0.0
  %590 = vmatpush1.xpose.msra.mxu0 0.0
  %591 = vmatprep.subr.mxu0 0.0
  %592 = vmatpush1.xpose.msra.mxu0 0.0
  %593 = vmatprep.subr.mxu0 0.0
  %594 = vmatpush1.xpose.msra.mxu0 0.0
  %595 = vmatprep.mubr.f32.mxu0 0.0
  %596 = vmatmul.mubr.f32.gmra.mrb[0].mxu0 %v505
  %v597 = vpop.f32.mrb[0].mxu0
  %v598 = vadd.f32 0.0, %v597
  %v599 = vpop.f32.mrb[0].mxu0
  %600 = vdwg.mxu0
  %v601 = vmul.f32 %v234, %v234
  %v602 = vsub.f32 1.0, %v601
  %v603 = vmul.f32 %v598, %v602
  %v605 = vsel %vm83, %v603, 0
  %v608 = vsel %vm83, %v40, 0
  %v611 = vsel %vm83, %v41, 0
  %v614 = vsel %vm83, %v42, 0
  %v617 = vsel %vm83, %v43, 0
  %v620 = vsel %vm83, %v44, 0
  %v623 = vsel %vm83, %v45, 0
  %v626 = vsel %vm83, %v46, 0
  %v629 = vsel %vm83, %v47, 0
  %631 = vmatprep.subr.mxu0 0.0
  %632 = vmatpush1.xpose.msra.mxu0 %v608
  %633 = vmatprep.subr.mxu0 0.0
  %634 = vmatpush1.xpose.msra.mxu0 %v611
  %635 = vmatprep.subr.mxu0 0.0
  %636 = vmatpush1.xpose.msra.mxu0 %v614
  %637 = vmatprep.subr.mxu0 0.0
  %638 = vmatpush1.xpose.msra.mxu0 %v617
  %639 = vmatprep.subr.mxu0 0.0
  %640 = vmatpush1.xpose.msra.mxu0 %v620
  %641 = vmatprep.subr.mxu0 0.0
  %642 = vmatpush1.xpose.msra.mxu0 %v623
  %643 = vmatprep.subr.mxu0 0.0
  %644 = vmatpush1.xpose.msra.mxu0 %v626
  %645 = vmatprep.subr.mxu0 0.0
  %646 = vmatpush1.xpose.msra.mxu0 %v629
  %647 = vmatprep.subr.mxu0 0.0
  %648 = vmatpush1.xpose.msra.mxu0 0.0
  %649 = vmatprep.subr.mxu0 0.0
  %650 = vmatpush1.xpose.msra.mxu0 0.0
  %651 = vmatprep.subr.mxu0 0.0
  %652 = vmatpush1.xpose.msra.mxu0 0.0
  %653 = vmatprep.subr.mxu0 0.0
  %654 = vmatpush1.xpose.msra.mxu0 0.0
  %655 = vmatprep.subr.mxu0 0.0
  %656 = vmatpush1.xpose.msra.mxu0 0.0
  %657 = vmatprep.subr.mxu0 0.0
  %658 = vmatpush1.xpose.msra.mxu0 0.0
  %659 = vmatprep.subr.mxu0 0.0
  %660 = vmatpush1.xpose.msra.mxu0 0.0
  %661 = vmatprep.subr.mxu0 0.0
  %662 = vmatpush1.xpose.msra.mxu0 0.0
  %663 = vmatprep.subr.mxu0 0.0
  %664 = vmatpush1.xpose.msra.mxu0 0.0
  %665 = vmatprep.subr.mxu0 0.0
  %666 = vmatpush1.xpose.msra.mxu0 0.0
  %667 = vmatprep.subr.mxu0 0.0
  %668 = vmatpush1.xpose.msra.mxu0 0.0
  %669 = vmatprep.subr.mxu0 0.0
  %670 = vmatpush1.xpose.msra.mxu0 0.0
  %671 = vmatprep.subr.mxu0 0.0
  %672 = vmatpush1.xpose.msra.mxu0 0.0
  %673 = vmatprep.subr.mxu0 0.0
  %674 = vmatpush1.xpose.msra.mxu0 0.0
  %675 = vmatprep.subr.mxu0 0.0
  %676 = vmatpush1.xpose.msra.mxu0 0.0
  %677 = vmatprep.subr.mxu0 0.0
  %678 = vmatpush1.xpose.msra.mxu0 0.0
  %679 = vmatprep.subr.mxu0 0.0
  %680 = vmatpush1.xpose.msra.mxu0 0.0
  %681 = vmatprep.subr.mxu0 0.0
  %682 = vmatpush1.xpose.msra.mxu0 0.0
  %683 = vmatprep.subr.mxu0 0.0
  %684 = vmatpush1.xpose.msra.mxu0 0.0
  %685 = vmatprep.subr.mxu0 0.0
  %686 = vmatpush1.xpose.msra.mxu0 0.0
  %687 = vmatprep.subr.mxu0 0.0
  %688 = vmatpush1.xpose.msra.mxu0 0.0
  %689 = vmatprep.subr.mxu0 0.0
  %690 = vmatpush1.xpose.msra.mxu0 0.0
  %691 = vmatprep.subr.mxu0 0.0
  %692 = vmatpush1.xpose.msra.mxu0 0.0
  %693 = vmatprep.subr.mxu0 0.0
  %694 = vmatpush1.xpose.msra.mxu0 0.0
  %695 = vmatprep.mubr.f32.mxu0 0.0
  %696 = vmatmul.mubr.f32.gmra.mrb[0].mxu0 %v605
  %v697 = vpop.f32.mrb[0].mxu0
  %v698 = vadd.f32 0.0, %v697
  %v699 = vpop.f32.mrb[0].mxu0
  %700 = vdwg.mxu0
  %v701 = vmul.f32 %v157, %v157
  %v702 = vsub.f32 1.0, %v701
  %v703 = vmul.f32 %v698, %v702
  %v705 = vsel %vm83, %v703, 0
  %v708 = vsel %vm83, %v23, 0
  %v711 = vsel %vm83, %v24, 0
  %v714 = vsel %vm83, %v25, 0
  %v717 = vsel %vm83, %v26, 0
  %v720 = vsel %vm83, %v27, 0
  %v723 = vsel %vm83, %v28, 0
  %v726 = vsel %vm83, %v29, 0
  %v729 = vsel %vm83, %v30, 0
  %731 = vmatprep.subr.mxu0 0.0
  %732 = vmatpush1.xpose.msra.mxu0 %v708
  %733 = vmatprep.subr.mxu0 0.0
  %734 = vmatpush1.xpose.msra.mxu0 %v711
  %735 = vmatprep.subr.mxu0 0.0
  %736 = vmatpush1.xpose.msra.mxu0 %v714
  %737 = vmatprep.subr.mxu0 0.0
  %738 = vmatpush1.xpose.msra.mxu0 %v717
  %739 = vmatprep.subr.mxu0 0.0
  %740 = vmatpush1.xpose.msra.mxu0 %v720
  %741 = vmatprep.subr.mxu0 0.0
  %742 = vmatpush1.xpose.msra.mxu0 %v723
  %743 = vmatprep.subr.mxu0 0.0
  %744 = vmatpush1.xpose.msra.mxu0 %v726
  %745 = vmatprep.subr.mxu0 0.0
  %746 = vmatpush1.xpose.msra.mxu0 %v729
  %747 = vmatprep.subr.mxu0 0.0
  %748 = vmatpush1.xpose.msra.mxu0 0.0
  %749 = vmatprep.subr.mxu0 0.0
  %750 = vmatpush1.xpose.msra.mxu0 0.0
  %751 = vmatprep.subr.mxu0 0.0
  %752 = vmatpush1.xpose.msra.mxu0 0.0
  %753 = vmatprep.subr.mxu0 0.0
  %754 = vmatpush1.xpose.msra.mxu0 0.0
  %755 = vmatprep.subr.mxu0 0.0
  %756 = vmatpush1.xpose.msra.mxu0 0.0
  %757 = vmatprep.subr.mxu0 0.0
  %758 = vmatpush1.xpose.msra.mxu0 0.0
  %759 = vmatprep.subr.mxu0 0.0
  %760 = vmatpush1.xpose.msra.mxu0 0.0
  %761 = vmatprep.subr.mxu0 0.0
  %762 = vmatpush1.xpose.msra.mxu0 0.0
  %763 = vmatprep.subr.mxu0 0.0
  %764 = vmatpush1.xpose.msra.mxu0 0.0
  %765 = vmatprep.subr.mxu0 0.0
  %766 = vmatpush1.xpose.msra.mxu0 0.0
  %767 = vmatprep.subr.mxu0 0.0
  %768 = vmatpush1.xpose.msra.mxu0 0.0
  %769 = vmatprep.subr.mxu0 0.0
  %770 = vmatpush1.xpose.msra.mxu0 0.0
  %771 = vmatprep.subr.mxu0 0.0
  %772 = vmatpush1.xpose.msra.mxu0 0.0
  %773 = vmatprep.subr.mxu0 0.0
  %774 = vmatpush1.xpose.msra.mxu0 0.0
  %775 = vmatprep.subr.mxu0 0.0
  %776 = vmatpush1.xpose.msra.mxu0 0.0
  %777 = vmatprep.subr.mxu0 0.0
  %778 = vmatpush1.xpose.msra.mxu0 0.0
  %779 = vmatprep.subr.mxu0 0.0
  %780 = vmatpush1.xpose.msra.mxu0 0.0
  %781 = vmatprep.subr.mxu0 0.0
  %782 = vmatpush1.xpose.msra.mxu0 0.0
  %783 = vmatprep.subr.mxu0 0.0
  %784 = vmatpush1.xpose.msra.mxu0 0.0
  %785 = vmatprep.subr.mxu0 0.0
  %786 = vmatpush1.xpose.msra.mxu0 0.0
  %787 = vmatprep.subr.mxu0 0.0
  %788 = vmatpush1.xpose.msra.mxu0 0.0
  %789 = vmatprep.subr.mxu0 0.0
  %790 = vmatpush1.xpose.msra.mxu0 0.0
  %791 = vmatprep.subr.mxu0 0.0
  %792 = vmatpush1.xpose.msra.mxu0 0.0
  %793 = vmatprep.subr.mxu0 0.0
  %794 = vmatpush1.xpose.msra.mxu0 0.0
  %795 = vmatprep.mubr.f32.mxu0 0.0
  %796 = vmatmul.mubr.f32.gmra.mrb[0].mxu0 %v705
  %v797 = vpop.f32.mrb[0].mxu0
  %v798 = vadd.f32 0.0, %v797
  %v799 = vpop.f32.mrb[0].mxu0
  %800 = vdwg.mxu0
  %v803 = vunpack.c.l.s4 1966171168
  %v804 = vunpack.c.0.s8 %v803
  %v805 = vlaneseq
  %v806 = vshrl.u32 %v805, 7
  %v807 = vsub.s32 %v804, %v806
  %v808 = vrot.slane %v798, %v807
  %v810 = vunpack.c.l.s4 1966171168
  %v811 = vunpack.c.0.s8 %v810
  %v812 = vlaneseq
  %v813 = vshrl.u32 %v812, 7
  %v814 = vsub.s32 %v811, %v813
  %v815 = vrot.slane %v808, %v814
  %816 = vrot.lane.b32.xlu0 %v815, 120
  %v817 = vpop.permute.xlu0 %816
  %v819 = vmul.f32 %v14, %v817
  %820 = vrot.lane.b32.xlu0 %v815, 8
  %v821 = vpop.permute.xlu0 %820
  %v823 = vmul.f32 %v14, %v821
  %825 = vrot.lane.b32.xlu0 %v823, 120
  %v826 = vpop.permute.xlu0 %825
  %v828 = vsub.f32 %v819, %v826
  %s829 = scalar_lea.vmem %s1, 32
  %v830 = vld [vmem:[%s829] sm:$0xf]
  %v831 = vld [vmem:[%s829 + $0x4] sm:$0xf]
  %v832 = vld [vmem:[%s829 + $0x8] sm:$0xf]
  %v833 = vld [vmem:[%s829 + $0xc] sm:$0xf]
  %v834 = vld [vmem:[%s829 + $0x10] sm:$0xf]
  %v835 = vld [vmem:[%s829 + $0x14] sm:$0xf]
  %v836 = vld [vmem:[%s829 + $0x18] sm:$0xf]
  %v837 = vld [vmem:[%s829 + $0x1c] sm:$0xf]
  %v838 = vunpack.c.l.bf16 %v830
  %v839 = vunpack.c.l.bf16 %v831
  %v840 = vunpack.c.l.bf16 %v832
  %v841 = vunpack.c.l.bf16 %v833
  %v842 = vunpack.c.l.bf16 %v834
  %v843 = vunpack.c.l.bf16 %v835
  %v844 = vunpack.c.l.bf16 %v836
  %v845 = vunpack.c.l.bf16 %v837
  %s846 = scalar_lea.vmem %s1, 160
  %v847 = vld [vmem:[%s846] sm:$0xf]
  %v848 = vld [vmem:[%s846 + $0x4] sm:$0xf]
  %v849 = vld [vmem:[%s846 + $0x8] sm:$0xf]
  %v850 = vld [vmem:[%s846 + $0xc] sm:$0xf]
  %v851 = vld [vmem:[%s846 + $0x10] sm:$0xf]
  %v852 = vld [vmem:[%s846 + $0x14] sm:$0xf]
  %v853 = vld [vmem:[%s846 + $0x18] sm:$0xf]
  %v854 = vld [vmem:[%s846 + $0x1c] sm:$0xf]
  %v855 = vunpack.c.l.bf16 %v847
  %v856 = vunpack.c.l.bf16 %v848
  %v857 = vunpack.c.l.bf16 %v849
  %v858 = vunpack.c.l.bf16 %v850
  %v859 = vunpack.c.l.bf16 %v851
  %v860 = vunpack.c.l.bf16 %v852
  %v861 = vunpack.c.l.bf16 %v853
  %v862 = vunpack.c.l.bf16 %v854
  %s863 = scalar_lea.vmem %s1, 288
  %v864 = vld [vmem:[%s863] sm:$0xf]
  %v865 = vld [vmem:[%s863 + $0x4] sm:$0xf]
  %v866 = vld [vmem:[%s863 + $0x8] sm:$0xf]
  %v867 = vld [vmem:[%s863 + $0xc] sm:$0xf]
  %v868 = vld [vmem:[%s863 + $0x10] sm:$0xf]
  %v869 = vld [vmem:[%s863 + $0x14] sm:$0xf]
  %v870 = vld [vmem:[%s863 + $0x18] sm:$0xf]
  %v871 = vld [vmem:[%s863 + $0x1c] sm:$0xf]
  %v872 = vunpack.c.l.bf16 %v864
  %v873 = vunpack.c.l.bf16 %v865
  %v874 = vunpack.c.l.bf16 %v866
  %v875 = vunpack.c.l.bf16 %v867
  %v876 = vunpack.c.l.bf16 %v868
  %v877 = vunpack.c.l.bf16 %v869
  %v878 = vunpack.c.l.bf16 %v870
  %v879 = vunpack.c.l.bf16 %v871
  %s880 = scalar_lea.vmem %s1, 416
  %v881 = vld [vmem:[%s880] sm:$0xf]
  %v882 = vld [vmem:[%s880 + $0x4] sm:$0xf]
  %v883 = vld [vmem:[%s880 + $0x8] sm:$0xf]
  %v884 = vld [vmem:[%s880 + $0xc] sm:$0xf]
  %v885 = vld [vmem:[%s880 + $0x10] sm:$0xf]
  %v886 = vld [vmem:[%s880 + $0x14] sm:$0xf]
  %v887 = vld [vmem:[%s880 + $0x18] sm:$0xf]
  %v888 = vld [vmem:[%s880 + $0x1c] sm:$0xf]
  %v889 = vunpack.c.l.bf16 %v881
  %v890 = vunpack.c.l.bf16 %v882
  %v891 = vunpack.c.l.bf16 %v883
  %v892 = vunpack.c.l.bf16 %v884
  %v893 = vunpack.c.l.bf16 %v885
  %v894 = vunpack.c.l.bf16 %v886
  %v895 = vunpack.c.l.bf16 %v887
  %v896 = vunpack.c.l.bf16 %v888
  %s897 = scalar_lea.vmem %s2, 8
  %v898 = vld [vmem:[%s897] sm:$0xff]
  %899 = vmatprep.subr.mxu0 0.0
  %900 = vmatpush1.msra.mxu0 %v838
  %901 = vmatprep.subr.mxu0 0.0
  %902 = vmatpush1.msra.mxu0 %v839
  %903 = vmatprep.subr.mxu0 0.0
  %904 = vmatpush1.msra.mxu0 %v840
  %905 = vmatprep.subr.mxu0 0.0
  %906 = vmatpush1.msra.mxu0 %v841
  %907 = vmatprep.subr.mxu0 0.0
  %908 = vmatpush1.msra.mxu0 %v842
  %909 = vmatprep.subr.mxu0 0.0
  %910 = vmatpush1.msra.mxu0 %v843
  %911 = vmatprep.subr.mxu0 0.0
  %912 = vmatpush1.msra.mxu0 %v844
  %913 = vmatprep.subr.mxu0 0.0
  %914 = vmatpush1.msra.mxu0 %v845
  %915 = vmatprep.subr.mxu0 0.0
  %916 = vmatpush1.msra.mxu0 0.0
  %917 = vmatprep.subr.mxu0 0.0
  %918 = vmatpush1.msra.mxu0 0.0
  %919 = vmatprep.subr.mxu0 0.0
  %920 = vmatpush1.msra.mxu0 0.0
  %921 = vmatprep.subr.mxu0 0.0
  %922 = vmatpush1.msra.mxu0 0.0
  %923 = vmatprep.subr.mxu0 0.0
  %924 = vmatpush1.msra.mxu0 0.0
  %925 = vmatprep.subr.mxu0 0.0
  %926 = vmatpush1.msra.mxu0 0.0
  %927 = vmatprep.subr.mxu0 0.0
  %928 = vmatpush1.msra.mxu0 0.0
  %929 = vmatprep.subr.mxu0 0.0
  %930 = vmatpush1.msra.mxu0 0.0
  %931 = vmatprep.subr.mxu0 0.0
  %932 = vmatpush1.msra.mxu0 0.0
  %933 = vmatprep.subr.mxu0 0.0
  %934 = vmatpush1.msra.mxu0 0.0
  %935 = vmatprep.subr.mxu0 0.0
  %936 = vmatpush1.msra.mxu0 0.0
  %937 = vmatprep.subr.mxu0 0.0
  %938 = vmatpush1.msra.mxu0 0.0
  %939 = vmatprep.subr.mxu0 0.0
  %940 = vmatpush1.msra.mxu0 0.0
  %941 = vmatprep.subr.mxu0 0.0
  %942 = vmatpush1.msra.mxu0 0.0
  %943 = vmatprep.subr.mxu0 0.0
  %944 = vmatpush1.msra.mxu0 0.0
  %945 = vmatprep.subr.mxu0 0.0
  %946 = vmatpush1.msra.mxu0 0.0
  %947 = vmatprep.subr.mxu0 0.0
  %948 = vmatpush1.msra.mxu0 0.0
  %949 = vmatprep.subr.mxu0 0.0
  %950 = vmatpush1.msra.mxu0 0.0
  %951 = vmatprep.subr.mxu0 0.0
  %952 = vmatpush1.msra.mxu0 0.0
  %953 = vmatprep.subr.mxu0 0.0
  %954 = vmatpush1.msra.mxu0 0.0
  %955 = vmatprep.subr.mxu0 0.0
  %956 = vmatpush1.msra.mxu0 0.0
  %957 = vmatprep.subr.mxu0 0.0
  %958 = vmatpush1.msra.mxu0 0.0
  %959 = vmatprep.subr.mxu0 0.0
  %960 = vmatpush1.msra.mxu0 0.0
  %961 = vmatprep.subr.mxu0 0.0
  %962 = vmatpush1.msra.mxu0 0.0
  %963 = vmatprep.mubr.f32.mxu0 0.0
  %964 = vmatmul.mubr.f32.gmra.mrb[0].mxu0 %v85
  %v965 = vpop.f32.mrb[0].mxu0
  %v966 = vadd.f32 %v898, %v965
  %v967 = vpop.f32.mrb[0].mxu0
  %968 = vdwg.mxu0
  %v969 = vtanh.pop %v966
  %v971 = vrot.slane %v898, 1
  %v974 = vsel %vm83, %v969, 0
  %976 = vmatprep.subr.mxu0 0.0
  %977 = vmatpush1.msra.mxu0 %v855
  %978 = vmatprep.subr.mxu0 0.0
  %979 = vmatpush1.msra.mxu0 %v856
  %980 = vmatprep.subr.mxu0 0.0
  %981 = vmatpush1.msra.mxu0 %v857
  %982 = vmatprep.subr.mxu0 0.0
  %983 = vmatpush1.msra.mxu0 %v858
  %984 = vmatprep.subr.mxu0 0.0
  %985 = vmatpush1.msra.mxu0 %v859
  %986 = vmatprep.subr.mxu0 0.0
  %987 = vmatpush1.msra.mxu0 %v860
  %988 = vmatprep.subr.mxu0 0.0
  %989 = vmatpush1.msra.mxu0 %v861
  %990 = vmatprep.subr.mxu0 0.0
  %991 = vmatpush1.msra.mxu0 %v862
  %992 = vmatprep.subr.mxu0 0.0
  %993 = vmatpush1.msra.mxu0 0.0
  %994 = vmatprep.subr.mxu0 0.0
  %995 = vmatpush1.msra.mxu0 0.0
  %996 = vmatprep.subr.mxu0 0.0
  %997 = vmatpush1.msra.mxu0 0.0
  %998 = vmatprep.subr.mxu0 0.0
  %999 = vmatpush1.msra.mxu0 0.0
  %1000 = vmatprep.subr.mxu0 0.0
  %1001 = vmatpush1.msra.mxu0 0.0
  %1002 = vmatprep.subr.mxu0 0.0
  %1003 = vmatpush1.msra.mxu0 0.0
  %1004 = vmatprep.subr.mxu0 0.0
  %1005 = vmatpush1.msra.mxu0 0.0
  %1006 = vmatprep.subr.mxu0 0.0
  %1007 = vmatpush1.msra.mxu0 0.0
  %1008 = vmatprep.subr.mxu0 0.0
  %1009 = vmatpush1.msra.mxu0 0.0
  %1010 = vmatprep.subr.mxu0 0.0
  %1011 = vmatpush1.msra.mxu0 0.0
  %1012 = vmatprep.subr.mxu0 0.0
  %1013 = vmatpush1.msra.mxu0 0.0
  %1014 = vmatprep.subr.mxu0 0.0
  %1015 = vmatpush1.msra.mxu0 0.0
  %1016 = vmatprep.subr.mxu0 0.0
  %1017 = vmatpush1.msra.mxu0 0.0
  %1018 = vmatprep.subr.mxu0 0.0
  %1019 = vmatpush1.msra.mxu0 0.0
  %1020 = vmatprep.subr.mxu0 0.0
  %1021 = vmatpush1.msra.mxu0 0.0
  %1022 = vmatprep.subr.mxu0 0.0
  %1023 = vmatpush1.msra.mxu0 0.0
  %1024 = vmatprep.subr.mxu0 0.0
  %1025 = vmatpush1.msra.mxu0 0.0
  %1026 = vmatprep.subr.mxu0 0.0
  %1027 = vmatpush1.msra.mxu0 0.0
  %1028 = vmatprep.subr.mxu0 0.0
  %1029 = vmatpush1.msra.mxu0 0.0
  %1030 = vmatprep.subr.mxu0 0.0
  %1031 = vmatpush1.msra.mxu0 0.0
  %1032 = vmatprep.subr.mxu0 0.0
  %1033 = vmatpush1.msra.mxu0 0.0
  %1034 = vmatprep.subr.mxu0 0.0
  %1035 = vmatpush1.msra.mxu0 0.0
  %1036 = vmatprep.subr.mxu0 0.0
  %1037 = vmatpush1.msra.mxu0 0.0
  %1038 = vmatprep.subr.mxu0 0.0
  %1039 = vmatpush1.msra.mxu0 0.0
  %1040 = vmatprep.mubr.f32.mxu0 0.0
  %1041 = vmatmul.mubr.f32.gmra.mrb[0].mxu0 %v974
  %v1042 = vpop.f32.mrb[0].mxu0
  %v1043 = vadd.f32 %v971, %v1042
  %v1044 = vpop.f32.mrb[0].mxu0
  %1045 = vdwg.mxu0
  %v1046 = vtanh.pop %v1043
  %v1047 = vrot.slane %v898, 2
  %v1050 = vsel %vm83, %v1046, 0
  %1052 = vmatprep.subr.mxu0 0.0
  %1053 = vmatpush1.msra.mxu0 %v872
  %1054 = vmatprep.subr.mxu0 0.0
  %1055 = vmatpush1.msra.mxu0 %v873
  %1056 = vmatprep.subr.mxu0 0.0
  %1057 = vmatpush1.msra.mxu0 %v874
  %1058 = vmatprep.subr.mxu0 0.0
  %1059 = vmatpush1.msra.mxu0 %v875
  %1060 = vmatprep.subr.mxu0 0.0
  %1061 = vmatpush1.msra.mxu0 %v876
  %1062 = vmatprep.subr.mxu0 0.0
  %1063 = vmatpush1.msra.mxu0 %v877
  %1064 = vmatprep.subr.mxu0 0.0
  %1065 = vmatpush1.msra.mxu0 %v878
  %1066 = vmatprep.subr.mxu0 0.0
  %1067 = vmatpush1.msra.mxu0 %v879
  %1068 = vmatprep.subr.mxu0 0.0
  %1069 = vmatpush1.msra.mxu0 0.0
  %1070 = vmatprep.subr.mxu0 0.0
  %1071 = vmatpush1.msra.mxu0 0.0
  %1072 = vmatprep.subr.mxu0 0.0
  %1073 = vmatpush1.msra.mxu0 0.0
  %1074 = vmatprep.subr.mxu0 0.0
  %1075 = vmatpush1.msra.mxu0 0.0
  %1076 = vmatprep.subr.mxu0 0.0
  %1077 = vmatpush1.msra.mxu0 0.0
  %1078 = vmatprep.subr.mxu0 0.0
  %1079 = vmatpush1.msra.mxu0 0.0
  %1080 = vmatprep.subr.mxu0 0.0
  %1081 = vmatpush1.msra.mxu0 0.0
  %1082 = vmatprep.subr.mxu0 0.0
  %1083 = vmatpush1.msra.mxu0 0.0
  %1084 = vmatprep.subr.mxu0 0.0
  %1085 = vmatpush1.msra.mxu0 0.0
  %1086 = vmatprep.subr.mxu0 0.0
  %1087 = vmatpush1.msra.mxu0 0.0
  %1088 = vmatprep.subr.mxu0 0.0
  %1089 = vmatpush1.msra.mxu0 0.0
  %1090 = vmatprep.subr.mxu0 0.0
  %1091 = vmatpush1.msra.mxu0 0.0
  %1092 = vmatprep.subr.mxu0 0.0
  %1093 = vmatpush1.msra.mxu0 0.0
  %1094 = vmatprep.subr.mxu0 0.0
  %1095 = vmatpush1.msra.mxu0 0.0
  %1096 = vmatprep.subr.mxu0 0.0
  %1097 = vmatpush1.msra.mxu0 0.0
  %1098 = vmatprep.subr.mxu0 0.0
  %1099 = vmatpush1.msra.mxu0 0.0
  %1100 = vmatprep.subr.mxu0 0.0
  %1101 = vmatpush1.msra.mxu0 0.0
  %1102 = vmatprep.subr.mxu0 0.0
  %1103 = vmatpush1.msra.mxu0 0.0
  %1104 = vmatprep.subr.mxu0 0.0
  %1105 = vmatpush1.msra.mxu0 0.0
  %1106 = vmatprep.subr.mxu0 0.0
  %1107 = vmatpush1.msra.mxu0 0.0
  %1108 = vmatprep.subr.mxu0 0.0
  %1109 = vmatpush1.msra.mxu0 0.0
  %1110 = vmatprep.subr.mxu0 0.0
  %1111 = vmatpush1.msra.mxu0 0.0
  %1112 = vmatprep.subr.mxu0 0.0
  %1113 = vmatpush1.msra.mxu0 0.0
  %1114 = vmatprep.subr.mxu0 0.0
  %1115 = vmatpush1.msra.mxu0 0.0
  %1116 = vmatprep.mubr.f32.mxu0 0.0
  %1117 = vmatmul.mubr.f32.gmra.mrb[0].mxu0 %v1050
  %v1118 = vpop.f32.mrb[0].mxu0
  %v1119 = vadd.f32 %v1047, %v1118
  %v1120 = vpop.f32.mrb[0].mxu0
  %1121 = vdwg.mxu0
  %v1122 = vtanh.pop %v1119
  %v1123 = vrot.slane %v898, 3
  %v1126 = vsel %vm83, %v1122, 0
  %1128 = vmatprep.subr.mxu0 0.0
  %1129 = vmatpush1.msra.mxu0 %v889
  %1130 = vmatprep.subr.mxu0 0.0
  %1131 = vmatpush1.msra.mxu0 %v890
  %1132 = vmatprep.subr.mxu0 0.0
  %1133 = vmatpush1.msra.mxu0 %v891
  %1134 = vmatprep.subr.mxu0 0.0
  %1135 = vmatpush1.msra.mxu0 %v892
  %1136 = vmatprep.subr.mxu0 0.0
  %1137 = vmatpush1.msra.mxu0 %v893
  %1138 = vmatprep.subr.mxu0 0.0
  %1139 = vmatpush1.msra.mxu0 %v894
  %1140 = vmatprep.subr.mxu0 0.0
  %1141 = vmatpush1.msra.mxu0 %v895
  %1142 = vmatprep.subr.mxu0 0.0
  %1143 = vmatpush1.msra.mxu0 %v896
  %1144 = vmatprep.subr.mxu0 0.0
  %1145 = vmatpush1.msra.mxu0 0.0
  %1146 = vmatprep.subr.mxu0 0.0
  %1147 = vmatpush1.msra.mxu0 0.0
  %1148 = vmatprep.subr.mxu0 0.0
  %1149 = vmatpush1.msra.mxu0 0.0
  %1150 = vmatprep.subr.mxu0 0.0
  %1151 = vmatpush1.msra.mxu0 0.0
  %1152 = vmatprep.subr.mxu0 0.0
  %1153 = vmatpush1.msra.mxu0 0.0
  %1154 = vmatprep.subr.mxu0 0.0
  %1155 = vmatpush1.msra.mxu0 0.0
  %1156 = vmatprep.subr.mxu0 0.0
  %1157 = vmatpush1.msra.mxu0 0.0
  %1158 = vmatprep.subr.mxu0 0.0
  %1159 = vmatpush1.msra.mxu0 0.0
  %1160 = vmatprep.subr.mxu0 0.0
  %1161 = vmatpush1.msra.mxu0 0.0
  %1162 = vmatprep.subr.mxu0 0.0
  %1163 = vmatpush1.msra.mxu0 0.0
  %1164 = vmatprep.subr.mxu0 0.0
  %1165 = vmatpush1.msra.mxu0 0.0
  %1166 = vmatprep.subr.mxu0 0.0
  %1167 = vmatpush1.msra.mxu0 0.0
  %1168 = vmatprep.subr.mxu0 0.0
  %1169 = vmatpush1.msra.mxu0 0.0
  %1170 = vmatprep.subr.mxu0 0.0
  %1171 = vmatpush1.msra.mxu0 0.0
  %1172 = vmatprep.subr.mxu0 0.0
  %1173 = vmatpush1.msra.mxu0 0.0
  %1174 = vmatprep.subr.mxu0 0.0
  %1175 = vmatpush1.msra.mxu0 0.0
  %1176 = vmatprep.subr.mxu0 0.0
  %1177 = vmatpush1.msra.mxu0 0.0
  %1178 = vmatprep.subr.mxu0 0.0
  %1179 = vmatpush1.msra.mxu0 0.0
  %1180 = vmatprep.subr.mxu0 0.0
  %1181 = vmatpush1.msra.mxu0 0.0
  %1182 = vmatprep.subr.mxu0 0.0
  %1183 = vmatpush1.msra.mxu0 0.0
  %1184 = vmatprep.subr.mxu0 0.0
  %1185 = vmatpush1.msra.mxu0 0.0
  %1186 = vmatprep.subr.mxu0 0.0
  %1187 = vmatpush1.msra.mxu0 0.0
  %1188 = vmatprep.subr.mxu0 0.0
  %1189 = vmatpush1.msra.mxu0 0.0
  %1190 = vmatprep.subr.mxu0 0.0
  %1191 = vmatpush1.msra.mxu0 0.0
  %1192 = vmatprep.mubr.f32.mxu0 0.0
  %1193 = vmatmul.mubr.f32.gmra.mrb[0].mxu0 %v1126
  %v1194 = vpop.f32.mrb[0].mxu0
  %v1195 = vadd.f32 %v1123, %v1194
  %v1196 = vpop.f32.mrb[0].mxu0
  %1197 = vdwg.mxu0
  %v1198 = vtanh.pop %v1195
  %v1199 = vrot.slane %v898, 4
  %v1201 = vmul.f32 %v1198, %v1199
  %v1202 = vsel %vm390, %v1201, 0.0
  %1203 = vadd.xlane.f32.xlu0 %v1202
  %v1204 = vpop.xlane.xlu0 %1203
  %v1205 = vrot.slane %v898, 5
  %v1207 = vadd.f32 %v1204, %v1205
  %v1208 = vmul.f32 %v1198, %v1198
  %v1209 = vsub.f32 1.0, %v1208
  %v1211 = vrot.slane %v1209, 4
  %v1213 = vmul.f32 %v898, %v1211
  %v1215 = vrot.slane %v1213, 4
  %v1216 = vsel %vm83, %v1215, 0
  %v1219 = vsel %vm83, %v889, 0
  %v1222 = vsel %vm83, %v890, 0
  %v1225 = vsel %vm83, %v891, 0
  %v1228 = vsel %vm83, %v892, 0
  %v1231 = vsel %vm83, %v893, 0
  %v1234 = vsel %vm83, %v894, 0
  %v1237 = vsel %vm83, %v895, 0
  %v1240 = vsel %vm83, %v896, 0
  %1242 = vmatprep.subr.mxu0 0.0
  %1243 = vmatpush1.xpose.msra.mxu0 %v1219
  %1244 = vmatprep.subr.mxu0 0.0
  %1245 = vmatpush1.xpose.msra.mxu0 %v1222
  %1246 = vmatprep.subr.mxu0 0.0
  %1247 = vmatpush1.xpose.msra.mxu0 %v1225
  %1248 = vmatprep.subr.mxu0 0.0
  %1249 = vmatpush1.xpose.msra.mxu0 %v1228
  %1250 = vmatprep.subr.mxu0 0.0
  %1251 = vmatpush1.xpose.msra.mxu0 %v1231
  %1252 = vmatprep.subr.mxu0 0.0
  %1253 = vmatpush1.xpose.msra.mxu0 %v1234
  %1254 = vmatprep.subr.mxu0 0.0
  %1255 = vmatpush1.xpose.msra.mxu0 %v1237
  %1256 = vmatprep.subr.mxu0 0.0
  %1257 = vmatpush1.xpose.msra.mxu0 %v1240
  %1258 = vmatprep.subr.mxu0 0.0
  %1259 = vmatpush1.xpose.msra.mxu0 0.0
  %1260 = vmatprep.subr.mxu0 0.0
  %1261 = vmatpush1.xpose.msra.mxu0 0.0
  %1262 = vmatprep.subr.mxu0 0.0
  %1263 = vmatpush1.xpose.msra.mxu0 0.0
  %1264 = vmatprep.subr.mxu0 0.0
  %1265 = vmatpush1.xpose.msra.mxu0 0.0
  %1266 = vmatprep.subr.mxu0 0.0
  %1267 = vmatpush1.xpose.msra.mxu0 0.0
  %1268 = vmatprep.subr.mxu0 0.0
  %1269 = vmatpush1.xpose.msra.mxu0 0.0
  %1270 = vmatprep.subr.mxu0 0.0
  %1271 = vmatpush1.xpose.msra.mxu0 0.0
  %1272 = vmatprep.subr.mxu0 0.0
  %1273 = vmatpush1.xpose.msra.mxu0 0.0
  %1274 = vmatprep.subr.mxu0 0.0
  %1275 = vmatpush1.xpose.msra.mxu0 0.0
  %1276 = vmatprep.subr.mxu0 0.0
  %1277 = vmatpush1.xpose.msra.mxu0 0.0
  %1278 = vmatprep.subr.mxu0 0.0
  %1279 = vmatpush1.xpose.msra.mxu0 0.0
  %1280 = vmatprep.subr.mxu0 0.0
  %1281 = vmatpush1.xpose.msra.mxu0 0.0
  %1282 = vmatprep.subr.mxu0 0.0
  %1283 = vmatpush1.xpose.msra.mxu0 0.0
  %1284 = vmatprep.subr.mxu0 0.0
  %1285 = vmatpush1.xpose.msra.mxu0 0.0
  %1286 = vmatprep.subr.mxu0 0.0
  %1287 = vmatpush1.xpose.msra.mxu0 0.0
  %1288 = vmatprep.subr.mxu0 0.0
  %1289 = vmatpush1.xpose.msra.mxu0 0.0
  %1290 = vmatprep.subr.mxu0 0.0
  %1291 = vmatpush1.xpose.msra.mxu0 0.0
  %1292 = vmatprep.subr.mxu0 0.0
  %1293 = vmatpush1.xpose.msra.mxu0 0.0
  %1294 = vmatprep.subr.mxu0 0.0
  %1295 = vmatpush1.xpose.msra.mxu0 0.0
  %1296 = vmatprep.subr.mxu0 0.0
  %1297 = vmatpush1.xpose.msra.mxu0 0.0
  %1298 = vmatprep.subr.mxu0 0.0
  %1299 = vmatpush1.xpose.msra.mxu0 0.0
  %1300 = vmatprep.subr.mxu0 0.0
  %1301 = vmatpush1.xpose.msra.mxu0 0.0
  %1302 = vmatprep.subr.mxu0 0.0
  %1303 = vmatpush1.xpose.msra.mxu0 0.0
  %1304 = vmatprep.subr.mxu0 0.0
  %1305 = vmatpush1.xpose.msra.mxu0 0.0
  %1306 = vmatprep.mubr.f32.mxu0 0.0
  %1307 = vmatmul.mubr.f32.gmra.mrb[0].mxu0 %v1216
  %v1308 = vpop.f32.mrb[0].mxu0
  %v1309 = vadd.f32 0.0, %v1308
  %v1310 = vpop.f32.mrb[0].mxu0
  %1311 = vdwg.mxu0
  %v1312 = vmul.f32 %v1122, %v1122
  %v1313 = vsub.f32 1.0, %v1312
  %v1314 = vmul.f32 %v1309, %v1313
  %v1316 = vsel %vm83, %v1314, 0
  %v1319 = vsel %vm83, %v872, 0
  %v1322 = vsel %vm83, %v873, 0
  %v1325 = vsel %vm83, %v874, 0
  %v1328 = vsel %vm83, %v875, 0
  %v1331 = vsel %vm83, %v876, 0
  %v1334 = vsel %vm83, %v877, 0
  %v1337 = vsel %vm83, %v878, 0
  %v1340 = vsel %vm83, %v879, 0
  %1342 = vmatprep.subr.mxu0 0.0
  %1343 = vmatpush1.xpose.msra.mxu0 %v1319
  %1344 = vmatprep.subr.mxu0 0.0
  %1345 = vmatpush1.xpose.msra.mxu0 %v1322
  %1346 = vmatprep.subr.mxu0 0.0
  %1347 = vmatpush1.xpose.msra.mxu0 %v1325
  %1348 = vmatprep.subr.mxu0 0.0
  %1349 = vmatpush1.xpose.msra.mxu0 %v1328
  %1350 = vmatprep.subr.mxu0 0.0
  %1351 = vmatpush1.xpose.msra.mxu0 %v1331
  %1352 = vmatprep.subr.mxu0 0.0
  %1353 = vmatpush1.xpose.msra.mxu0 %v1334
  %1354 = vmatprep.subr.mxu0 0.0
  %1355 = vmatpush1.xpose.msra.mxu0 %v1337
  %1356 = vmatprep.subr.mxu0 0.0
  %1357 = vmatpush1.xpose.msra.mxu0 %v1340
  %1358 = vmatprep.subr.mxu0 0.0
  %1359 = vmatpush1.xpose.msra.mxu0 0.0
  %1360 = vmatprep.subr.mxu0 0.0
  %1361 = vmatpush1.xpose.msra.mxu0 0.0
  %1362 = vmatprep.subr.mxu0 0.0
  %1363 = vmatpush1.xpose.msra.mxu0 0.0
  %1364 = vmatprep.subr.mxu0 0.0
  %1365 = vmatpush1.xpose.msra.mxu0 0.0
  %1366 = vmatprep.subr.mxu0 0.0
  %1367 = vmatpush1.xpose.msra.mxu0 0.0
  %1368 = vmatprep.subr.mxu0 0.0
  %1369 = vmatpush1.xpose.msra.mxu0 0.0
  %1370 = vmatprep.subr.mxu0 0.0
  %1371 = vmatpush1.xpose.msra.mxu0 0.0
  %1372 = vmatprep.subr.mxu0 0.0
  %1373 = vmatpush1.xpose.msra.mxu0 0.0
  %1374 = vmatprep.subr.mxu0 0.0
  %1375 = vmatpush1.xpose.msra.mxu0 0.0
  %1376 = vmatprep.subr.mxu0 0.0
  %1377 = vmatpush1.xpose.msra.mxu0 0.0
  %1378 = vmatprep.subr.mxu0 0.0
  %1379 = vmatpush1.xpose.msra.mxu0 0.0
  %1380 = vmatprep.subr.mxu0 0.0
  %1381 = vmatpush1.xpose.msra.mxu0 0.0
  %1382 = vmatprep.subr.mxu0 0.0
  %1383 = vmatpush1.xpose.msra.mxu0 0.0
  %1384 = vmatprep.subr.mxu0 0.0
  %1385 = vmatpush1.xpose.msra.mxu0 0.0
  %1386 = vmatprep.subr.mxu0 0.0
  %1387 = vmatpush1.xpose.msra.mxu0 0.0
  %1388 = vmatprep.subr.mxu0 0.0
  %1389 = vmatpush1.xpose.msra.mxu0 0.0
  %1390 = vmatprep.subr.mxu0 0.0
  %1391 = vmatpush1.xpose.msra.mxu0 0.0
  %1392 = vmatprep.subr.mxu0 0.0
  %1393 = vmatpush1.xpose.msra.mxu0 0.0
  %1394 = vmatprep.subr.mxu0 0.0
  %1395 = vmatpush1.xpose.msra.mxu0 0.0
  %1396 = vmatprep.subr.mxu0 0.0
  %1397 = vmatpush1.xpose.msra.mxu0 0.0
  %1398 = vmatprep.subr.mxu0 0.0
  %1399 = vmatpush1.xpose.msra.mxu0 0.0
  %1400 = vmatprep.subr.mxu0 0.0
  %1401 = vmatpush1.xpose.msra.mxu0 0.0
  %1402 = vmatprep.subr.mxu0 0.0
  %1403 = vmatpush1.xpose.msra.mxu0 0.0
  %1404 = vmatprep.subr.mxu0 0.0
  %1405 = vmatpush1.xpose.msra.mxu0 0.0
  %1406 = vmatprep.mubr.f32.mxu0 0.0
  %1407 = vmatmul.mubr.f32.gmra.mrb[0].mxu0 %v1316
  %v1408 = vpop.f32.mrb[0].mxu0
  %v1409 = vadd.f32 0.0, %v1408
  %v1410 = vpop.f32.mrb[0].mxu0
  %1411 = vdwg.mxu0
  %v1412 = vmul.f32 %v1046, %v1046
  %v1413 = vsub.f32 1.0, %v1412
  %v1414 = vmul.f32 %v1409, %v1413
  %v1416 = vsel %vm83, %v1414, 0
  %v1419 = vsel %vm83, %v855, 0
  %v1422 = vsel %vm83, %v856, 0
  %v1425 = vsel %vm83, %v857, 0
  %v1428 = vsel %vm83, %v858, 0
  %v1431 = vsel %vm83, %v859, 0
  %v1434 = vsel %vm83, %v860, 0
  %v1437 = vsel %vm83, %v861, 0
  %v1440 = vsel %vm83, %v862, 0
  %1442 = vmatprep.subr.mxu0 0.0
  %1443 = vmatpush1.xpose.msra.mxu0 %v1419
  %1444 = vmatprep.subr.mxu0 0.0
  %1445 = vmatpush1.xpose.msra.mxu0 %v1422
  %1446 = vmatprep.subr.mxu0 0.0
  %1447 = vmatpush1.xpose.msra.mxu0 %v1425
  %1448 = vmatprep.subr.mxu0 0.0
  %1449 = vmatpush1.xpose.msra.mxu0 %v1428
  %1450 = vmatprep.subr.mxu0 0.0
  %1451 = vmatpush1.xpose.msra.mxu0 %v1431
  %1452 = vmatprep.subr.mxu0 0.0
  %1453 = vmatpush1.xpose.msra.mxu0 %v1434
  %1454 = vmatprep.subr.mxu0 0.0
  %1455 = vmatpush1.xpose.msra.mxu0 %v1437
  %1456 = vmatprep.subr.mxu0 0.0
  %1457 = vmatpush1.xpose.msra.mxu0 %v1440
  %1458 = vmatprep.subr.mxu0 0.0
  %1459 = vmatpush1.xpose.msra.mxu0 0.0
  %1460 = vmatprep.subr.mxu0 0.0
  %1461 = vmatpush1.xpose.msra.mxu0 0.0
  %1462 = vmatprep.subr.mxu0 0.0
  %1463 = vmatpush1.xpose.msra.mxu0 0.0
  %1464 = vmatprep.subr.mxu0 0.0
  %1465 = vmatpush1.xpose.msra.mxu0 0.0
  %1466 = vmatprep.subr.mxu0 0.0
  %1467 = vmatpush1.xpose.msra.mxu0 0.0
  %1468 = vmatprep.subr.mxu0 0.0
  %1469 = vmatpush1.xpose.msra.mxu0 0.0
  %1470 = vmatprep.subr.mxu0 0.0
  %1471 = vmatpush1.xpose.msra.mxu0 0.0
  %1472 = vmatprep.subr.mxu0 0.0
  %1473 = vmatpush1.xpose.msra.mxu0 0.0
  %1474 = vmatprep.subr.mxu0 0.0
  %1475 = vmatpush1.xpose.msra.mxu0 0.0
  %1476 = vmatprep.subr.mxu0 0.0
  %1477 = vmatpush1.xpose.msra.mxu0 0.0
  %1478 = vmatprep.subr.mxu0 0.0
  %1479 = vmatpush1.xpose.msra.mxu0 0.0
  %1480 = vmatprep.subr.mxu0 0.0
  %1481 = vmatpush1.xpose.msra.mxu0 0.0
  %1482 = vmatprep.subr.mxu0 0.0
  %1483 = vmatpush1.xpose.msra.mxu0 0.0
  %1484 = vmatprep.subr.mxu0 0.0
  %1485 = vmatpush1.xpose.msra.mxu0 0.0
  %1486 = vmatprep.subr.mxu0 0.0
  %1487 = vmatpush1.xpose.msra.mxu0 0.0
  %1488 = vmatprep.subr.mxu0 0.0
  %1489 = vmatpush1.xpose.msra.mxu0 0.0
  %1490 = vmatprep.subr.mxu0 0.0
  %1491 = vmatpush1.xpose.msra.mxu0 0.0
  %1492 = vmatprep.subr.mxu0 0.0
  %1493 = vmatpush1.xpose.msra.mxu0 0.0
  %1494 = vmatprep.subr.mxu0 0.0
  %1495 = vmatpush1.xpose.msra.mxu0 0.0
  %1496 = vmatprep.subr.mxu0 0.0
  %1497 = vmatpush1.xpose.msra.mxu0 0.0
  %1498 = vmatprep.subr.mxu0 0.0
  %1499 = vmatpush1.xpose.msra.mxu0 0.0
  %1500 = vmatprep.subr.mxu0 0.0
  %1501 = vmatpush1.xpose.msra.mxu0 0.0
  %1502 = vmatprep.subr.mxu0 0.0
  %1503 = vmatpush1.xpose.msra.mxu0 0.0
  %1504 = vmatprep.subr.mxu0 0.0
  %1505 = vmatpush1.xpose.msra.mxu0 0.0
  %1506 = vmatprep.mubr.f32.mxu0 0.0
  %1507 = vmatmul.mubr.f32.gmra.mrb[0].mxu0 %v1416
  %v1508 = vpop.f32.mrb[0].mxu0
  %v1509 = vadd.f32 0.0, %v1508
  %v1510 = vpop.f32.mrb[0].mxu0
  %1511 = vdwg.mxu0
  %v1512 = vmul.f32 %v969, %v969
  %v1513 = vsub.f32 1.0, %v1512
  %v1514 = vmul.f32 %v1509, %v1513
  %v1516 = vsel %vm83, %v1514, 0
  %v1519 = vsel %vm83, %v838, 0
  %v1522 = vsel %vm83, %v839, 0
  %v1525 = vsel %vm83, %v840, 0
  %v1528 = vsel %vm83, %v841, 0
  %v1531 = vsel %vm83, %v842, 0
  %v1534 = vsel %vm83, %v843, 0
  %v1537 = vsel %vm83, %v844, 0
  %v1540 = vsel %vm83, %v845, 0
  %1542 = vmatprep.subr.mxu0 0.0
  %1543 = vmatpush1.xpose.msra.mxu0 %v1519
  %1544 = vmatprep.subr.mxu0 0.0
  %1545 = vmatpush1.xpose.msra.mxu0 %v1522
  %1546 = vmatprep.subr.mxu0 0.0
  %1547 = vmatpush1.xpose.msra.mxu0 %v1525
  %1548 = vmatprep.subr.mxu0 0.0
  %1549 = vmatpush1.xpose.msra.mxu0 %v1528
  %1550 = vmatprep.subr.mxu0 0.0
  %1551 = vmatpush1.xpose.msra.mxu0 %v1531
  %1552 = vmatprep.subr.mxu0 0.0
  %1553 = vmatpush1.xpose.msra.mxu0 %v1534
  %1554 = vmatprep.subr.mxu0 0.0
  %1555 = vmatpush1.xpose.msra.mxu0 %v1537
  %1556 = vmatprep.subr.mxu0 0.0
  %1557 = vmatpush1.xpose.msra.mxu0 %v1540
  %1558 = vmatprep.subr.mxu0 0.0
  %1559 = vmatpush1.xpose.msra.mxu0 0.0
  %1560 = vmatprep.subr.mxu0 0.0
  %1561 = vmatpush1.xpose.msra.mxu0 0.0
  %1562 = vmatprep.subr.mxu0 0.0
  %1563 = vmatpush1.xpose.msra.mxu0 0.0
  %1564 = vmatprep.subr.mxu0 0.0
  %1565 = vmatpush1.xpose.msra.mxu0 0.0
  %1566 = vmatprep.subr.mxu0 0.0
  %1567 = vmatpush1.xpose.msra.mxu0 0.0
  %1568 = vmatprep.subr.mxu0 0.0
  %1569 = vmatpush1.xpose.msra.mxu0 0.0
  %1570 = vmatprep.subr.mxu0 0.0
  %1571 = vmatpush1.xpose.msra.mxu0 0.0
  %1572 = vmatprep.subr.mxu0 0.0
  %1573 = vmatpush1.xpose.msra.mxu0 0.0
  %1574 = vmatprep.subr.mxu0 0.0
  %1575 = vmatpush1.xpose.msra.mxu0 0.0
  %1576 = vmatprep.subr.mxu0 0.0
  %1577 = vmatpush1.xpose.msra.mxu0 0.0
  %1578 = vmatprep.subr.mxu0 0.0
  %1579 = vmatpush1.xpose.msra.mxu0 0.0
  %1580 = vmatprep.subr.mxu0 0.0
  %1581 = vmatpush1.xpose.msra.mxu0 0.0
  %1582 = vmatprep.subr.mxu0 0.0
  %1583 = vmatpush1.xpose.msra.mxu0 0.0
  %1584 = vmatprep.subr.mxu0 0.0
  %1585 = vmatpush1.xpose.msra.mxu0 0.0
  %1586 = vmatprep.subr.mxu0 0.0
  %1587 = vmatpush1.xpose.msra.mxu0 0.0
  %1588 = vmatprep.subr.mxu0 0.0
  %1589 = vmatpush1.xpose.msra.mxu0 0.0
  %1590 = vmatprep.subr.mxu0 0.0
  %1591 = vmatpush1.xpose.msra.mxu0 0.0
  %1592 = vmatprep.subr.mxu0 0.0
  %1593 = vmatpush1.xpose.msra.mxu0 0.0
  %1594 = vmatprep.subr.mxu0 0.0
  %1595 = vmatpush1.xpose.msra.mxu0 0.0
  %1596 = vmatprep.subr.mxu0 0.0
  %1597 = vmatpush1.xpose.msra.mxu0 0.0
  %1598 = vmatprep.subr.mxu0 0.0
  %1599 = vmatpush1.xpose.msra.mxu0 0.0
  %1600 = vmatprep.subr.mxu0 0.0
  %1601 = vmatpush1.xpose.msra.mxu0 0.0
  %1602 = vmatprep.subr.mxu0 0.0
  %1603 = vmatpush1.xpose.msra.mxu0 0.0
  %1604 = vmatprep.subr.mxu0 0.0
  %1605 = vmatpush1.xpose.msra.mxu0 0.0
  %1606 = vmatprep.mubr.f32.mxu0 0.0
  %1607 = vmatmul.mubr.f32.gmra.mrb[0].mxu0 %v1516
  %v1608 = vpop.f32.mrb[0].mxu0
  %v1609 = vadd.f32 0.0, %v1608
  %v1610 = vpop.f32.mrb[0].mxu0
  %1611 = vdwg.mxu0
  %v1614 = vunpack.c.l.s4 1966171168
  %v1615 = vunpack.c.0.s8 %v1614
  %v1616 = vlaneseq
  %v1617 = vshrl.u32 %v1616, 7
  %v1618 = vsub.s32 %v1615, %v1617
  %v1619 = vrot.slane %v1609, %v1618
  %v1621 = vunpack.c.l.s4 1966171168
  %v1622 = vunpack.c.0.s8 %v1621
  %v1623 = vlaneseq
  %v1624 = vshrl.u32 %v1623, 7
  %v1625 = vsub.s32 %v1622, %v1624
  %v1626 = vrot.slane %v1619, %v1625
  %1627 = vrot.lane.b32.xlu0 %v1626, 120
  %v1628 = vpop.permute.xlu0 %1627
  %v1630 = vmul.f32 %v14, %v1628
  %1631 = vrot.lane.b32.xlu0 %v1626, 8
  %v1632 = vpop.permute.xlu0 %1631
  %v1634 = vmul.f32 %v14, %v1632
  %1636 = vrot.lane.b32.xlu0 %v1634, 120
  %v1637 = vpop.permute.xlu0 %1636
  %v1639 = vsub.f32 %v1630, %v1637
  %s1640 = scalar_lea.vmem %s1, 64
  %v1641 = vld [vmem:[%s1640] sm:$0xf]
  %v1642 = vld [vmem:[%s1640 + $0x4] sm:$0xf]
  %v1643 = vld [vmem:[%s1640 + $0x8] sm:$0xf]
  %v1644 = vld [vmem:[%s1640 + $0xc] sm:$0xf]
  %v1645 = vld [vmem:[%s1640 + $0x10] sm:$0xf]
  %v1646 = vld [vmem:[%s1640 + $0x14] sm:$0xf]
  %v1647 = vld [vmem:[%s1640 + $0x18] sm:$0xf]
  %v1648 = vld [vmem:[%s1640 + $0x1c] sm:$0xf]
  %v1649 = vunpack.c.l.bf16 %v1641
  %v1650 = vunpack.c.l.bf16 %v1642
  %v1651 = vunpack.c.l.bf16 %v1643
  %v1652 = vunpack.c.l.bf16 %v1644
  %v1653 = vunpack.c.l.bf16 %v1645
  %v1654 = vunpack.c.l.bf16 %v1646
  %v1655 = vunpack.c.l.bf16 %v1647
  %v1656 = vunpack.c.l.bf16 %v1648
  %s1657 = scalar_lea.vmem %s1, 192
  %v1658 = vld [vmem:[%s1657] sm:$0xf]
  %v1659 = vld [vmem:[%s1657 + $0x4] sm:$0xf]
  %v1660 = vld [vmem:[%s1657 + $0x8] sm:$0xf]
  %v1661 = vld [vmem:[%s1657 + $0xc] sm:$0xf]
  %v1662 = vld [vmem:[%s1657 + $0x10] sm:$0xf]
  %v1663 = vld [vmem:[%s1657 + $0x14] sm:$0xf]
  %v1664 = vld [vmem:[%s1657 + $0x18] sm:$0xf]
  %v1665 = vld [vmem:[%s1657 + $0x1c] sm:$0xf]
  %v1666 = vunpack.c.l.bf16 %v1658
  %v1667 = vunpack.c.l.bf16 %v1659
  %v1668 = vunpack.c.l.bf16 %v1660
  %v1669 = vunpack.c.l.bf16 %v1661
  %v1670 = vunpack.c.l.bf16 %v1662
  %v1671 = vunpack.c.l.bf16 %v1663
  %v1672 = vunpack.c.l.bf16 %v1664
  %v1673 = vunpack.c.l.bf16 %v1665
  %s1674 = scalar_lea.vmem %s1, 320
  %v1675 = vld [vmem:[%s1674] sm:$0xf]
  %v1676 = vld [vmem:[%s1674 + $0x4] sm:$0xf]
  %v1677 = vld [vmem:[%s1674 + $0x8] sm:$0xf]
  %v1678 = vld [vmem:[%s1674 + $0xc] sm:$0xf]
  %v1679 = vld [vmem:[%s1674 + $0x10] sm:$0xf]
  %v1680 = vld [vmem:[%s1674 + $0x14] sm:$0xf]
  %v1681 = vld [vmem:[%s1674 + $0x18] sm:$0xf]
  %v1682 = vld [vmem:[%s1674 + $0x1c] sm:$0xf]
  %v1683 = vunpack.c.l.bf16 %v1675
  %v1684 = vunpack.c.l.bf16 %v1676
  %v1685 = vunpack.c.l.bf16 %v1677
  %v1686 = vunpack.c.l.bf16 %v1678
  %v1687 = vunpack.c.l.bf16 %v1679
  %v1688 = vunpack.c.l.bf16 %v1680
  %v1689 = vunpack.c.l.bf16 %v1681
  %v1690 = vunpack.c.l.bf16 %v1682
  %s1691 = scalar_lea.vmem %s1, 448
  %v1692 = vld [vmem:[%s1691] sm:$0xf]
  %v1693 = vld [vmem:[%s1691 + $0x4] sm:$0xf]
  %v1694 = vld [vmem:[%s1691 + $0x8] sm:$0xf]
  %v1695 = vld [vmem:[%s1691 + $0xc] sm:$0xf]
  %v1696 = vld [vmem:[%s1691 + $0x10] sm:$0xf]
  %v1697 = vld [vmem:[%s1691 + $0x14] sm:$0xf]
  %v1698 = vld [vmem:[%s1691 + $0x18] sm:$0xf]
  %v1699 = vld [vmem:[%s1691 + $0x1c] sm:$0xf]
  %v1700 = vunpack.c.l.bf16 %v1692
  %v1701 = vunpack.c.l.bf16 %v1693
  %v1702 = vunpack.c.l.bf16 %v1694
  %v1703 = vunpack.c.l.bf16 %v1695
  %v1704 = vunpack.c.l.bf16 %v1696
  %v1705 = vunpack.c.l.bf16 %v1697
  %v1706 = vunpack.c.l.bf16 %v1698
  %v1707 = vunpack.c.l.bf16 %v1699
  %s1708 = scalar_lea.vmem %s2, 16
  %v1709 = vld [vmem:[%s1708] sm:$0xff]
  %1710 = vmatprep.subr.mxu0 0.0
  %1711 = vmatpush1.msra.mxu0 %v1649
  %1712 = vmatprep.subr.mxu0 0.0
  %1713 = vmatpush1.msra.mxu0 %v1650
  %1714 = vmatprep.subr.mxu0 0.0
  %1715 = vmatpush1.msra.mxu0 %v1651
  %1716 = vmatprep.subr.mxu0 0.0
  %1717 = vmatpush1.msra.mxu0 %v1652
  %1718 = vmatprep.subr.mxu0 0.0
  %1719 = vmatpush1.msra.mxu0 %v1653
  %1720 = vmatprep.subr.mxu0 0.0
  %1721 = vmatpush1.msra.mxu0 %v1654
  %1722 = vmatprep.subr.mxu0 0.0
  %1723 = vmatpush1.msra.mxu0 %v1655
  %1724 = vmatprep.subr.mxu0 0.0
  %1725 = vmatpush1.msra.mxu0 %v1656
  %1726 = vmatprep.subr.mxu0 0.0
  %1727 = vmatpush1.msra.mxu0 0.0
  %1728 = vmatprep.subr.mxu0 0.0
  %1729 = vmatpush1.msra.mxu0 0.0
  %1730 = vmatprep.subr.mxu0 0.0
  %1731 = vmatpush1.msra.mxu0 0.0
  %1732 = vmatprep.subr.mxu0 0.0
  %1733 = vmatpush1.msra.mxu0 0.0
  %1734 = vmatprep.subr.mxu0 0.0
  %1735 = vmatpush1.msra.mxu0 0.0
  %1736 = vmatprep.subr.mxu0 0.0
  %1737 = vmatpush1.msra.mxu0 0.0
  %1738 = vmatprep.subr.mxu0 0.0
  %1739 = vmatpush1.msra.mxu0 0.0
  %1740 = vmatprep.subr.mxu0 0.0
  %1741 = vmatpush1.msra.mxu0 0.0
  %1742 = vmatprep.subr.mxu0 0.0
  %1743 = vmatpush1.msra.mxu0 0.0
  %1744 = vmatprep.subr.mxu0 0.0
  %1745 = vmatpush1.msra.mxu0 0.0
  %1746 = vmatprep.subr.mxu0 0.0
  %1747 = vmatpush1.msra.mxu0 0.0
  %1748 = vmatprep.subr.mxu0 0.0
  %1749 = vmatpush1.msra.mxu0 0.0
  %1750 = vmatprep.subr.mxu0 0.0
  %1751 = vmatpush1.msra.mxu0 0.0
  %1752 = vmatprep.subr.mxu0 0.0
  %1753 = vmatpush1.msra.mxu0 0.0
  %1754 = vmatprep.subr.mxu0 0.0
  %1755 = vmatpush1.msra.mxu0 0.0
  %1756 = vmatprep.subr.mxu0 0.0
  %1757 = vmatpush1.msra.mxu0 0.0
  %1758 = vmatprep.subr.mxu0 0.0
  %1759 = vmatpush1.msra.mxu0 0.0
  %1760 = vmatprep.subr.mxu0 0.0
  %1761 = vmatpush1.msra.mxu0 0.0
  %1762 = vmatprep.subr.mxu0 0.0
  %1763 = vmatpush1.msra.mxu0 0.0
  %1764 = vmatprep.subr.mxu0 0.0
  %1765 = vmatpush1.msra.mxu0 0.0
  %1766 = vmatprep.subr.mxu0 0.0
  %1767 = vmatpush1.msra.mxu0 0.0
  %1768 = vmatprep.subr.mxu0 0.0
  %1769 = vmatpush1.msra.mxu0 0.0
  %1770 = vmatprep.subr.mxu0 0.0
  %1771 = vmatpush1.msra.mxu0 0.0
  %1772 = vmatprep.subr.mxu0 0.0
  %1773 = vmatpush1.msra.mxu0 0.0
  %1774 = vmatprep.mubr.f32.mxu0 0.0
  %1775 = vmatmul.mubr.f32.gmra.mrb[0].mxu0 %v85
  %v1776 = vpop.f32.mrb[0].mxu0
  %v1777 = vadd.f32 %v1709, %v1776
  %v1778 = vpop.f32.mrb[0].mxu0
  %1779 = vdwg.mxu0
  %v1780 = vtanh.pop %v1777
  %v1782 = vrot.slane %v1709, 1
  %v1785 = vsel %vm83, %v1780, 0
  %1787 = vmatprep.subr.mxu0 0.0
  %1788 = vmatpush1.msra.mxu0 %v1666
  %1789 = vmatprep.subr.mxu0 0.0
  %1790 = vmatpush1.msra.mxu0 %v1667
  %1791 = vmatprep.subr.mxu0 0.0
  %1792 = vmatpush1.msra.mxu0 %v1668
  %1793 = vmatprep.subr.mxu0 0.0
  %1794 = vmatpush1.msra.mxu0 %v1669
  %1795 = vmatprep.subr.mxu0 0.0
  %1796 = vmatpush1.msra.mxu0 %v1670
  %1797 = vmatprep.subr.mxu0 0.0
  %1798 = vmatpush1.msra.mxu0 %v1671
  %1799 = vmatprep.subr.mxu0 0.0
  %1800 = vmatpush1.msra.mxu0 %v1672
  %1801 = vmatprep.subr.mxu0 0.0
  %1802 = vmatpush1.msra.mxu0 %v1673
  %1803 = vmatprep.subr.mxu0 0.0
  %1804 = vmatpush1.msra.mxu0 0.0
  %1805 = vmatprep.subr.mxu0 0.0
  %1806 = vmatpush1.msra.mxu0 0.0
  %1807 = vmatprep.subr.mxu0 0.0
  %1808 = vmatpush1.msra.mxu0 0.0
  %1809 = vmatprep.subr.mxu0 0.0
  %1810 = vmatpush1.msra.mxu0 0.0
  %1811 = vmatprep.subr.mxu0 0.0
  %1812 = vmatpush1.msra.mxu0 0.0
  %1813 = vmatprep.subr.mxu0 0.0
  %1814 = vmatpush1.msra.mxu0 0.0
  %1815 = vmatprep.subr.mxu0 0.0
  %1816 = vmatpush1.msra.mxu0 0.0
  %1817 = vmatprep.subr.mxu0 0.0
  %1818 = vmatpush1.msra.mxu0 0.0
  %1819 = vmatprep.subr.mxu0 0.0
  %1820 = vmatpush1.msra.mxu0 0.0
  %1821 = vmatprep.subr.mxu0 0.0
  %1822 = vmatpush1.msra.mxu0 0.0
  %1823 = vmatprep.subr.mxu0 0.0
  %1824 = vmatpush1.msra.mxu0 0.0
  %1825 = vmatprep.subr.mxu0 0.0
  %1826 = vmatpush1.msra.mxu0 0.0
  %1827 = vmatprep.subr.mxu0 0.0
  %1828 = vmatpush1.msra.mxu0 0.0
  %1829 = vmatprep.subr.mxu0 0.0
  %1830 = vmatpush1.msra.mxu0 0.0
  %1831 = vmatprep.subr.mxu0 0.0
  %1832 = vmatpush1.msra.mxu0 0.0
  %1833 = vmatprep.subr.mxu0 0.0
  %1834 = vmatpush1.msra.mxu0 0.0
  %1835 = vmatprep.subr.mxu0 0.0
  %1836 = vmatpush1.msra.mxu0 0.0
  %1837 = vmatprep.subr.mxu0 0.0
  %1838 = vmatpush1.msra.mxu0 0.0
  %1839 = vmatprep.subr.mxu0 0.0
  %1840 = vmatpush1.msra.mxu0 0.0
  %1841 = vmatprep.subr.mxu0 0.0
  %1842 = vmatpush1.msra.mxu0 0.0
  %1843 = vmatprep.subr.mxu0 0.0
  %1844 = vmatpush1.msra.mxu0 0.0
  %1845 = vmatprep.subr.mxu0 0.0
  %1846 = vmatpush1.msra.mxu0 0.0
  %1847 = vmatprep.subr.mxu0 0.0
  %1848 = vmatpush1.msra.mxu0 0.0
  %1849 = vmatprep.subr.mxu0 0.0
  %1850 = vmatpush1.msra.mxu0 0.0
  %1851 = vmatprep.mubr.f32.mxu0 0.0
  %1852 = vmatmul.mubr.f32.gmra.mrb[0].mxu0 %v1785
  %v1853 = vpop.f32.mrb[0].mxu0
  %v1854 = vadd.f32 %v1782, %v1853
  %v1855 = vpop.f32.mrb[0].mxu0
  %1856 = vdwg.mxu0
  %v1857 = vtanh.pop %v1854
  %v1858 = vrot.slane %v1709, 2
  %v1861 = vsel %vm83, %v1857, 0
  %1863 = vmatprep.subr.mxu0 0.0
  %1864 = vmatpush1.msra.mxu0 %v1683
  %1865 = vmatprep.subr.mxu0 0.0
  %1866 = vmatpush1.msra.mxu0 %v1684
  %1867 = vmatprep.subr.mxu0 0.0
  %1868 = vmatpush1.msra.mxu0 %v1685
  %1869 = vmatprep.subr.mxu0 0.0
  %1870 = vmatpush1.msra.mxu0 %v1686
  %1871 = vmatprep.subr.mxu0 0.0
  %1872 = vmatpush1.msra.mxu0 %v1687
  %1873 = vmatprep.subr.mxu0 0.0
  %1874 = vmatpush1.msra.mxu0 %v1688
  %1875 = vmatprep.subr.mxu0 0.0
  %1876 = vmatpush1.msra.mxu0 %v1689
  %1877 = vmatprep.subr.mxu0 0.0
  %1878 = vmatpush1.msra.mxu0 %v1690
  %1879 = vmatprep.subr.mxu0 0.0
  %1880 = vmatpush1.msra.mxu0 0.0
  %1881 = vmatprep.subr.mxu0 0.0
  %1882 = vmatpush1.msra.mxu0 0.0
  %1883 = vmatprep.subr.mxu0 0.0
  %1884 = vmatpush1.msra.mxu0 0.0
  %1885 = vmatprep.subr.mxu0 0.0
  %1886 = vmatpush1.msra.mxu0 0.0
  %1887 = vmatprep.subr.mxu0 0.0
  %1888 = vmatpush1.msra.mxu0 0.0
  %1889 = vmatprep.subr.mxu0 0.0
  %1890 = vmatpush1.msra.mxu0 0.0
  %1891 = vmatprep.subr.mxu0 0.0
  %1892 = vmatpush1.msra.mxu0 0.0
  %1893 = vmatprep.subr.mxu0 0.0
  %1894 = vmatpush1.msra.mxu0 0.0
  %1895 = vmatprep.subr.mxu0 0.0
  %1896 = vmatpush1.msra.mxu0 0.0
  %1897 = vmatprep.subr.mxu0 0.0
  %1898 = vmatpush1.msra.mxu0 0.0
  %1899 = vmatprep.subr.mxu0 0.0
  %1900 = vmatpush1.msra.mxu0 0.0
  %1901 = vmatprep.subr.mxu0 0.0
  %1902 = vmatpush1.msra.mxu0 0.0
  %1903 = vmatprep.subr.mxu0 0.0
  %1904 = vmatpush1.msra.mxu0 0.0
  %1905 = vmatprep.subr.mxu0 0.0
  %1906 = vmatpush1.msra.mxu0 0.0
  %1907 = vmatprep.subr.mxu0 0.0
  %1908 = vmatpush1.msra.mxu0 0.0
  %1909 = vmatprep.subr.mxu0 0.0
  %1910 = vmatpush1.msra.mxu0 0.0
  %1911 = vmatprep.subr.mxu0 0.0
  %1912 = vmatpush1.msra.mxu0 0.0
  %1913 = vmatprep.subr.mxu0 0.0
  %1914 = vmatpush1.msra.mxu0 0.0
  %1915 = vmatprep.subr.mxu0 0.0
  %1916 = vmatpush1.msra.mxu0 0.0
  %1917 = vmatprep.subr.mxu0 0.0
  %1918 = vmatpush1.msra.mxu0 0.0
  %1919 = vmatprep.subr.mxu0 0.0
  %1920 = vmatpush1.msra.mxu0 0.0
  %1921 = vmatprep.subr.mxu0 0.0
  %1922 = vmatpush1.msra.mxu0 0.0
  %1923 = vmatprep.subr.mxu0 0.0
  %1924 = vmatpush1.msra.mxu0 0.0
  %1925 = vmatprep.subr.mxu0 0.0
  %1926 = vmatpush1.msra.mxu0 0.0
  %1927 = vmatprep.mubr.f32.mxu0 0.0
  %1928 = vmatmul.mubr.f32.gmra.mrb[0].mxu0 %v1861
  %v1929 = vpop.f32.mrb[0].mxu0
  %v1930 = vadd.f32 %v1858, %v1929
  %v1931 = vpop.f32.mrb[0].mxu0
  %1932 = vdwg.mxu0
  %v1933 = vtanh.pop %v1930
  %v1934 = vrot.slane %v1709, 3
  %v1937 = vsel %vm83, %v1933, 0
  %1939 = vmatprep.subr.mxu0 0.0
  %1940 = vmatpush1.msra.mxu0 %v1700
  %1941 = vmatprep.subr.mxu0 0.0
  %1942 = vmatpush1.msra.mxu0 %v1701
  %1943 = vmatprep.subr.mxu0 0.0
  %1944 = vmatpush1.msra.mxu0 %v1702
  %1945 = vmatprep.subr.mxu0 0.0
  %1946 = vmatpush1.msra.mxu0 %v1703
  %1947 = vmatprep.subr.mxu0 0.0
  %1948 = vmatpush1.msra.mxu0 %v1704
  %1949 = vmatprep.subr.mxu0 0.0
  %1950 = vmatpush1.msra.mxu0 %v1705
  %1951 = vmatprep.subr.mxu0 0.0
  %1952 = vmatpush1.msra.mxu0 %v1706
  %1953 = vmatprep.subr.mxu0 0.0
  %1954 = vmatpush1.msra.mxu0 %v1707
  %1955 = vmatprep.subr.mxu0 0.0
  %1956 = vmatpush1.msra.mxu0 0.0
  %1957 = vmatprep.subr.mxu0 0.0
  %1958 = vmatpush1.msra.mxu0 0.0
  %1959 = vmatprep.subr.mxu0 0.0
  %1960 = vmatpush1.msra.mxu0 0.0
  %1961 = vmatprep.subr.mxu0 0.0
  %1962 = vmatpush1.msra.mxu0 0.0
  %1963 = vmatprep.subr.mxu0 0.0
  %1964 = vmatpush1.msra.mxu0 0.0
  %1965 = vmatprep.subr.mxu0 0.0
  %1966 = vmatpush1.msra.mxu0 0.0
  %1967 = vmatprep.subr.mxu0 0.0
  %1968 = vmatpush1.msra.mxu0 0.0
  %1969 = vmatprep.subr.mxu0 0.0
  %1970 = vmatpush1.msra.mxu0 0.0
  %1971 = vmatprep.subr.mxu0 0.0
  %1972 = vmatpush1.msra.mxu0 0.0
  %1973 = vmatprep.subr.mxu0 0.0
  %1974 = vmatpush1.msra.mxu0 0.0
  %1975 = vmatprep.subr.mxu0 0.0
  %1976 = vmatpush1.msra.mxu0 0.0
  %1977 = vmatprep.subr.mxu0 0.0
  %1978 = vmatpush1.msra.mxu0 0.0
  %1979 = vmatprep.subr.mxu0 0.0
  %1980 = vmatpush1.msra.mxu0 0.0
  %1981 = vmatprep.subr.mxu0 0.0
  %1982 = vmatpush1.msra.mxu0 0.0
  %1983 = vmatprep.subr.mxu0 0.0
  %1984 = vmatpush1.msra.mxu0 0.0
  %1985 = vmatprep.subr.mxu0 0.0
  %1986 = vmatpush1.msra.mxu0 0.0
  %1987 = vmatprep.subr.mxu0 0.0
  %1988 = vmatpush1.msra.mxu0 0.0
  %1989 = vmatprep.subr.mxu0 0.0
  %1990 = vmatpush1.msra.mxu0 0.0
  %1991 = vmatprep.subr.mxu0 0.0
  %1992 = vmatpush1.msra.mxu0 0.0
  %1993 = vmatprep.subr.mxu0 0.0
  %1994 = vmatpush1.msra.mxu0 0.0
  %1995 = vmatprep.subr.mxu0 0.0
  %1996 = vmatpush1.msra.mxu0 0.0
  %1997 = vmatprep.subr.mxu0 0.0
  %1998 = vmatpush1.msra.mxu0 0.0
  %1999 = vmatprep.subr.mxu0 0.0
  %2000 = vmatpush1.msra.mxu0 0.0
  %2001 = vmatprep.subr.mxu0 0.0
  %2002 = vmatpush1.msra.mxu0 0.0
  %2003 = vmatprep.mubr.f32.mxu0 0.0
  %2004 = vmatmul.mubr.f32.gmra.mrb[0].mxu0 %v1937
  %v2005 = vpop.f32.mrb[0].mxu0
  %v2006 = vadd.f32 %v1934, %v2005
  %v2007 = vpop.f32.mrb[0].mxu0
  %2008 = vdwg.mxu0
  %v2009 = vtanh.pop %v2006
  %v2010 = vrot.slane %v1709, 4
  %v2012 = vmul.f32 %v2009, %v2010
  %v2013 = vsel %vm390, %v2012, 0.0
  %2014 = vadd.xlane.f32.xlu0 %v2013
  %v2015 = vpop.xlane.xlu0 %2014
  %v2016 = vrot.slane %v1709, 5
  %v2018 = vadd.f32 %v2015, %v2016
  %v2019 = vmul.f32 %v2009, %v2009
  %v2020 = vsub.f32 1.0, %v2019
  %v2022 = vrot.slane %v2020, 4
  %v2024 = vmul.f32 %v1709, %v2022
  %v2026 = vrot.slane %v2024, 4
  %v2027 = vsel %vm83, %v2026, 0
  %v2030 = vsel %vm83, %v1700, 0
  %v2033 = vsel %vm83, %v1701, 0
  %v2036 = vsel %vm83, %v1702, 0
  %v2039 = vsel %vm83, %v1703, 0
  %v2042 = vsel %vm83, %v1704, 0
  %v2045 = vsel %vm83, %v1705, 0
  %v2048 = vsel %vm83, %v1706, 0
  %v2051 = vsel %vm83, %v1707, 0
  %2053 = vmatprep.subr.mxu0 0.0
  %2054 = vmatpush1.xpose.msra.mxu0 %v2030
  %2055 = vmatprep.subr.mxu0 0.0
  %2056 = vmatpush1.xpose.msra.mxu0 %v2033
  %2057 = vmatprep.subr.mxu0 0.0
  %2058 = vmatpush1.xpose.msra.mxu0 %v2036
  %2059 = vmatprep.subr.mxu0 0.0
  %2060 = vmatpush1.xpose.msra.mxu0 %v2039
  %2061 = vmatprep.subr.mxu0 0.0
  %2062 = vmatpush1.xpose.msra.mxu0 %v2042
  %2063 = vmatprep.subr.mxu0 0.0
  %2064 = vmatpush1.xpose.msra.mxu0 %v2045
  %2065 = vmatprep.subr.mxu0 0.0
  %2066 = vmatpush1.xpose.msra.mxu0 %v2048
  %2067 = vmatprep.subr.mxu0 0.0
  %2068 = vmatpush1.xpose.msra.mxu0 %v2051
  %2069 = vmatprep.subr.mxu0 0.0
  %2070 = vmatpush1.xpose.msra.mxu0 0.0
  %2071 = vmatprep.subr.mxu0 0.0
  %2072 = vmatpush1.xpose.msra.mxu0 0.0
  %2073 = vmatprep.subr.mxu0 0.0
  %2074 = vmatpush1.xpose.msra.mxu0 0.0
  %2075 = vmatprep.subr.mxu0 0.0
  %2076 = vmatpush1.xpose.msra.mxu0 0.0
  %2077 = vmatprep.subr.mxu0 0.0
  %2078 = vmatpush1.xpose.msra.mxu0 0.0
  %2079 = vmatprep.subr.mxu0 0.0
  %2080 = vmatpush1.xpose.msra.mxu0 0.0
  %2081 = vmatprep.subr.mxu0 0.0
  %2082 = vmatpush1.xpose.msra.mxu0 0.0
  %2083 = vmatprep.subr.mxu0 0.0
  %2084 = vmatpush1.xpose.msra.mxu0 0.0
  %2085 = vmatprep.subr.mxu0 0.0
  %2086 = vmatpush1.xpose.msra.mxu0 0.0
  %2087 = vmatprep.subr.mxu0 0.0
  %2088 = vmatpush1.xpose.msra.mxu0 0.0
  %2089 = vmatprep.subr.mxu0 0.0
  %2090 = vmatpush1.xpose.msra.mxu0 0.0
  %2091 = vmatprep.subr.mxu0 0.0
  %2092 = vmatpush1.xpose.msra.mxu0 0.0
  %2093 = vmatprep.subr.mxu0 0.0
  %2094 = vmatpush1.xpose.msra.mxu0 0.0
  %2095 = vmatprep.subr.mxu0 0.0
  %2096 = vmatpush1.xpose.msra.mxu0 0.0
  %2097 = vmatprep.subr.mxu0 0.0
  %2098 = vmatpush1.xpose.msra.mxu0 0.0
  %2099 = vmatprep.subr.mxu0 0.0
  %2100 = vmatpush1.xpose.msra.mxu0 0.0
  %2101 = vmatprep.subr.mxu0 0.0
  %2102 = vmatpush1.xpose.msra.mxu0 0.0
  %2103 = vmatprep.subr.mxu0 0.0
  %2104 = vmatpush1.xpose.msra.mxu0 0.0
  %2105 = vmatprep.subr.mxu0 0.0
  %2106 = vmatpush1.xpose.msra.mxu0 0.0
  %2107 = vmatprep.subr.mxu0 0.0
  %2108 = vmatpush1.xpose.msra.mxu0 0.0
  %2109 = vmatprep.subr.mxu0 0.0
  %2110 = vmatpush1.xpose.msra.mxu0 0.0
  %2111 = vmatprep.subr.mxu0 0.0
  %2112 = vmatpush1.xpose.msra.mxu0 0.0
  %2113 = vmatprep.subr.mxu0 0.0
  %2114 = vmatpush1.xpose.msra.mxu0 0.0
  %2115 = vmatprep.subr.mxu0 0.0
  %2116 = vmatpush1.xpose.msra.mxu0 0.0
  %2117 = vmatprep.mubr.f32.mxu0 0.0
  %2118 = vmatmul.mubr.f32.gmra.mrb[0].mxu0 %v2027
  %v2119 = vpop.f32.mrb[0].mxu0
  %v2120 = vadd.f32 0.0, %v2119
  %v2121 = vpop.f32.mrb[0].mxu0
  %2122 = vdwg.mxu0
  %v2123 = vmul.f32 %v1933, %v1933
  %v2124 = vsub.f32 1.0, %v2123
  %v2125 = vmul.f32 %v2120, %v2124
  %v2127 = vsel %vm83, %v2125, 0
  %v2130 = vsel %vm83, %v1683, 0
  %v2133 = vsel %vm83, %v1684, 0
  %v2136 = vsel %vm83, %v1685, 0
  %v2139 = vsel %vm83, %v1686, 0
  %v2142 = vsel %vm83, %v1687, 0
  %v2145 = vsel %vm83, %v1688, 0
  %v2148 = vsel %vm83, %v1689, 0
  %v2151 = vsel %vm83, %v1690, 0
  %2153 = vmatprep.subr.mxu0 0.0
  %2154 = vmatpush1.xpose.msra.mxu0 %v2130
  %2155 = vmatprep.subr.mxu0 0.0
  %2156 = vmatpush1.xpose.msra.mxu0 %v2133
  %2157 = vmatprep.subr.mxu0 0.0
  %2158 = vmatpush1.xpose.msra.mxu0 %v2136
  %2159 = vmatprep.subr.mxu0 0.0
  %2160 = vmatpush1.xpose.msra.mxu0 %v2139
  %2161 = vmatprep.subr.mxu0 0.0
  %2162 = vmatpush1.xpose.msra.mxu0 %v2142
  %2163 = vmatprep.subr.mxu0 0.0
  %2164 = vmatpush1.xpose.msra.mxu0 %v2145
  %2165 = vmatprep.subr.mxu0 0.0
  %2166 = vmatpush1.xpose.msra.mxu0 %v2148
  %2167 = vmatprep.subr.mxu0 0.0
  %2168 = vmatpush1.xpose.msra.mxu0 %v2151
  %2169 = vmatprep.subr.mxu0 0.0
  %2170 = vmatpush1.xpose.msra.mxu0 0.0
  %2171 = vmatprep.subr.mxu0 0.0
  %2172 = vmatpush1.xpose.msra.mxu0 0.0
  %2173 = vmatprep.subr.mxu0 0.0
  %2174 = vmatpush1.xpose.msra.mxu0 0.0
  %2175 = vmatprep.subr.mxu0 0.0
  %2176 = vmatpush1.xpose.msra.mxu0 0.0
  %2177 = vmatprep.subr.mxu0 0.0
  %2178 = vmatpush1.xpose.msra.mxu0 0.0
  %2179 = vmatprep.subr.mxu0 0.0
  %2180 = vmatpush1.xpose.msra.mxu0 0.0
  %2181 = vmatprep.subr.mxu0 0.0
  %2182 = vmatpush1.xpose.msra.mxu0 0.0
  %2183 = vmatprep.subr.mxu0 0.0
  %2184 = vmatpush1.xpose.msra.mxu0 0.0
  %2185 = vmatprep.subr.mxu0 0.0
  %2186 = vmatpush1.xpose.msra.mxu0 0.0
  %2187 = vmatprep.subr.mxu0 0.0
  %2188 = vmatpush1.xpose.msra.mxu0 0.0
  %2189 = vmatprep.subr.mxu0 0.0
  %2190 = vmatpush1.xpose.msra.mxu0 0.0
  %2191 = vmatprep.subr.mxu0 0.0
  %2192 = vmatpush1.xpose.msra.mxu0 0.0
  %2193 = vmatprep.subr.mxu0 0.0
  %2194 = vmatpush1.xpose.msra.mxu0 0.0
  %2195 = vmatprep.subr.mxu0 0.0
  %2196 = vmatpush1.xpose.msra.mxu0 0.0
  %2197 = vmatprep.subr.mxu0 0.0
  %2198 = vmatpush1.xpose.msra.mxu0 0.0
  %2199 = vmatprep.subr.mxu0 0.0
  %2200 = vmatpush1.xpose.msra.mxu0 0.0
  %2201 = vmatprep.subr.mxu0 0.0
  %2202 = vmatpush1.xpose.msra.mxu0 0.0
  %2203 = vmatprep.subr.mxu0 0.0
  %2204 = vmatpush1.xpose.msra.mxu0 0.0
  %2205 = vmatprep.subr.mxu0 0.0
  %2206 = vmatpush1.xpose.msra.mxu0 0.0
  %2207 = vmatprep.subr.mxu0 0.0
  %2208 = vmatpush1.xpose.msra.mxu0 0.0
  %2209 = vmatprep.subr.mxu0 0.0
  %2210 = vmatpush1.xpose.msra.mxu0 0.0
  %2211 = vmatprep.subr.mxu0 0.0
  %2212 = vmatpush1.xpose.msra.mxu0 0.0
  %2213 = vmatprep.subr.mxu0 0.0
  %2214 = vmatpush1.xpose.msra.mxu0 0.0
  %2215 = vmatprep.subr.mxu0 0.0
  %2216 = vmatpush1.xpose.msra.mxu0 0.0
  %2217 = vmatprep.mubr.f32.mxu0 0.0
  %2218 = vmatmul.mubr.f32.gmra.mrb[0].mxu0 %v2127
  %v2219 = vpop.f32.mrb[0].mxu0
  %v2220 = vadd.f32 0.0, %v2219
  %v2221 = vpop.f32.mrb[0].mxu0
  %2222 = vdwg.mxu0
  %v2223 = vmul.f32 %v1857, %v1857
  %v2224 = vsub.f32 1.0, %v2223
  %v2225 = vmul.f32 %v2220, %v2224
  %v2227 = vsel %vm83, %v2225, 0
  %v2230 = vsel %vm83, %v1666, 0
  %v2233 = vsel %vm83, %v1667, 0
  %v2236 = vsel %vm83, %v1668, 0
  %v2239 = vsel %vm83, %v1669, 0
  %v2242 = vsel %vm83, %v1670, 0
  %v2245 = vsel %vm83, %v1671, 0
  %v2248 = vsel %vm83, %v1672, 0
  %v2251 = vsel %vm83, %v1673, 0
  %2253 = vmatprep.subr.mxu0 0.0
  %2254 = vmatpush1.xpose.msra.mxu0 %v2230
  %2255 = vmatprep.subr.mxu0 0.0
  %2256 = vmatpush1.xpose.msra.mxu0 %v2233
  %2257 = vmatprep.subr.mxu0 0.0
  %2258 = vmatpush1.xpose.msra.mxu0 %v2236
  %2259 = vmatprep.subr.mxu0 0.0
  %2260 = vmatpush1.xpose.msra.mxu0 %v2239
  %2261 = vmatprep.subr.mxu0 0.0
  %2262 = vmatpush1.xpose.msra.mxu0 %v2242
  %2263 = vmatprep.subr.mxu0 0.0
  %2264 = vmatpush1.xpose.msra.mxu0 %v2245
  %2265 = vmatprep.subr.mxu0 0.0
  %2266 = vmatpush1.xpose.msra.mxu0 %v2248
  %2267 = vmatprep.subr.mxu0 0.0
  %2268 = vmatpush1.xpose.msra.mxu0 %v2251
  %2269 = vmatprep.subr.mxu0 0.0
  %2270 = vmatpush1.xpose.msra.mxu0 0.0
  %2271 = vmatprep.subr.mxu0 0.0
  %2272 = vmatpush1.xpose.msra.mxu0 0.0
  %2273 = vmatprep.subr.mxu0 0.0
  %2274 = vmatpush1.xpose.msra.mxu0 0.0
  %2275 = vmatprep.subr.mxu0 0.0
  %2276 = vmatpush1.xpose.msra.mxu0 0.0
  %2277 = vmatprep.subr.mxu0 0.0
  %2278 = vmatpush1.xpose.msra.mxu0 0.0
  %2279 = vmatprep.subr.mxu0 0.0
  %2280 = vmatpush1.xpose.msra.mxu0 0.0
  %2281 = vmatprep.subr.mxu0 0.0
  %2282 = vmatpush1.xpose.msra.mxu0 0.0
  %2283 = vmatprep.subr.mxu0 0.0
  %2284 = vmatpush1.xpose.msra.mxu0 0.0
  %2285 = vmatprep.subr.mxu0 0.0
  %2286 = vmatpush1.xpose.msra.mxu0 0.0
  %2287 = vmatprep.subr.mxu0 0.0
  %2288 = vmatpush1.xpose.msra.mxu0 0.0
  %2289 = vmatprep.subr.mxu0 0.0
  %2290 = vmatpush1.xpose.msra.mxu0 0.0
  %2291 = vmatprep.subr.mxu0 0.0
  %2292 = vmatpush1.xpose.msra.mxu0 0.0
  %2293 = vmatprep.subr.mxu0 0.0
  %2294 = vmatpush1.xpose.msra.mxu0 0.0
  %2295 = vmatprep.subr.mxu0 0.0
  %2296 = vmatpush1.xpose.msra.mxu0 0.0
  %2297 = vmatprep.subr.mxu0 0.0
  %2298 = vmatpush1.xpose.msra.mxu0 0.0
  %2299 = vmatprep.subr.mxu0 0.0
  %2300 = vmatpush1.xpose.msra.mxu0 0.0
  %2301 = vmatprep.subr.mxu0 0.0
  %2302 = vmatpush1.xpose.msra.mxu0 0.0
  %2303 = vmatprep.subr.mxu0 0.0
  %2304 = vmatpush1.xpose.msra.mxu0 0.0
  %2305 = vmatprep.subr.mxu0 0.0
  %2306 = vmatpush1.xpose.msra.mxu0 0.0
  %2307 = vmatprep.subr.mxu0 0.0
  %2308 = vmatpush1.xpose.msra.mxu0 0.0
  %2309 = vmatprep.subr.mxu0 0.0
  %2310 = vmatpush1.xpose.msra.mxu0 0.0
  %2311 = vmatprep.subr.mxu0 0.0
  %2312 = vmatpush1.xpose.msra.mxu0 0.0
  %2313 = vmatprep.subr.mxu0 0.0
  %2314 = vmatpush1.xpose.msra.mxu0 0.0
  %2315 = vmatprep.subr.mxu0 0.0
  %2316 = vmatpush1.xpose.msra.mxu0 0.0
  %2317 = vmatprep.mubr.f32.mxu0 0.0
  %2318 = vmatmul.mubr.f32.gmra.mrb[0].mxu0 %v2227
  %v2319 = vpop.f32.mrb[0].mxu0
  %v2320 = vadd.f32 0.0, %v2319
  %v2321 = vpop.f32.mrb[0].mxu0
  %2322 = vdwg.mxu0
  %v2323 = vmul.f32 %v1780, %v1780
  %v2324 = vsub.f32 1.0, %v2323
  %v2325 = vmul.f32 %v2320, %v2324
  %v2327 = vsel %vm83, %v2325, 0
  %v2330 = vsel %vm83, %v1649, 0
  %v2333 = vsel %vm83, %v1650, 0
  %v2336 = vsel %vm83, %v1651, 0
  %v2339 = vsel %vm83, %v1652, 0
  %v2342 = vsel %vm83, %v1653, 0
  %v2345 = vsel %vm83, %v1654, 0
  %v2348 = vsel %vm83, %v1655, 0
  %v2351 = vsel %vm83, %v1656, 0
  %2353 = vmatprep.subr.mxu0 0.0
  %2354 = vmatpush1.xpose.msra.mxu0 %v2330
  %2355 = vmatprep.subr.mxu0 0.0
  %2356 = vmatpush1.xpose.msra.mxu0 %v2333
  %2357 = vmatprep.subr.mxu0 0.0
  %2358 = vmatpush1.xpose.msra.mxu0 %v2336
  %2359 = vmatprep.subr.mxu0 0.0
  %2360 = vmatpush1.xpose.msra.mxu0 %v2339
  %2361 = vmatprep.subr.mxu0 0.0
  %2362 = vmatpush1.xpose.msra.mxu0 %v2342
  %2363 = vmatprep.subr.mxu0 0.0
  %2364 = vmatpush1.xpose.msra.mxu0 %v2345
  %2365 = vmatprep.subr.mxu0 0.0
  %2366 = vmatpush1.xpose.msra.mxu0 %v2348
  %2367 = vmatprep.subr.mxu0 0.0
  %2368 = vmatpush1.xpose.msra.mxu0 %v2351
  %2369 = vmatprep.subr.mxu0 0.0
  %2370 = vmatpush1.xpose.msra.mxu0 0.0
  %2371 = vmatprep.subr.mxu0 0.0
  %2372 = vmatpush1.xpose.msra.mxu0 0.0
  %2373 = vmatprep.subr.mxu0 0.0
  %2374 = vmatpush1.xpose.msra.mxu0 0.0
  %2375 = vmatprep.subr.mxu0 0.0
  %2376 = vmatpush1.xpose.msra.mxu0 0.0
  %2377 = vmatprep.subr.mxu0 0.0
  %2378 = vmatpush1.xpose.msra.mxu0 0.0
  %2379 = vmatprep.subr.mxu0 0.0
  %2380 = vmatpush1.xpose.msra.mxu0 0.0
  %2381 = vmatprep.subr.mxu0 0.0
  %2382 = vmatpush1.xpose.msra.mxu0 0.0
  %2383 = vmatprep.subr.mxu0 0.0
  %2384 = vmatpush1.xpose.msra.mxu0 0.0
  %2385 = vmatprep.subr.mxu0 0.0
  %2386 = vmatpush1.xpose.msra.mxu0 0.0
  %2387 = vmatprep.subr.mxu0 0.0
  %2388 = vmatpush1.xpose.msra.mxu0 0.0
  %2389 = vmatprep.subr.mxu0 0.0
  %2390 = vmatpush1.xpose.msra.mxu0 0.0
  %2391 = vmatprep.subr.mxu0 0.0
  %2392 = vmatpush1.xpose.msra.mxu0 0.0
  %2393 = vmatprep.subr.mxu0 0.0
  %2394 = vmatpush1.xpose.msra.mxu0 0.0
  %2395 = vmatprep.subr.mxu0 0.0
  %2396 = vmatpush1.xpose.msra.mxu0 0.0
  %2397 = vmatprep.subr.mxu0 0.0
  %2398 = vmatpush1.xpose.msra.mxu0 0.0
  %2399 = vmatprep.subr.mxu0 0.0
  %2400 = vmatpush1.xpose.msra.mxu0 0.0
  %2401 = vmatprep.subr.mxu0 0.0
  %2402 = vmatpush1.xpose.msra.mxu0 0.0
  %2403 = vmatprep.subr.mxu0 0.0
  %2404 = vmatpush1.xpose.msra.mxu0 0.0
  %2405 = vmatprep.subr.mxu0 0.0
  %2406 = vmatpush1.xpose.msra.mxu0 0.0
  %2407 = vmatprep.subr.mxu0 0.0
  %2408 = vmatpush1.xpose.msra.mxu0 0.0
  %2409 = vmatprep.subr.mxu0 0.0
  %2410 = vmatpush1.xpose.msra.mxu0 0.0
  %2411 = vmatprep.subr.mxu0 0.0
  %2412 = vmatpush1.xpose.msra.mxu0 0.0
  %2413 = vmatprep.subr.mxu0 0.0
  %2414 = vmatpush1.xpose.msra.mxu0 0.0
  %2415 = vmatprep.subr.mxu0 0.0
  %2416 = vmatpush1.xpose.msra.mxu0 0.0
  %2417 = vmatprep.mubr.f32.mxu0 0.0
  %2418 = vmatmul.mubr.f32.gmra.mrb[0].mxu0 %v2327
  %v2419 = vpop.f32.mrb[0].mxu0
  %v2420 = vadd.f32 0.0, %v2419
  %v2421 = vpop.f32.mrb[0].mxu0
  %2422 = vdwg.mxu0
  %v2425 = vunpack.c.l.s4 1966171168
  %v2426 = vunpack.c.0.s8 %v2425
  %v2427 = vlaneseq
  %v2428 = vshrl.u32 %v2427, 7
  %v2429 = vsub.s32 %v2426, %v2428
  %v2430 = vrot.slane %v2420, %v2429
  %v2432 = vunpack.c.l.s4 1966171168
  %v2433 = vunpack.c.0.s8 %v2432
  %v2434 = vlaneseq
  %v2435 = vshrl.u32 %v2434, 7
  %v2436 = vsub.s32 %v2433, %v2435
  %v2437 = vrot.slane %v2430, %v2436
  %2438 = vrot.lane.b32.xlu0 %v2437, 120
  %v2439 = vpop.permute.xlu0 %2438
  %v2441 = vmul.f32 %v14, %v2439
  %2442 = vrot.lane.b32.xlu0 %v2437, 8
  %v2443 = vpop.permute.xlu0 %2442
  %v2445 = vmul.f32 %v14, %v2443
  %2447 = vrot.lane.b32.xlu0 %v2445, 120
  %v2448 = vpop.permute.xlu0 %2447
  %v2450 = vsub.f32 %v2441, %v2448
  %s2451 = scalar_lea.vmem %s1, 96
  %v2452 = vld [vmem:[%s2451] sm:$0xf]
  %v2453 = vld [vmem:[%s2451 + $0x4] sm:$0xf]
  %v2454 = vld [vmem:[%s2451 + $0x8] sm:$0xf]
  %v2455 = vld [vmem:[%s2451 + $0xc] sm:$0xf]
  %v2456 = vld [vmem:[%s2451 + $0x10] sm:$0xf]
  %v2457 = vld [vmem:[%s2451 + $0x14] sm:$0xf]
  %v2458 = vld [vmem:[%s2451 + $0x18] sm:$0xf]
  %v2459 = vld [vmem:[%s2451 + $0x1c] sm:$0xf]
  %v2460 = vunpack.c.l.bf16 %v2452
  %v2461 = vunpack.c.l.bf16 %v2453
  %v2462 = vunpack.c.l.bf16 %v2454
  %v2463 = vunpack.c.l.bf16 %v2455
  %v2464 = vunpack.c.l.bf16 %v2456
  %v2465 = vunpack.c.l.bf16 %v2457
  %v2466 = vunpack.c.l.bf16 %v2458
  %v2467 = vunpack.c.l.bf16 %v2459
  %s2468 = scalar_lea.vmem %s1, 224
  %v2469 = vld [vmem:[%s2468] sm:$0xf]
  %v2470 = vld [vmem:[%s2468 + $0x4] sm:$0xf]
  %v2471 = vld [vmem:[%s2468 + $0x8] sm:$0xf]
  %v2472 = vld [vmem:[%s2468 + $0xc] sm:$0xf]
  %v2473 = vld [vmem:[%s2468 + $0x10] sm:$0xf]
  %v2474 = vld [vmem:[%s2468 + $0x14] sm:$0xf]
  %v2475 = vld [vmem:[%s2468 + $0x18] sm:$0xf]
  %v2476 = vld [vmem:[%s2468 + $0x1c] sm:$0xf]
  %v2477 = vunpack.c.l.bf16 %v2469
  %v2478 = vunpack.c.l.bf16 %v2470
  %v2479 = vunpack.c.l.bf16 %v2471
  %v2480 = vunpack.c.l.bf16 %v2472
  %v2481 = vunpack.c.l.bf16 %v2473
  %v2482 = vunpack.c.l.bf16 %v2474
  %v2483 = vunpack.c.l.bf16 %v2475
  %v2484 = vunpack.c.l.bf16 %v2476
  %s2485 = scalar_lea.vmem %s1, 352
  %v2486 = vld [vmem:[%s2485] sm:$0xf]
  %v2487 = vld [vmem:[%s2485 + $0x4] sm:$0xf]
  %v2488 = vld [vmem:[%s2485 + $0x8] sm:$0xf]
  %v2489 = vld [vmem:[%s2485 + $0xc] sm:$0xf]
  %v2490 = vld [vmem:[%s2485 + $0x10] sm:$0xf]
  %v2491 = vld [vmem:[%s2485 + $0x14] sm:$0xf]
  %v2492 = vld [vmem:[%s2485 + $0x18] sm:$0xf]
  %v2493 = vld [vmem:[%s2485 + $0x1c] sm:$0xf]
  %v2494 = vunpack.c.l.bf16 %v2486
  %v2495 = vunpack.c.l.bf16 %v2487
  %v2496 = vunpack.c.l.bf16 %v2488
  %v2497 = vunpack.c.l.bf16 %v2489
  %v2498 = vunpack.c.l.bf16 %v2490
  %v2499 = vunpack.c.l.bf16 %v2491
  %v2500 = vunpack.c.l.bf16 %v2492
  %v2501 = vunpack.c.l.bf16 %v2493
  %s2502 = scalar_lea.vmem %s1, 480
  %v2503 = vld [vmem:[%s2502] sm:$0xf]
  %v2504 = vld [vmem:[%s2502 + $0x4] sm:$0xf]
  %v2505 = vld [vmem:[%s2502 + $0x8] sm:$0xf]
  %v2506 = vld [vmem:[%s2502 + $0xc] sm:$0xf]
  %v2507 = vld [vmem:[%s2502 + $0x10] sm:$0xf]
  %v2508 = vld [vmem:[%s2502 + $0x14] sm:$0xf]
  %v2509 = vld [vmem:[%s2502 + $0x18] sm:$0xf]
  %v2510 = vld [vmem:[%s2502 + $0x1c] sm:$0xf]
  %v2511 = vunpack.c.l.bf16 %v2503
  %v2512 = vunpack.c.l.bf16 %v2504
  %v2513 = vunpack.c.l.bf16 %v2505
  %v2514 = vunpack.c.l.bf16 %v2506
  %v2515 = vunpack.c.l.bf16 %v2507
  %v2516 = vunpack.c.l.bf16 %v2508
  %v2517 = vunpack.c.l.bf16 %v2509
  %v2518 = vunpack.c.l.bf16 %v2510
  %s2519 = scalar_lea.vmem %s2, 24
  %v2520 = vld [vmem:[%s2519] sm:$0xff]
  %2521 = vmatprep.subr.mxu0 0.0
  %2522 = vmatpush1.msra.mxu0 %v2460
  %2523 = vmatprep.subr.mxu0 0.0
  %2524 = vmatpush1.msra.mxu0 %v2461
  %2525 = vmatprep.subr.mxu0 0.0
  %2526 = vmatpush1.msra.mxu0 %v2462
  %2527 = vmatprep.subr.mxu0 0.0
  %2528 = vmatpush1.msra.mxu0 %v2463
  %2529 = vmatprep.subr.mxu0 0.0
  %2530 = vmatpush1.msra.mxu0 %v2464
  %2531 = vmatprep.subr.mxu0 0.0
  %2532 = vmatpush1.msra.mxu0 %v2465
  %2533 = vmatprep.subr.mxu0 0.0
  %2534 = vmatpush1.msra.mxu0 %v2466
  %2535 = vmatprep.subr.mxu0 0.0
  %2536 = vmatpush1.msra.mxu0 %v2467
  %2537 = vmatprep.subr.mxu0 0.0
  %2538 = vmatpush1.msra.mxu0 0.0
  %2539 = vmatprep.subr.mxu0 0.0
  %2540 = vmatpush1.msra.mxu0 0.0
  %2541 = vmatprep.subr.mxu0 0.0
  %2542 = vmatpush1.msra.mxu0 0.0
  %2543 = vmatprep.subr.mxu0 0.0
  %2544 = vmatpush1.msra.mxu0 0.0
  %2545 = vmatprep.subr.mxu0 0.0
  %2546 = vmatpush1.msra.mxu0 0.0
  %2547 = vmatprep.subr.mxu0 0.0
  %2548 = vmatpush1.msra.mxu0 0.0
  %2549 = vmatprep.subr.mxu0 0.0
  %2550 = vmatpush1.msra.mxu0 0.0
  %2551 = vmatprep.subr.mxu0 0.0
  %2552 = vmatpush1.msra.mxu0 0.0
  %2553 = vmatprep.subr.mxu0 0.0
  %2554 = vmatpush1.msra.mxu0 0.0
  %2555 = vmatprep.subr.mxu0 0.0
  %2556 = vmatpush1.msra.mxu0 0.0
  %2557 = vmatprep.subr.mxu0 0.0
  %2558 = vmatpush1.msra.mxu0 0.0
  %2559 = vmatprep.subr.mxu0 0.0
  %2560 = vmatpush1.msra.mxu0 0.0
  %2561 = vmatprep.subr.mxu0 0.0
  %2562 = vmatpush1.msra.mxu0 0.0
  %2563 = vmatprep.subr.mxu0 0.0
  %2564 = vmatpush1.msra.mxu0 0.0
  %2565 = vmatprep.subr.mxu0 0.0
  %2566 = vmatpush1.msra.mxu0 0.0
  %2567 = vmatprep.subr.mxu0 0.0
  %2568 = vmatpush1.msra.mxu0 0.0
  %2569 = vmatprep.subr.mxu0 0.0
  %2570 = vmatpush1.msra.mxu0 0.0
  %2571 = vmatprep.subr.mxu0 0.0
  %2572 = vmatpush1.msra.mxu0 0.0
  %2573 = vmatprep.subr.mxu0 0.0
  %2574 = vmatpush1.msra.mxu0 0.0
  %2575 = vmatprep.subr.mxu0 0.0
  %2576 = vmatpush1.msra.mxu0 0.0
  %2577 = vmatprep.subr.mxu0 0.0
  %2578 = vmatpush1.msra.mxu0 0.0
  %2579 = vmatprep.subr.mxu0 0.0
  %2580 = vmatpush1.msra.mxu0 0.0
  %2581 = vmatprep.subr.mxu0 0.0
  %2582 = vmatpush1.msra.mxu0 0.0
  %2583 = vmatprep.subr.mxu0 0.0
  %2584 = vmatpush1.msra.mxu0 0.0
  %2585 = vmatprep.mubr.f32.mxu0 0.0
  %2586 = vmatmul.mubr.f32.gmra.mrb[0].mxu0 %v85
  %v2587 = vpop.f32.mrb[0].mxu0
  %v2588 = vadd.f32 %v2520, %v2587
  %v2589 = vpop.f32.mrb[0].mxu0
  %2590 = vdwg.mxu0
  %v2591 = vtanh.pop %v2588
  %v2593 = vrot.slane %v2520, 1
  %v2596 = vsel %vm83, %v2591, 0
  %2598 = vmatprep.subr.mxu0 0.0
  %2599 = vmatpush1.msra.mxu0 %v2477
  %2600 = vmatprep.subr.mxu0 0.0
  %2601 = vmatpush1.msra.mxu0 %v2478
  %2602 = vmatprep.subr.mxu0 0.0
  %2603 = vmatpush1.msra.mxu0 %v2479
  %2604 = vmatprep.subr.mxu0 0.0
  %2605 = vmatpush1.msra.mxu0 %v2480
  %2606 = vmatprep.subr.mxu0 0.0
  %2607 = vmatpush1.msra.mxu0 %v2481
  %2608 = vmatprep.subr.mxu0 0.0
  %2609 = vmatpush1.msra.mxu0 %v2482
  %2610 = vmatprep.subr.mxu0 0.0
  %2611 = vmatpush1.msra.mxu0 %v2483
  %2612 = vmatprep.subr.mxu0 0.0
  %2613 = vmatpush1.msra.mxu0 %v2484
  %2614 = vmatprep.subr.mxu0 0.0
  %2615 = vmatpush1.msra.mxu0 0.0
  %2616 = vmatprep.subr.mxu0 0.0
  %2617 = vmatpush1.msra.mxu0 0.0
  %2618 = vmatprep.subr.mxu0 0.0
  %2619 = vmatpush1.msra.mxu0 0.0
  %2620 = vmatprep.subr.mxu0 0.0
  %2621 = vmatpush1.msra.mxu0 0.0
  %2622 = vmatprep.subr.mxu0 0.0
  %2623 = vmatpush1.msra.mxu0 0.0
  %2624 = vmatprep.subr.mxu0 0.0
  %2625 = vmatpush1.msra.mxu0 0.0
  %2626 = vmatprep.subr.mxu0 0.0
  %2627 = vmatpush1.msra.mxu0 0.0
  %2628 = vmatprep.subr.mxu0 0.0
  %2629 = vmatpush1.msra.mxu0 0.0
  %2630 = vmatprep.subr.mxu0 0.0
  %2631 = vmatpush1.msra.mxu0 0.0
  %2632 = vmatprep.subr.mxu0 0.0
  %2633 = vmatpush1.msra.mxu0 0.0
  %2634 = vmatprep.subr.mxu0 0.0
  %2635 = vmatpush1.msra.mxu0 0.0
  %2636 = vmatprep.subr.mxu0 0.0
  %2637 = vmatpush1.msra.mxu0 0.0
  %2638 = vmatprep.subr.mxu0 0.0
  %2639 = vmatpush1.msra.mxu0 0.0
  %2640 = vmatprep.subr.mxu0 0.0
  %2641 = vmatpush1.msra.mxu0 0.0
  %2642 = vmatprep.subr.mxu0 0.0
  %2643 = vmatpush1.msra.mxu0 0.0
  %2644 = vmatprep.subr.mxu0 0.0
  %2645 = vmatpush1.msra.mxu0 0.0
  %2646 = vmatprep.subr.mxu0 0.0
  %2647 = vmatpush1.msra.mxu0 0.0
  %2648 = vmatprep.subr.mxu0 0.0
  %2649 = vmatpush1.msra.mxu0 0.0
  %2650 = vmatprep.subr.mxu0 0.0
  %2651 = vmatpush1.msra.mxu0 0.0
  %2652 = vmatprep.subr.mxu0 0.0
  %2653 = vmatpush1.msra.mxu0 0.0
  %2654 = vmatprep.subr.mxu0 0.0
  %2655 = vmatpush1.msra.mxu0 0.0
  %2656 = vmatprep.subr.mxu0 0.0
  %2657 = vmatpush1.msra.mxu0 0.0
  %2658 = vmatprep.subr.mxu0 0.0
  %2659 = vmatpush1.msra.mxu0 0.0
  %2660 = vmatprep.subr.mxu0 0.0
  %2661 = vmatpush1.msra.mxu0 0.0
  %2662 = vmatprep.mubr.f32.mxu0 0.0
  %2663 = vmatmul.mubr.f32.gmra.mrb[0].mxu0 %v2596
  %v2664 = vpop.f32.mrb[0].mxu0
  %v2665 = vadd.f32 %v2593, %v2664
  %v2666 = vpop.f32.mrb[0].mxu0
  %2667 = vdwg.mxu0
  %v2668 = vtanh.pop %v2665
  %v2669 = vrot.slane %v2520, 2
  %v2672 = vsel %vm83, %v2668, 0
  %2674 = vmatprep.subr.mxu0 0.0
  %2675 = vmatpush1.msra.mxu0 %v2494
  %2676 = vmatprep.subr.mxu0 0.0
  %2677 = vmatpush1.msra.mxu0 %v2495
  %2678 = vmatprep.subr.mxu0 0.0
  %2679 = vmatpush1.msra.mxu0 %v2496
  %2680 = vmatprep.subr.mxu0 0.0
  %2681 = vmatpush1.msra.mxu0 %v2497
  %2682 = vmatprep.subr.mxu0 0.0
  %2683 = vmatpush1.msra.mxu0 %v2498
  %2684 = vmatprep.subr.mxu0 0.0
  %2685 = vmatpush1.msra.mxu0 %v2499
  %2686 = vmatprep.subr.mxu0 0.0
  %2687 = vmatpush1.msra.mxu0 %v2500
  %2688 = vmatprep.subr.mxu0 0.0
  %2689 = vmatpush1.msra.mxu0 %v2501
  %2690 = vmatprep.subr.mxu0 0.0
  %2691 = vmatpush1.msra.mxu0 0.0
  %2692 = vmatprep.subr.mxu0 0.0
  %2693 = vmatpush1.msra.mxu0 0.0
  %2694 = vmatprep.subr.mxu0 0.0
  %2695 = vmatpush1.msra.mxu0 0.0
  %2696 = vmatprep.subr.mxu0 0.0
  %2697 = vmatpush1.msra.mxu0 0.0
  %2698 = vmatprep.subr.mxu0 0.0
  %2699 = vmatpush1.msra.mxu0 0.0
  %2700 = vmatprep.subr.mxu0 0.0
  %2701 = vmatpush1.msra.mxu0 0.0
  %2702 = vmatprep.subr.mxu0 0.0
  %2703 = vmatpush1.msra.mxu0 0.0
  %2704 = vmatprep.subr.mxu0 0.0
  %2705 = vmatpush1.msra.mxu0 0.0
  %2706 = vmatprep.subr.mxu0 0.0
  %2707 = vmatpush1.msra.mxu0 0.0
  %2708 = vmatprep.subr.mxu0 0.0
  %2709 = vmatpush1.msra.mxu0 0.0
  %2710 = vmatprep.subr.mxu0 0.0
  %2711 = vmatpush1.msra.mxu0 0.0
  %2712 = vmatprep.subr.mxu0 0.0
  %2713 = vmatpush1.msra.mxu0 0.0
  %2714 = vmatprep.subr.mxu0 0.0
  %2715 = vmatpush1.msra.mxu0 0.0
  %2716 = vmatprep.subr.mxu0 0.0
  %2717 = vmatpush1.msra.mxu0 0.0
  %2718 = vmatprep.subr.mxu0 0.0
  %2719 = vmatpush1.msra.mxu0 0.0
  %2720 = vmatprep.subr.mxu0 0.0
  %2721 = vmatpush1.msra.mxu0 0.0
  %2722 = vmatprep.subr.mxu0 0.0
  %2723 = vmatpush1.msra.mxu0 0.0
  %2724 = vmatprep.subr.mxu0 0.0
  %2725 = vmatpush1.msra.mxu0 0.0
  %2726 = vmatprep.subr.mxu0 0.0
  %2727 = vmatpush1.msra.mxu0 0.0
  %2728 = vmatprep.subr.mxu0 0.0
  %2729 = vmatpush1.msra.mxu0 0.0
  %2730 = vmatprep.subr.mxu0 0.0
  %2731 = vmatpush1.msra.mxu0 0.0
  %2732 = vmatprep.subr.mxu0 0.0
  %2733 = vmatpush1.msra.mxu0 0.0
  %2734 = vmatprep.subr.mxu0 0.0
  %2735 = vmatpush1.msra.mxu0 0.0
  %2736 = vmatprep.subr.mxu0 0.0
  %2737 = vmatpush1.msra.mxu0 0.0
  %2738 = vmatprep.mubr.f32.mxu0 0.0
  %2739 = vmatmul.mubr.f32.gmra.mrb[0].mxu0 %v2672
  %v2740 = vpop.f32.mrb[0].mxu0
  %v2741 = vadd.f32 %v2669, %v2740
  %v2742 = vpop.f32.mrb[0].mxu0
  %2743 = vdwg.mxu0
  %v2744 = vtanh.pop %v2741
  %v2745 = vrot.slane %v2520, 3
  %v2748 = vsel %vm83, %v2744, 0
  %2750 = vmatprep.subr.mxu0 0.0
  %2751 = vmatpush1.msra.mxu0 %v2511
  %2752 = vmatprep.subr.mxu0 0.0
  %2753 = vmatpush1.msra.mxu0 %v2512
  %2754 = vmatprep.subr.mxu0 0.0
  %2755 = vmatpush1.msra.mxu0 %v2513
  %2756 = vmatprep.subr.mxu0 0.0
  %2757 = vmatpush1.msra.mxu0 %v2514
  %2758 = vmatprep.subr.mxu0 0.0
  %2759 = vmatpush1.msra.mxu0 %v2515
  %2760 = vmatprep.subr.mxu0 0.0
  %2761 = vmatpush1.msra.mxu0 %v2516
  %2762 = vmatprep.subr.mxu0 0.0
  %2763 = vmatpush1.msra.mxu0 %v2517
  %2764 = vmatprep.subr.mxu0 0.0
  %2765 = vmatpush1.msra.mxu0 %v2518
  %2766 = vmatprep.subr.mxu0 0.0
  %2767 = vmatpush1.msra.mxu0 0.0
  %2768 = vmatprep.subr.mxu0 0.0
  %2769 = vmatpush1.msra.mxu0 0.0
  %2770 = vmatprep.subr.mxu0 0.0
  %2771 = vmatpush1.msra.mxu0 0.0
  %2772 = vmatprep.subr.mxu0 0.0
  %2773 = vmatpush1.msra.mxu0 0.0
  %2774 = vmatprep.subr.mxu0 0.0
  %2775 = vmatpush1.msra.mxu0 0.0
  %2776 = vmatprep.subr.mxu0 0.0
  %2777 = vmatpush1.msra.mxu0 0.0
  %2778 = vmatprep.subr.mxu0 0.0
  %2779 = vmatpush1.msra.mxu0 0.0
  %2780 = vmatprep.subr.mxu0 0.0
  %2781 = vmatpush1.msra.mxu0 0.0
  %2782 = vmatprep.subr.mxu0 0.0
  %2783 = vmatpush1.msra.mxu0 0.0
  %2784 = vmatprep.subr.mxu0 0.0
  %2785 = vmatpush1.msra.mxu0 0.0
  %2786 = vmatprep.subr.mxu0 0.0
  %2787 = vmatpush1.msra.mxu0 0.0
  %2788 = vmatprep.subr.mxu0 0.0
  %2789 = vmatpush1.msra.mxu0 0.0
  %2790 = vmatprep.subr.mxu0 0.0
  %2791 = vmatpush1.msra.mxu0 0.0
  %2792 = vmatprep.subr.mxu0 0.0
  %2793 = vmatpush1.msra.mxu0 0.0
  %2794 = vmatprep.subr.mxu0 0.0
  %2795 = vmatpush1.msra.mxu0 0.0
  %2796 = vmatprep.subr.mxu0 0.0
  %2797 = vmatpush1.msra.mxu0 0.0
  %2798 = vmatprep.subr.mxu0 0.0
  %2799 = vmatpush1.msra.mxu0 0.0
  %2800 = vmatprep.subr.mxu0 0.0
  %2801 = vmatpush1.msra.mxu0 0.0
  %2802 = vmatprep.subr.mxu0 0.0
  %2803 = vmatpush1.msra.mxu0 0.0
  %2804 = vmatprep.subr.mxu0 0.0
  %2805 = vmatpush1.msra.mxu0 0.0
  %2806 = vmatprep.subr.mxu0 0.0
  %2807 = vmatpush1.msra.mxu0 0.0
  %2808 = vmatprep.subr.mxu0 0.0
  %2809 = vmatpush1.msra.mxu0 0.0
  %2810 = vmatprep.subr.mxu0 0.0
  %2811 = vmatpush1.msra.mxu0 0.0
  %2812 = vmatprep.subr.mxu0 0.0
  %2813 = vmatpush1.msra.mxu0 0.0
  %2814 = vmatprep.mubr.f32.mxu0 0.0
  %2815 = vmatmul.mubr.f32.gmra.mrb[0].mxu0 %v2748
  %v2816 = vpop.f32.mrb[0].mxu0
  %v2817 = vadd.f32 %v2745, %v2816
  %v2818 = vpop.f32.mrb[0].mxu0
  %2819 = vdwg.mxu0
  %v2820 = vtanh.pop %v2817
  %v2821 = vrot.slane %v2520, 4
  %v2823 = vmul.f32 %v2820, %v2821
  %v2824 = vsel %vm390, %v2823, 0.0
  %2825 = vadd.xlane.f32.xlu0 %v2824
  %v2826 = vpop.xlane.xlu0 %2825
  %v2827 = vrot.slane %v2520, 5
  %v2829 = vadd.f32 %v2826, %v2827
  %v2830 = vmul.f32 %v2820, %v2820
  %v2831 = vsub.f32 1.0, %v2830
  %v2833 = vrot.slane %v2831, 4
  %v2835 = vmul.f32 %v2520, %v2833
  %v2837 = vrot.slane %v2835, 4
  %v2838 = vsel %vm83, %v2837, 0
  %v2841 = vsel %vm83, %v2511, 0
  %v2844 = vsel %vm83, %v2512, 0
  %v2847 = vsel %vm83, %v2513, 0
  %v2850 = vsel %vm83, %v2514, 0
  %v2853 = vsel %vm83, %v2515, 0
  %v2856 = vsel %vm83, %v2516, 0
  %v2859 = vsel %vm83, %v2517, 0
  %v2862 = vsel %vm83, %v2518, 0
  %2864 = vmatprep.subr.mxu0 0.0
  %2865 = vmatpush1.xpose.msra.mxu0 %v2841
  %2866 = vmatprep.subr.mxu0 0.0
  %2867 = vmatpush1.xpose.msra.mxu0 %v2844
  %2868 = vmatprep.subr.mxu0 0.0
  %2869 = vmatpush1.xpose.msra.mxu0 %v2847
  %2870 = vmatprep.subr.mxu0 0.0
  %2871 = vmatpush1.xpose.msra.mxu0 %v2850
  %2872 = vmatprep.subr.mxu0 0.0
  %2873 = vmatpush1.xpose.msra.mxu0 %v2853
  %2874 = vmatprep.subr.mxu0 0.0
  %2875 = vmatpush1.xpose.msra.mxu0 %v2856
  %2876 = vmatprep.subr.mxu0 0.0
  %2877 = vmatpush1.xpose.msra.mxu0 %v2859
  %2878 = vmatprep.subr.mxu0 0.0
  %2879 = vmatpush1.xpose.msra.mxu0 %v2862
  %2880 = vmatprep.subr.mxu0 0.0
  %2881 = vmatpush1.xpose.msra.mxu0 0.0
  %2882 = vmatprep.subr.mxu0 0.0
  %2883 = vmatpush1.xpose.msra.mxu0 0.0
  %2884 = vmatprep.subr.mxu0 0.0
  %2885 = vmatpush1.xpose.msra.mxu0 0.0
  %2886 = vmatprep.subr.mxu0 0.0
  %2887 = vmatpush1.xpose.msra.mxu0 0.0
  %2888 = vmatprep.subr.mxu0 0.0
  %2889 = vmatpush1.xpose.msra.mxu0 0.0
  %2890 = vmatprep.subr.mxu0 0.0
  %2891 = vmatpush1.xpose.msra.mxu0 0.0
  %2892 = vmatprep.subr.mxu0 0.0
  %2893 = vmatpush1.xpose.msra.mxu0 0.0
  %2894 = vmatprep.subr.mxu0 0.0
  %2895 = vmatpush1.xpose.msra.mxu0 0.0
  %2896 = vmatprep.subr.mxu0 0.0
  %2897 = vmatpush1.xpose.msra.mxu0 0.0
  %2898 = vmatprep.subr.mxu0 0.0
  %2899 = vmatpush1.xpose.msra.mxu0 0.0
  %2900 = vmatprep.subr.mxu0 0.0
  %2901 = vmatpush1.xpose.msra.mxu0 0.0
  %2902 = vmatprep.subr.mxu0 0.0
  %2903 = vmatpush1.xpose.msra.mxu0 0.0
  %2904 = vmatprep.subr.mxu0 0.0
  %2905 = vmatpush1.xpose.msra.mxu0 0.0
  %2906 = vmatprep.subr.mxu0 0.0
  %2907 = vmatpush1.xpose.msra.mxu0 0.0
  %2908 = vmatprep.subr.mxu0 0.0
  %2909 = vmatpush1.xpose.msra.mxu0 0.0
  %2910 = vmatprep.subr.mxu0 0.0
  %2911 = vmatpush1.xpose.msra.mxu0 0.0
  %2912 = vmatprep.subr.mxu0 0.0
  %2913 = vmatpush1.xpose.msra.mxu0 0.0
  %2914 = vmatprep.subr.mxu0 0.0
  %2915 = vmatpush1.xpose.msra.mxu0 0.0
  %2916 = vmatprep.subr.mxu0 0.0
  %2917 = vmatpush1.xpose.msra.mxu0 0.0
  %2918 = vmatprep.subr.mxu0 0.0
  %2919 = vmatpush1.xpose.msra.mxu0 0.0
  %2920 = vmatprep.subr.mxu0 0.0
  %2921 = vmatpush1.xpose.msra.mxu0 0.0
  %2922 = vmatprep.subr.mxu0 0.0
  %2923 = vmatpush1.xpose.msra.mxu0 0.0
  %2924 = vmatprep.subr.mxu0 0.0
  %2925 = vmatpush1.xpose.msra.mxu0 0.0
  %2926 = vmatprep.subr.mxu0 0.0
  %2927 = vmatpush1.xpose.msra.mxu0 0.0
  %2928 = vmatprep.mubr.f32.mxu0 0.0
  %2929 = vmatmul.mubr.f32.gmra.mrb[0].mxu0 %v2838
  %v2930 = vpop.f32.mrb[0].mxu0
  %v2931 = vadd.f32 0.0, %v2930
  %v2932 = vpop.f32.mrb[0].mxu0
  %2933 = vdwg.mxu0
  %v2934 = vmul.f32 %v2744, %v2744
  %v2935 = vsub.f32 1.0, %v2934
  %v2936 = vmul.f32 %v2931, %v2935
  %v2938 = vsel %vm83, %v2936, 0
  %v2941 = vsel %vm83, %v2494, 0
  %v2944 = vsel %vm83, %v2495, 0
  %v2947 = vsel %vm83, %v2496, 0
  %v2950 = vsel %vm83, %v2497, 0
  %v2953 = vsel %vm83, %v2498, 0
  %v2956 = vsel %vm83, %v2499, 0
  %v2959 = vsel %vm83, %v2500, 0
  %v2962 = vsel %vm83, %v2501, 0
  %2964 = vmatprep.subr.mxu0 0.0
  %2965 = vmatpush1.xpose.msra.mxu0 %v2941
  %2966 = vmatprep.subr.mxu0 0.0
  %2967 = vmatpush1.xpose.msra.mxu0 %v2944
  %2968 = vmatprep.subr.mxu0 0.0
  %2969 = vmatpush1.xpose.msra.mxu0 %v2947
  %2970 = vmatprep.subr.mxu0 0.0
  %2971 = vmatpush1.xpose.msra.mxu0 %v2950
  %2972 = vmatprep.subr.mxu0 0.0
  %2973 = vmatpush1.xpose.msra.mxu0 %v2953
  %2974 = vmatprep.subr.mxu0 0.0
  %2975 = vmatpush1.xpose.msra.mxu0 %v2956
  %2976 = vmatprep.subr.mxu0 0.0
  %2977 = vmatpush1.xpose.msra.mxu0 %v2959
  %2978 = vmatprep.subr.mxu0 0.0
  %2979 = vmatpush1.xpose.msra.mxu0 %v2962
  %2980 = vmatprep.subr.mxu0 0.0
  %2981 = vmatpush1.xpose.msra.mxu0 0.0
  %2982 = vmatprep.subr.mxu0 0.0
  %2983 = vmatpush1.xpose.msra.mxu0 0.0
  %2984 = vmatprep.subr.mxu0 0.0
  %2985 = vmatpush1.xpose.msra.mxu0 0.0
  %2986 = vmatprep.subr.mxu0 0.0
  %2987 = vmatpush1.xpose.msra.mxu0 0.0
  %2988 = vmatprep.subr.mxu0 0.0
  %2989 = vmatpush1.xpose.msra.mxu0 0.0
  %2990 = vmatprep.subr.mxu0 0.0
  %2991 = vmatpush1.xpose.msra.mxu0 0.0
  %2992 = vmatprep.subr.mxu0 0.0
  %2993 = vmatpush1.xpose.msra.mxu0 0.0
  %2994 = vmatprep.subr.mxu0 0.0
  %2995 = vmatpush1.xpose.msra.mxu0 0.0
  %2996 = vmatprep.subr.mxu0 0.0
  %2997 = vmatpush1.xpose.msra.mxu0 0.0
  %2998 = vmatprep.subr.mxu0 0.0
  %2999 = vmatpush1.xpose.msra.mxu0 0.0
  %3000 = vmatprep.subr.mxu0 0.0
  %3001 = vmatpush1.xpose.msra.mxu0 0.0
  %3002 = vmatprep.subr.mxu0 0.0
  %3003 = vmatpush1.xpose.msra.mxu0 0.0
  %3004 = vmatprep.subr.mxu0 0.0
  %3005 = vmatpush1.xpose.msra.mxu0 0.0
  %3006 = vmatprep.subr.mxu0 0.0
  %3007 = vmatpush1.xpose.msra.mxu0 0.0
  %3008 = vmatprep.subr.mxu0 0.0
  %3009 = vmatpush1.xpose.msra.mxu0 0.0
  %3010 = vmatprep.subr.mxu0 0.0
  %3011 = vmatpush1.xpose.msra.mxu0 0.0
  %3012 = vmatprep.subr.mxu0 0.0
  %3013 = vmatpush1.xpose.msra.mxu0 0.0
  %3014 = vmatprep.subr.mxu0 0.0
  %3015 = vmatpush1.xpose.msra.mxu0 0.0
  %3016 = vmatprep.subr.mxu0 0.0
  %3017 = vmatpush1.xpose.msra.mxu0 0.0
  %3018 = vmatprep.subr.mxu0 0.0
  %3019 = vmatpush1.xpose.msra.mxu0 0.0
  %3020 = vmatprep.subr.mxu0 0.0
  %3021 = vmatpush1.xpose.msra.mxu0 0.0
  %3022 = vmatprep.subr.mxu0 0.0
  %3023 = vmatpush1.xpose.msra.mxu0 0.0
  %3024 = vmatprep.subr.mxu0 0.0
  %3025 = vmatpush1.xpose.msra.mxu0 0.0
  %3026 = vmatprep.subr.mxu0 0.0
  %3027 = vmatpush1.xpose.msra.mxu0 0.0
  %3028 = vmatprep.mubr.f32.mxu0 0.0
  %3029 = vmatmul.mubr.f32.gmra.mrb[0].mxu0 %v2938
  %v3030 = vpop.f32.mrb[0].mxu0
  %v3031 = vadd.f32 0.0, %v3030
  %v3032 = vpop.f32.mrb[0].mxu0
  %3033 = vdwg.mxu0
  %v3034 = vmul.f32 %v2668, %v2668
  %v3035 = vsub.f32 1.0, %v3034
  %v3036 = vmul.f32 %v3031, %v3035
  %v3038 = vsel %vm83, %v3036, 0
  %v3041 = vsel %vm83, %v2477, 0
  %v3044 = vsel %vm83, %v2478, 0
  %v3047 = vsel %vm83, %v2479, 0
  %v3050 = vsel %vm83, %v2480, 0
  %v3053 = vsel %vm83, %v2481, 0
  %v3056 = vsel %vm83, %v2482, 0
  %v3059 = vsel %vm83, %v2483, 0
  %v3062 = vsel %vm83, %v2484, 0
  %3064 = vmatprep.subr.mxu0 0.0
  %3065 = vmatpush1.xpose.msra.mxu0 %v3041
  %3066 = vmatprep.subr.mxu0 0.0
  %3067 = vmatpush1.xpose.msra.mxu0 %v3044
  %3068 = vmatprep.subr.mxu0 0.0
  %3069 = vmatpush1.xpose.msra.mxu0 %v3047
  %3070 = vmatprep.subr.mxu0 0.0
  %3071 = vmatpush1.xpose.msra.mxu0 %v3050
  %3072 = vmatprep.subr.mxu0 0.0
  %3073 = vmatpush1.xpose.msra.mxu0 %v3053
  %3074 = vmatprep.subr.mxu0 0.0
  %3075 = vmatpush1.xpose.msra.mxu0 %v3056
  %3076 = vmatprep.subr.mxu0 0.0
  %3077 = vmatpush1.xpose.msra.mxu0 %v3059
  %3078 = vmatprep.subr.mxu0 0.0
  %3079 = vmatpush1.xpose.msra.mxu0 %v3062
  %3080 = vmatprep.subr.mxu0 0.0
  %3081 = vmatpush1.xpose.msra.mxu0 0.0
  %3082 = vmatprep.subr.mxu0 0.0
  %3083 = vmatpush1.xpose.msra.mxu0 0.0
  %3084 = vmatprep.subr.mxu0 0.0
  %3085 = vmatpush1.xpose.msra.mxu0 0.0
  %3086 = vmatprep.subr.mxu0 0.0
  %3087 = vmatpush1.xpose.msra.mxu0 0.0
  %3088 = vmatprep.subr.mxu0 0.0
  %3089 = vmatpush1.xpose.msra.mxu0 0.0
  %3090 = vmatprep.subr.mxu0 0.0
  %3091 = vmatpush1.xpose.msra.mxu0 0.0
  %3092 = vmatprep.subr.mxu0 0.0
  %3093 = vmatpush1.xpose.msra.mxu0 0.0
  %3094 = vmatprep.subr.mxu0 0.0
  %3095 = vmatpush1.xpose.msra.mxu0 0.0
  %3096 = vmatprep.subr.mxu0 0.0
  %3097 = vmatpush1.xpose.msra.mxu0 0.0
  %3098 = vmatprep.subr.mxu0 0.0
  %3099 = vmatpush1.xpose.msra.mxu0 0.0
  %3100 = vmatprep.subr.mxu0 0.0
  %3101 = vmatpush1.xpose.msra.mxu0 0.0
  %3102 = vmatprep.subr.mxu0 0.0
  %3103 = vmatpush1.xpose.msra.mxu0 0.0
  %3104 = vmatprep.subr.mxu0 0.0
  %3105 = vmatpush1.xpose.msra.mxu0 0.0
  %3106 = vmatprep.subr.mxu0 0.0
  %3107 = vmatpush1.xpose.msra.mxu0 0.0
  %3108 = vmatprep.subr.mxu0 0.0
  %3109 = vmatpush1.xpose.msra.mxu0 0.0
  %3110 = vmatprep.subr.mxu0 0.0
  %3111 = vmatpush1.xpose.msra.mxu0 0.0
  %3112 = vmatprep.subr.mxu0 0.0
  %3113 = vmatpush1.xpose.msra.mxu0 0.0
  %3114 = vmatprep.subr.mxu0 0.0
  %3115 = vmatpush1.xpose.msra.mxu0 0.0
  %3116 = vmatprep.subr.mxu0 0.0
  %3117 = vmatpush1.xpose.msra.mxu0 0.0
  %3118 = vmatprep.subr.mxu0 0.0
  %3119 = vmatpush1.xpose.msra.mxu0 0.0
  %3120 = vmatprep.subr.mxu0 0.0
  %3121 = vmatpush1.xpose.msra.mxu0 0.0
  %3122 = vmatprep.subr.mxu0 0.0
  %3123 = vmatpush1.xpose.msra.mxu0 0.0
  %3124 = vmatprep.subr.mxu0 0.0
  %3125 = vmatpush1.xpose.msra.mxu0 0.0
  %3126 = vmatprep.subr.mxu0 0.0
  %3127 = vmatpush1.xpose.msra.mxu0 0.0
  %3128 = vmatprep.mubr.f32.mxu0 0.0
  %3129 = vmatmul.mubr.f32.gmra.mrb[0].mxu0 %v3038
  %v3130 = vpop.f32.mrb[0].mxu0
  %v3131 = vadd.f32 0.0, %v3130
  %v3132 = vpop.f32.mrb[0].mxu0
  %3133 = vdwg.mxu0
  %v3134 = vmul.f32 %v2591, %v2591
  %v3135 = vsub.f32 1.0, %v3134
  %v3136 = vmul.f32 %v3131, %v3135
  %v3138 = vsel %vm83, %v3136, 0
  %v3141 = vsel %vm83, %v2460, 0
  %v3144 = vsel %vm83, %v2461, 0
  %v3147 = vsel %vm83, %v2462, 0
  %v3150 = vsel %vm83, %v2463, 0
  %v3153 = vsel %vm83, %v2464, 0
  %v3156 = vsel %vm83, %v2465, 0
  %v3159 = vsel %vm83, %v2466, 0
  %v3162 = vsel %vm83, %v2467, 0
  %3164 = vmatprep.subr.mxu0 0.0
  %3165 = vmatpush1.xpose.msra.mxu0 %v3141
  %3166 = vmatprep.subr.mxu0 0.0
  %3167 = vmatpush1.xpose.msra.mxu0 %v3144
  %3168 = vmatprep.subr.mxu0 0.0
  %3169 = vmatpush1.xpose.msra.mxu0 %v3147
  %3170 = vmatprep.subr.mxu0 0.0
  %3171 = vmatpush1.xpose.msra.mxu0 %v3150
  %3172 = vmatprep.subr.mxu0 0.0
  %3173 = vmatpush1.xpose.msra.mxu0 %v3153
  %3174 = vmatprep.subr.mxu0 0.0
  %3175 = vmatpush1.xpose.msra.mxu0 %v3156
  %3176 = vmatprep.subr.mxu0 0.0
  %3177 = vmatpush1.xpose.msra.mxu0 %v3159
  %3178 = vmatprep.subr.mxu0 0.0
  %3179 = vmatpush1.xpose.msra.mxu0 %v3162
  %3180 = vmatprep.subr.mxu0 0.0
  %3181 = vmatpush1.xpose.msra.mxu0 0.0
  %3182 = vmatprep.subr.mxu0 0.0
  %3183 = vmatpush1.xpose.msra.mxu0 0.0
  %3184 = vmatprep.subr.mxu0 0.0
  %3185 = vmatpush1.xpose.msra.mxu0 0.0
  %3186 = vmatprep.subr.mxu0 0.0
  %3187 = vmatpush1.xpose.msra.mxu0 0.0
  %3188 = vmatprep.subr.mxu0 0.0
  %3189 = vmatpush1.xpose.msra.mxu0 0.0
  %3190 = vmatprep.subr.mxu0 0.0
  %3191 = vmatpush1.xpose.msra.mxu0 0.0
  %3192 = vmatprep.subr.mxu0 0.0
  %3193 = vmatpush1.xpose.msra.mxu0 0.0
  %3194 = vmatprep.subr.mxu0 0.0
  %3195 = vmatpush1.xpose.msra.mxu0 0.0
  %3196 = vmatprep.subr.mxu0 0.0
  %3197 = vmatpush1.xpose.msra.mxu0 0.0
  %3198 = vmatprep.subr.mxu0 0.0
  %3199 = vmatpush1.xpose.msra.mxu0 0.0
  %3200 = vmatprep.subr.mxu0 0.0
  %3201 = vmatpush1.xpose.msra.mxu0 0.0
  %3202 = vmatprep.subr.mxu0 0.0
  %3203 = vmatpush1.xpose.msra.mxu0 0.0
  %3204 = vmatprep.subr.mxu0 0.0
  %3205 = vmatpush1.xpose.msra.mxu0 0.0
  %3206 = vmatprep.subr.mxu0 0.0
  %3207 = vmatpush1.xpose.msra.mxu0 0.0
  %3208 = vmatprep.subr.mxu0 0.0
  %3209 = vmatpush1.xpose.msra.mxu0 0.0
  %3210 = vmatprep.subr.mxu0 0.0
  %3211 = vmatpush1.xpose.msra.mxu0 0.0
  %3212 = vmatprep.subr.mxu0 0.0
  %3213 = vmatpush1.xpose.msra.mxu0 0.0
  %3214 = vmatprep.subr.mxu0 0.0
  %3215 = vmatpush1.xpose.msra.mxu0 0.0
  %3216 = vmatprep.subr.mxu0 0.0
  %3217 = vmatpush1.xpose.msra.mxu0 0.0
  %3218 = vmatprep.subr.mxu0 0.0
  %3219 = vmatpush1.xpose.msra.mxu0 0.0
  %3220 = vmatprep.subr.mxu0 0.0
  %3221 = vmatpush1.xpose.msra.mxu0 0.0
  %3222 = vmatprep.subr.mxu0 0.0
  %3223 = vmatpush1.xpose.msra.mxu0 0.0
  %3224 = vmatprep.subr.mxu0 0.0
  %3225 = vmatpush1.xpose.msra.mxu0 0.0
  %3226 = vmatprep.subr.mxu0 0.0
  %3227 = vmatpush1.xpose.msra.mxu0 0.0
  %3228 = vmatprep.mubr.f32.mxu0 0.0
  %3229 = vmatmul.mubr.f32.gmra.mrb[0].mxu0 %v3138
  %v3230 = vpop.f32.mrb[0].mxu0
  %v3231 = vadd.f32 0.0, %v3230
  %v3232 = vpop.f32.mrb[0].mxu0
  %3233 = vdwg.mxu0
  %v3236 = vunpack.c.l.s4 1966171168
  %v3237 = vunpack.c.0.s8 %v3236
  %v3238 = vlaneseq
  %v3239 = vshrl.u32 %v3238, 7
  %v3240 = vsub.s32 %v3237, %v3239
  %v3241 = vrot.slane %v3231, %v3240
  %v3243 = vunpack.c.l.s4 1966171168
  %v3244 = vunpack.c.0.s8 %v3243
  %v3245 = vlaneseq
  %v3246 = vshrl.u32 %v3245, 7
  %v3247 = vsub.s32 %v3244, %v3246
  %v3248 = vrot.slane %v3241, %v3247
  %3249 = vrot.lane.b32.xlu0 %v3248, 120
  %v3250 = vpop.permute.xlu0 %3249
  %v3252 = vmul.f32 %v14, %v3250
  %3253 = vrot.lane.b32.xlu0 %v3248, 8
  %v3254 = vpop.permute.xlu0 %3253
  %v3256 = vmul.f32 %v14, %v3254
  %3258 = vrot.lane.b32.xlu0 %v3256, 120
  %v3259 = vpop.permute.xlu0 %3258
  %v3261 = vsub.f32 %v3252, %v3259
  %v3262 = vadd.f32 %v396, %v1207
  %v3263 = vadd.f32 %v3262, %v2018
  %v3264 = vadd.f32 %v3263, %v2829
  %v3265 = vmul.f32 %v3264, 0.25
  %v3266 = vmul.f32 %v3265, 96.485
  %v3267 = vadd.f32 %v828, %v1639
  %v3268 = vadd.f32 %v3267, %v2450
  %v3269 = vadd.f32 %v3268, %v3261
  %v3270 = vmul.f32 %v3269, 0.25
  %v3271 = vsub.f32 %v828, %v3270
  %v3272 = vmul.f32 %v3271, %v3271
  %v3273 = vsub.f32 %v1639, %v3270
  %v3274 = vmul.f32 %v3273, %v3273
  %v3275 = vadd.f32 %v3272, %v3274
  %v3276 = vsub.f32 %v2450, %v3270
  %v3277 = vmul.f32 %v3276, %v3276
  %v3278 = vadd.f32 %v3275, %v3277
  %v3279 = vsub.f32 %v3261, %v3270
  %v3280 = vmul.f32 %v3279, %v3279
  %v3281 = vadd.f32 %v3278, %v3280
  %v3282 = vmul.f32 %v3281, 0.33333334
  %v3283 = vmul.f32 %v3270, 96.485
  %vm3284 = vcmask 57344
  %v3285 = vsel %vm3284, %v3282, 0.0
  %3286 = vadd.xlane.f32.xlu0 %v3285
  %v3287 = vpop.xlane.xlu0 %3286
  %v3288 = vrcp.pop 8.0
  %v3289 = vmul.f32 %v3287, %v3288
  %v3290 = vrsqrt.pop %v3289
  %v3291 = vmul.f32 %v3289, %v3290
  %vm3292 = vcmp.eq.f32.partialorder %v3289, inf
  %v3293 = vsel %vm3292, %v3289, %v3291
  %vm3294 = vcmp.eq.f32.partialorder %v3289, 0.0
  %v3295 = vand.u32 %v3289, 2147483648
  %v3296 = vsel %vm3294, %v3295, %v3293
  %v3297 = vmul.f32 %v3296, 96.485
  %v3298 = vsub.f32 3.0, %v3297
  %v3299 = vfloor.f32 %v3298
  %v3300 = vsub.f32 1.0, %v3298
  %v3301 = vmul.f32 %v3300, 3.1415927
  %v3302 = vand.u32 2147483647, %v3301
  %vm3303 = vcmp.le.f32.partialorder %v3302, 0.7853982
  %vm3304 = vcmp.lt.s32.totalorder %v3301, 0
  %v3305 = vand.u32 %v3301, 2139095040
  %v3306 = vshrl.u32 %v3305, 23
  %v3307 = vsub.s32 %v3306, 127
  %v3308 = vand.u32 2147483647, %v3301
  %v3309 = vand.u32 %v3308, 8388607
  %v3310 = vor.u32 %v3309, 8388608
  %v3311 = vsub.s32 0, %v3310
  %v3312 = vadd.s32 %v3307, 1
  %vm3313 = vcmp.gt.s32.totalorder %v3312, 0
  %v3314 = vsel %vm3313, %v3312, 0
  %v3315 = vshrl.u32 %v3314, 5
  %v3316 = vand.u32 %v3314, 31
  %v3317 = vsub.s32 32, %v3316
  %v3318 = vshrl.u32 683565275, %v3317
  %v3319 = vshll.u32 683565275, %v3316
  %v3320 = vshrl.u32 2475754826, %v3317
  %v3321 = vor.u32 %v3319, %v3320
  %v3322 = vshll.u32 2475754826, %v3316
  %v3323 = vshrl.u32 2131351028, %v3317
  %v3324 = vor.u32 %v3322, %v3323
  %v3325 = vshll.u32 2131351028, %v3316
  %v3326 = vshrl.u32 2102212464, %v3317
  %v3327 = vor.u32 %v3325, %v3326
  %v3328 = vshll.u32 2102212464, %v3316
  %v3329 = vshrl.u32 920167782, %v3317
  %v3330 = vor.u32 %v3328, %v3329
  %v3331 = vshll.u32 920167782, %v3316
  %v3332 = vshrl.u32 1326507024, %v3317
  %v3333 = vor.u32 %v3331, %v3332
  %vm3334 = vcmp.lt.s32.totalorder %v3315, 1
  %vm3335 = vcmp.lt.s32.totalorder %v3315, 2
  %vm3336 = vcmp.lt.s32.totalorder %v3315, 3
  %vm3337 = vcmp.lt.s32.totalorder %v3315, 4
  %v3338 = vsel %vm3334, %v3318, %v3321
  %v3339 = vsel %vm3337, %v3327, 2102212464
  %v3340 = vsel %vm3336, %v3324, %v3339
  %v3341 = vsel %vm3335, %v3338, %v3340
  %v3342 = vsel %vm3334, %v3321, %v3324
  %v3343 = vsel %vm3337, %v3330, 920167782
  %v3344 = vsel %vm3336, %v3327, %v3343
  %v3345 = vsel %vm3335, %v3342, %v3344
  %v3346 = vsel %vm3334, %v3324, %v3327
  %v3347 = vsel %vm3337, %v3333, 1326507024
  %v3348 = vsel %vm3336, %v3330, %v3347
  %v3349 = vsel %vm3335, %v3346, %v3348
  %v3350 = vshll.u32 %v3310, 8
  %v3351 = vmul.u32.u64.compose %v3350, %v3349
  %v3352 = vextract.low.u32 %v3351
  %v3353 = vextract.high.u32 %v3351
  %v3354 = vmul.u32.u64.compose %v3350, %v3345
  %v3355 = vextract.low.u32 %v3354
  %v3356 = vextract.high.u32 %v3354
  %v3357 = vmul.u32 %v3350, %v3341
  %v3358 = vadd.s32 %v3353, %v3355
  %vm3359 = vc.u32 %v3353, %v3355
  %v3360 = vadd.s32 %v3356, 1
  %v3361 = vsel %vm3359, %v3360, %v3356
  %v3362 = vadd.s32 %v3357, %v3361
  %v3363 = vadd.s32 %v3362, 536870912
  %v3364 = vshrl.u32 %v3363, 30
  %v3365 = vshll.u32 %v3364, 30
  %v3366 = vsub.s32 %v3362, %v3365
  %vm3367 = vcmp.lt.s32.totalorder %v3366, 0
  %v3368 = vsub.s32 0, %v3366
  %v3369 = vsel %vm3367, %v3368, %v3366
  %v3370 = vclz %v3369
  %v3371 = vsub.s32 %v3370, 2
  %vm3372 = vcmp.gt.s32.totalorder 0, %v3371
  %v3373 = vsel %vm3372, 0, %v3371
  %v3374 = vsub.s32 32, %v3373
  %v3375 = vshll.u32 %v3366, %v3373
  %v3376 = vshrl.u32 %v3358, %v3374
  %v3377 = vor.u32 %v3375, %v3376
  %v3378 = vsub.s32 4294967266, %v3373
  %v3379 = vadd.s32 %v3378, 127
  %v3380 = vshll.u32 %v3379, 23
  %v3381 = vor.u32 4788187, %v3380
  %v3382 = vand.u32 2147483647, %v3381
  %v3384 = vcvt.s32.f32 %v3377
  %v3385 = vmul.f32 %v3384, %v3382
  %v3386 = vxor.u32 %v3385, 2147483648
  %v3387 = vsel %vm3304, %v3386, %v3385
  %v3388 = vsub.s32 4, %v3364
  %v3389 = vsel %vm3304, %v3388, %v3364
  %v3390 = vsel %vm3303, %v3301, %v3387
  %v3391 = vsel %vm3303, 0, %v3389
  %v3392 = vcosq.f32.pop %v3390
  %v3393 = vsinq.f32.pop %v3390
  %vm3394 = vweird.f32 %v3301
  %v3395 = vand.u32 %v3391, 3
  %vm3396 = vcmp.lt.s32.totalorder %v3395, 2
  %vm3397 = vcmp.eq.s32.totalorder %v3395, 0
  %v3398 = vxor.u32 %v3393, 2147483648
  %v3399 = vsel %vm3397, %v3392, %v3398
  %vm3400 = vcmp.eq.s32.totalorder %v3395, 2
  %v3401 = vxor.u32 %v3392, 2147483648
  %v3402 = vsel %vm3400, %v3401, %v3393
  %v3403 = vsel %vm3396, %v3399, %v3402
  %v3404 = vsel %vm3394, nan, %v3403
  %v3405 = vadd.f32 %v3404, 1.0
  %v3406 = vmul.f32 %v3405, 0.5
  %vm3407 = vcmp.lt.f32.partialorder %v3299, 0.0
  %vm3408 = vcmp.eq.f32.partialorder %v3299, 0.0
  %v3409 = vsel %vm3408, %v3406, 1.0
  %v3410 = vsel %vm3407, 0.0, %v3409
  %v3411 = vlaneseq
  %v3412 = vand.u32 %v3411, 127
  %vm3413 = vcmp.eq.s32.totalorder %v3412, 0
  %v3414 = vmul.f32 %v3266, %v3410
  %vm3415 = vcmp.eq.s32.totalorder %v3412, 1
  %v3416 = vsel %vm3415, %v3410, 0.0
  %3418 = vset.pattern.permute.xlu0 0
  %3419 = vperm.xlu0 %3418, %v3414
  %v3420 = vpop.permute.xlu0 %3419
  %v3422 = vsel %vm3413, %v3420, %v3416
  %3423 = vst [vmem:[%s3] sm:$0x1] %v3422
  %3424 = vst [vmem:[%s3 + $0x1] sm:$0x1] 0.0
  %v3425 = vmul.f32 %v3283, %v3410
  %3426 = vst.msk [vmem:[%s3 + $0x1] sm:$0x1] %vm3284, %v3425
  // Predicated region
  $region14: #{dihedral_bias_forward.1} parent=0 // pred_check
    _
  $region15: #{dihedral_bias_forward.1} parent=0 // pred_check_branch
    %3428 = sbr.rel (0) target = $region17
  $region16: #{dihedral_bias_forward.1} parent=0 // pred_region
    _
  $region17: #{dihedral_bias_forward.1} parent=0 // pred_fallthru
    _
  // Predicated region
  $region18: #{dihedral_bias_forward.1} parent=0 // pred_check
    _
  $region19: #{dihedral_bias_forward.1} parent=0 // pred_check_branch
    %3430 = sbr.rel (0) target = $region21
  $region20: #{dihedral_bias_forward.1} parent=0 // pred_region
    _
  $region21: #{dihedral_bias_forward.1} parent=0 // pred_fallthru
    _

</llo_original>
